<compile_context>
chip_gen: v5e
topology: v5e:2x2
jax: 0.10.0
libtpu: 0.0.40
codegen_flags: <defaults>
</compile_context>

<pallas_src>
import jax
import jax.numpy as jnp
from jax.experimental import pallas as pl
from jax.experimental.pallas import tpu as pltpu


# ----------------------------- in-kernel math ------------------------------ #

_SQRT_2_OVER_PI = 0.7978845608028654


def _gelu(x):
    # tanh-approximate GELU: tanh lives on the EUP slot instead of ~30 VALU
    # ops for an erf polynomial.  |deviation| vs exact erf-GELU ~1e-3.
    return 0.5 * x * (1.0 + jnp.tanh(_SQRT_2_OVER_PI * (x + 0.044715 * (x * x * x))))


def _make_kernel(G, s, d, heads, dim_head):
    M = G * s

    def mm(a_bf16, w_bf16):
        # MXU-native bf16 operands, f32 accumulation.
        return jnp.dot(a_bf16, w_bf16, preferred_element_type=jnp.float32)

    def kernel(x_ref,
               w1_ref, b1_ref, w2_ref, b2_ref,          # FCBNReLU1DRes (BN folded)
               wq_ref, wk_ref, wv_ref, wo_ref, bo_ref,  # Attention (scale/BN folded)
               wf_ref, bf_ref,                          # FFN (BN folded)
               o_ref):
        xb = x_ref[...]                                 # [M, d] bf16 (G groups of points)
        x32 = xb.astype(jnp.float32)                    # f32 copy for the residual add

        # ---- FCBNReLU1DRes: gelu(BN(conv(gelu(BN(conv(x))))) + x) ----------
        t = _gelu(mm(xb, w1_ref[...]) + b1_ref[...])
        t = mm(t.astype(jnp.bfloat16), w2_ref[...]) + b2_ref[...]
        x1 = _gelu(t + x32)                             # [M, d] f32
        x1b = x1.astype(jnp.bfloat16)                   # hoisted: feeds 3*heads matmuls

        # ---- Attention (heads unrolled; per-head weights -> no lane slices) --
        # q is pre-scaled by dim_head**-0.5 (folded into wq); to_out bias + BN
        # folded into (wo, bo).
        y = bo_ref[...]                                 # [1, d] f32, broadcasts below
        for h in range(heads):                          # unrolled (heads == 4)
            qh = mm(x1b, wq_ref[h]).astype(jnp.bfloat16).reshape(G, s, dim_head)
            kh = mm(x1b, wk_ref[h]).astype(jnp.bfloat16).reshape(G, s, dim_head)
            vh = mm(x1b, wv_ref[h]).astype(jnp.bfloat16).reshape(G, s, dim_head)
            # dots over all G groups in one batched dot_general
            dots = jnp.einsum('gid,gjd->gij', qh, kh,
                              preferred_element_type=jnp.float32)       # [G, s, s]
            dots = dots - jnp.max(dots, axis=-1, keepdims=True)
            e = jnp.exp(dots)
            attn = e * pl.reciprocal(jnp.sum(e, axis=-1, keepdims=True), approx=True)
            oh = jnp.einsum('gij,gjd->gid', attn.astype(jnp.bfloat16), vh,
                            preferred_element_type=jnp.float32)         # [G, s, dh]
            # per-head output projection, accumulated -> no concatenate needed
            y = y + mm(oh.reshape(M, dim_head).astype(jnp.bfloat16), wo_ref[h])
        att = _gelu(y + x1)                             # [M, d] f32
        attb = att.astype(jnp.bfloat16)                 # hoisted cast

        # ---- FFN: gelu(att + BN(conv(att))) --------------------------------
        f = mm(attb, wf_ref[...]) + bf_ref[...]
        out = _gelu(att + f)                            # [M, d]

        # ---- adaptive_max_pool1d(1): max over the s points of each group ----
        o_ref[0] = jnp.max(out.reshape(G, s, d), axis=1)        # [G, d]

    return kernel


# ------------------------------ wrapper ------------------------------------ #

def _cores_per_chip():
    """Heuristic TensorCores-per-chip (perf policy only; correctness unaffected)."""
    try:
        kind = jax.devices()[0].device_kind.lower()
    except Exception:
        return 1
    if "lite" in kind or "v5e" in kind or "v6e" in kind or "v6" in kind:
        return 1
    if "v7" in kind or "v4" in kind or "v5p" in kind:
        return 2
    return 1


def _grid_policy(B, s, cores):
    """Pick (groups per step G, n_steps): big M = G*s per step, even core split."""
    rows_target = 2048                       # ~2K MXU/VPU rows per step
    G = max(1, min(B, rows_target // max(s, 1)))
    if (G * s) % 16:                         # bf16 input block: sublane extent % 16
        G += 1
    n_steps = -(-B // G)
    if cores >= 2 and n_steps % cores:
        # round the step count up to a multiple of the core count so the
        # ("parallel",) grid axis splits evenly across TensorCores
        n_steps += cores - (n_steps % cores)
        G = -(-B // n_steps)
        if (G * s) % 16:
            G += 1
    return G, n_steps


def pre_extraction_forward(x, params, heads=4, dim_head=32):
    """x: [b, n, s, d] float32  ->  [b, d, n]  (same as PyTorch PreExtraction)."""
    b, n, s, d = x.shape
    assert s % 8 == 0, "kernel assumes the per-group point count is a multiple of 8"
    B = b * n
    G, n_steps = _grid_policy(B, s, _cores_per_chip())
    B_pad = n_steps * G

    xk = x.reshape(B, s, d)
    if B_pad != B:                                   # zero-pad groups; sliced off below
        xk = jnp.concatenate([xk, jnp.zeros((B_pad - B, s, d), x.dtype)], axis=0)
    xk = xk.reshape(B_pad * s, d).astype(jnp.bfloat16)   # channels-last bf16 point slab

    bf16 = lambda a: a.astype(jnp.bfloat16)
    flat = [
        bf16(params["w1_t"]), params["b1"],
        bf16(params["w2_t"]), params["b2"],
        bf16(params["wq_h"]), bf16(params["wk_h"]), bf16(params["wv_h"]),
        bf16(params["wo_h"]), params["bo"],
        bf16(params["wf_t"]), params["bf"],
    ]

    def full_spec(a):
        return pl.BlockSpec(a.shape, lambda i, _nd=a.ndim: (0,) * _nd)

    in_specs = ([pl.BlockSpec((G * s, d), lambda i: (i, 0))]
                + [full_spec(a) for a in flat])
    out_specs = pl.BlockSpec((1, G, d), lambda i: (i, 0, 0))

    pooled = pl.pallas_call(
        _make_kernel(G, s, d, heads, dim_head),
        out_shape=jax.ShapeDtypeStruct((n_steps, G, d), jnp.float32),
        grid_spec=pltpu.PrefetchScalarGridSpec(
            num_scalar_prefetch=0,
            grid=(n_steps,),
            in_specs=in_specs,
            out_specs=out_specs,
        ),
        compiler_params=pltpu.CompilerParams(
            dimension_semantics=("parallel",)),
    )(xk, *flat)

    pooled = pooled.reshape(B_pad, d)[:B].reshape(b, n, d)   # [b, n, d]
    return jnp.transpose(pooled, (0, 2, 1))                  # [b, d, n]


# --------------------------- parameter init -------------------------------- #

def _bn_fold(key, c, eps=1e-5):
    """Eval-mode BatchNorm1d folded to per-channel (scale, shift)."""
    k1, k2, k3, k4 = jax.random.split(key, 4)
    gamma = 1.0 + 0.1 * jax.random.normal(k1, (c,), jnp.float32)
    beta = 0.1 * jax.random.normal(k2, (c,), jnp.float32)
    mean = 0.1 * jax.random.normal(k3, (c,), jnp.float32)
    var = 1.0 + 0.1 * jnp.abs(jax.random.normal(k4, (c,), jnp.float32))
    scale = gamma / jnp.sqrt(var + eps)
    shift = beta - mean * scale
    return scale.reshape(1, c), shift.reshape(1, c)


def init_params(key, channels, heads=4, dim_head=32):
    d = channels
    inner = heads * dim_head
    keys = jax.random.split(key, 10)

    def conv_w(k, c_out, c_in):
        # Conv1d(kernel=1)/Linear weight [c_out, c_in], fan-in scaled.
        return (jax.random.normal(k, (c_out, c_in), jnp.float32)
                / jnp.sqrt(jnp.float32(c_in)))

    # FCBNReLU1DRes (blocks=1): conv-bn-gelu-conv-bn, residual gelu.
    # BN scale folded into the (pre-transposed) conv weight; only shift remains.
    w1 = conv_w(keys[0], d, d)
    s1, b1 = _bn_fold(keys[1], d)
    w2 = conv_w(keys[2], d, d)
    s2, b2 = _bn_fold(keys[3], d)
    w1_t = w1.T * s1
    w2_t = w2.T * s2

    # Attention: to_qkv Linear(d, 3*inner, bias=False); to_out Conv1d(inner, d, 1)+BN.
    wqkv = conv_w(keys[4], 3 * inner, d)              # [3*inner, d] (PyTorch layout)
    scale = dim_head ** -0.5
    wq = wqkv[:inner].reshape(heads, dim_head, d)          # head-major channel order
    wk = wqkv[inner:2 * inner].reshape(heads, dim_head, d)
    wv = wqkv[2 * inner:].reshape(heads, dim_head, d)
    wq_h = jnp.transpose(wq, (0, 2, 1)) * scale       # [heads, d, dim_head], scale folded
    wk_h = jnp.transpose(wk, (0, 2, 1))
    wv_h = jnp.transpose(wv, (0, 2, 1))

    wo = conv_w(keys[5], d, inner)                    # to_out conv weight [d, inner]
    bo_conv = 0.1 * jax.random.normal(keys[6], (d,), jnp.float32)
    so, sho = _bn_fold(keys[7], d)
    wo_t = wo.T * so                                  # [inner, d], BN scale folded
    wo_h = wo_t.reshape(heads, dim_head, d)           # rows are head-major (h*dh + i)
    bo = so * bo_conv.reshape(1, d) + sho             # conv bias folded into BN shift

    # FFN: Conv1d(d, d, 1, bias=False) + BN.
    wf = conv_w(keys[8], d, d)
    sf, bf = _bn_fold(keys[9], d)
    wf_t = wf.T * sf

    return dict(w1_t=w1_t, b1=b1, w2_t=w2_t, b2=b2,
                wq_h=wq_h, wk_h=wk_h, wv_h=wv_h,
                wo_h=wo_h, bo=bo, wf_t=wf_t, bf=bf)


# ---------------------------------- main ------------------------------------ #

if __name__ == "__main__":
    key = jax.random.PRNGKey(0)
    kx, kp = jax.random.split(key)

    b, n, s, channels = 2, 4, 16, 32          # [b batch, n groups, s points, d channels]
    x = jax.random.normal(kx, (b, n, s, channels), jnp.float32)
    params = init_params(kp, channels, heads=4, dim_head=32)

    out = pre_extraction_forward(x, params, heads=4, dim_head=32)
    out = jax.block_until_ready(out)
    assert out.shape == (b, channels, n), out.shape
    assert bool(jnp.all(jnp.isfinite(out)))
    print("KERNEL_OK")
</pallas_src>

<mosaic_0001>
module attributes {stable_mosaic.version = 11 : i64} {
  func.func @kernel(%arg0: i32, %arg1: memref<128x32xbf16, #tpu.memory_space<vmem>>, %arg2: memref<32x32xbf16, #tpu.memory_space<vmem>>, %arg3: memref<1x32xf32, #tpu.memory_space<vmem>>, %arg4: memref<32x32xbf16, #tpu.memory_space<vmem>>, %arg5: memref<1x32xf32, #tpu.memory_space<vmem>>, %arg6: memref<4x32x32xbf16, #tpu.memory_space<vmem>>, %arg7: memref<4x32x32xbf16, #tpu.memory_space<vmem>>, %arg8: memref<4x32x32xbf16, #tpu.memory_space<vmem>>, %arg9: memref<4x32x32xbf16, #tpu.memory_space<vmem>>, %arg10: memref<1x32xf32, #tpu.memory_space<vmem>>, %arg11: memref<32x32xbf16, #tpu.memory_space<vmem>>, %arg12: memref<1x32xf32, #tpu.memory_space<vmem>>, %arg13: memref<1x8x32xf32, #tpu.memory_space<vmem>>) attributes {dimension_semantics = [#tpu.dimension_semantics<parallel>], iteration_bounds = array<i64: 1>, scalar_prefetch = 0 : i64, scratch_operands = 0 : i64, tpu.core_type = #tpu.core_type<tc>, window_params = [{transform_indices = @transform_0, window_bounds = array<i64: 128, 32>}, {pipeline_mode = #tpu.pipeline_mode<synchronous>, transform_indices = @transform_1, window_bounds = array<i64: 32, 32>}, {pipeline_mode = #tpu.pipeline_mode<synchronous>, transform_indices = @transform_2, window_bounds = array<i64: 1, 32>}, {pipeline_mode = #tpu.pipeline_mode<synchronous>, transform_indices = @transform_3, window_bounds = array<i64: 32, 32>}, {pipeline_mode = #tpu.pipeline_mode<synchronous>, transform_indices = @transform_4, window_bounds = array<i64: 1, 32>}, {pipeline_mode = #tpu.pipeline_mode<synchronous>, transform_indices = @transform_5, window_bounds = array<i64: 4, 32, 32>}, {pipeline_mode = #tpu.pipeline_mode<synchronous>, transform_indices = @transform_6, window_bounds = array<i64: 4, 32, 32>}, {pipeline_mode = #tpu.pipeline_mode<synchronous>, transform_indices = @transform_7, window_bounds = array<i64: 4, 32, 32>}, {pipeline_mode = #tpu.pipeline_mode<synchronous>, transform_indices = @transform_8, window_bounds = array<i64: 4, 32, 32>}, {pipeline_mode = #tpu.pipeline_mode<synchronous>, transform_indices = @transform_9, window_bounds = array<i64: 1, 32>}, {pipeline_mode = #tpu.pipeline_mode<synchronous>, transform_indices = @transform_10, window_bounds = array<i64: 32, 32>}, {pipeline_mode = #tpu.pipeline_mode<synchronous>, transform_indices = @transform_11, window_bounds = array<i64: 1, 32>}, {transform_indices = @transform_12, window_bounds = array<i64: 1, 8, 32>}]} {
    %c0 = arith.constant 0 : index
    %c0_0 = arith.constant 0 : index
    %0 = vector.load %arg1[%c0, %c0_0] : memref<128x32xbf16, #tpu.memory_space<vmem>>, vector<128x32xbf16>
    %1 = arith.extf %0 : vector<128x32xbf16> to vector<128x32xf32>
    %c0_1 = arith.constant 0 : index
    %c0_2 = arith.constant 0 : index
    %2 = vector.load %arg2[%c0_1, %c0_2] : memref<32x32xbf16, #tpu.memory_space<vmem>>, vector<32x32xbf16>
    %cst = arith.constant dense<0.000000e+00> : vector<128x32xf32>
    %3 = tpu.matmul %0, %2, %cst {dimension_numbers = #tpu.dot_dimension_numbers<[1], [0], [0], [1], [0, 0, 1, 1], [], []>} : vector<128x32xbf16>, vector<32x32xbf16>, vector<128x32xf32> -> vector<128x32xf32>
    %c0_3 = arith.constant 0 : index
    %c0_4 = arith.constant 0 : index
    %4 = vector.load %arg3[%c0_3, %c0_4] : memref<1x32xf32, #tpu.memory_space<vmem>>, vector<1x32xf32>
    %5 = vector.broadcast %4 : vector<1x32xf32> to vector<128x32xf32>
    %6 = arith.addf %3, %5 : vector<128x32xf32>
    %cst_5 = arith.constant 5.000000e-01 : f32
    %7 = vector.broadcast %cst_5 : f32 to vector<128x32xf32>
    %8 = arith.mulf %7, %6 : vector<128x32xf32>
    %9 = arith.mulf %6, %6 : vector<128x32xf32>
    %10 = arith.mulf %9, %6 : vector<128x32xf32>
    %cst_6 = arith.constant 4.471500e-02 : f32
    %11 = vector.broadcast %cst_6 : f32 to vector<128x32xf32>
    %12 = arith.mulf %11, %10 : vector<128x32xf32>
    %13 = arith.addf %6, %12 : vector<128x32xf32>
    %cst_7 = arith.constant 0.797884583 : f32
    %14 = vector.broadcast %cst_7 : f32 to vector<128x32xf32>
    %15 = arith.mulf %14, %13 : vector<128x32xf32>
    %16 = math.tanh %15 : vector<128x32xf32>
    %cst_8 = arith.constant 1.000000e+00 : f32
    %17 = vector.broadcast %cst_8 : f32 to vector<128x32xf32>
    %18 = arith.addf %17, %16 : vector<128x32xf32>
    %19 = arith.mulf %8, %18 : vector<128x32xf32>
    %20 = arith.truncf %19 : vector<128x32xf32> to vector<128x32xbf16>
    %c0_9 = arith.constant 0 : index
    %c0_10 = arith.constant 0 : index
    %21 = vector.load %arg4[%c0_9, %c0_10] : memref<32x32xbf16, #tpu.memory_space<vmem>>, vector<32x32xbf16>
    %cst_11 = arith.constant dense<0.000000e+00> : vector<128x32xf32>
    %22 = tpu.matmul %20, %21, %cst_11 {dimension_numbers = #tpu.dot_dimension_numbers<[1], [0], [0], [1], [0, 0, 1, 1], [], []>} : vector<128x32xbf16>, vector<32x32xbf16>, vector<128x32xf32> -> vector<128x32xf32>
    %c0_12 = arith.constant 0 : index
    %c0_13 = arith.constant 0 : index
    %23 = vector.load %arg5[%c0_12, %c0_13] : memref<1x32xf32, #tpu.memory_space<vmem>>, vector<1x32xf32>
    %24 = vector.broadcast %23 : vector<1x32xf32> to vector<128x32xf32>
    %25 = arith.addf %22, %24 : vector<128x32xf32>
    %26 = arith.addf %25, %1 : vector<128x32xf32>
    %cst_14 = arith.constant 5.000000e-01 : f32
    %27 = vector.broadcast %cst_14 : f32 to vector<128x32xf32>
    %28 = arith.mulf %27, %26 : vector<128x32xf32>
    %29 = arith.mulf %26, %26 : vector<128x32xf32>
    %30 = arith.mulf %29, %26 : vector<128x32xf32>
    %cst_15 = arith.constant 4.471500e-02 : f32
    %31 = vector.broadcast %cst_15 : f32 to vector<128x32xf32>
    %32 = arith.mulf %31, %30 : vector<128x32xf32>
    %33 = arith.addf %26, %32 : vector<128x32xf32>
    %cst_16 = arith.constant 0.797884583 : f32
    %34 = vector.broadcast %cst_16 : f32 to vector<128x32xf32>
    %35 = arith.mulf %34, %33 : vector<128x32xf32>
    %36 = math.tanh %35 : vector<128x32xf32>
    %cst_17 = arith.constant 1.000000e+00 : f32
    %37 = vector.broadcast %cst_17 : f32 to vector<128x32xf32>
    %38 = arith.addf %37, %36 : vector<128x32xf32>
    %39 = arith.mulf %28, %38 : vector<128x32xf32>
    %40 = arith.truncf %39 : vector<128x32xf32> to vector<128x32xbf16>
    %c0_18 = arith.constant 0 : index
    %c0_19 = arith.constant 0 : index
    %41 = vector.load %arg10[%c0_18, %c0_19] : memref<1x32xf32, #tpu.memory_space<vmem>>, vector<1x32xf32>
    %c0_20 = arith.constant 0 : index
    %c0_21 = arith.constant 0 : index
    %c0_22 = arith.constant 0 : index
    %42 = vector.load %arg6[%c0_20, %c0_21, %c0_22] : memref<4x32x32xbf16, #tpu.memory_space<vmem>>, vector<1x32x32xbf16>
    %43 = vector.shape_cast %42 : vector<1x32x32xbf16> to vector<32x32xbf16>
    %cst_23 = arith.constant dense<0.000000e+00> : vector<128x32xf32>
    %44 = tpu.matmul %40, %43, %cst_23 {dimension_numbers = #tpu.dot_dimension_numbers<[1], [0], [0], [1], [0, 0, 1, 1], [], []>} : vector<128x32xbf16>, vector<32x32xbf16>, vector<128x32xf32> -> vector<128x32xf32>
    %45 = arith.truncf %44 : vector<128x32xf32> to vector<128x32xbf16>
    %46 = vector.shape_cast %45 : vector<128x32xbf16> to vector<8x16x32xbf16>
    %c0_24 = arith.constant 0 : index
    %c0_25 = arith.constant 0 : index
    %c0_26 = arith.constant 0 : index
    %47 = vector.load %arg7[%c0_24, %c0_25, %c0_26] : memref<4x32x32xbf16, #tpu.memory_space<vmem>>, vector<1x32x32xbf16>
    %48 = vector.shape_cast %47 : vector<1x32x32xbf16> to vector<32x32xbf16>
    %cst_27 = arith.constant dense<0.000000e+00> : vector<128x32xf32>
    %49 = tpu.matmul %40, %48, %cst_27 {dimension_numbers = #tpu.dot_dimension_numbers<[1], [0], [0], [1], [0, 0, 1, 1], [], []>} : vector<128x32xbf16>, vector<32x32xbf16>, vector<128x32xf32> -> vector<128x32xf32>
    %50 = arith.truncf %49 : vector<128x32xf32> to vector<128x32xbf16>
    %51 = vector.shape_cast %50 : vector<128x32xbf16> to vector<8x16x32xbf16>
    %c0_28 = arith.constant 0 : index
    %c0_29 = arith.constant 0 : index
    %c0_30 = arith.constant 0 : index
    %52 = vector.load %arg8[%c0_28, %c0_29, %c0_30] : memref<4x32x32xbf16, #tpu.memory_space<vmem>>, vector<1x32x32xbf16>
    %53 = vector.shape_cast %52 : vector<1x32x32xbf16> to vector<32x32xbf16>
    %cst_31 = arith.constant dense<0.000000e+00> : vector<128x32xf32>
    %54 = tpu.matmul %40, %53, %cst_31 {dimension_numbers = #tpu.dot_dimension_numbers<[1], [0], [0], [1], [0, 0, 1, 1], [], []>} : vector<128x32xbf16>, vector<32x32xbf16>, vector<128x32xf32> -> vector<128x32xf32>
    %55 = arith.truncf %54 : vector<128x32xf32> to vector<128x32xbf16>
    %56 = vector.shape_cast %55 : vector<128x32xbf16> to vector<8x16x32xbf16>
    "tpu.trace_start"() <{level = 10 : i32, message = "gid,gjd->gij"}> : () -> ()
    %cst_32 = arith.constant dense<0.000000e+00> : vector<8x16x16xf32>
    %57 = tpu.matmul %46, %51, %cst_32 {dimension_numbers = #tpu.dot_dimension_numbers<[2], [2], [1], [1], [0, 0, 0, 1, 1, 1], [0], [0]>} : vector<8x16x32xbf16>, vector<8x16x32xbf16>, vector<8x16x16xf32> -> vector<8x16x16xf32>
    "tpu.trace_stop"() : () -> ()
    %cst_33 = arith.constant dense<0xFF800000> : vector<8x16xf32>
    %58 = vector.multi_reduction <maximumf>, %57, %cst_33 [2] : vector<8x16x16xf32> to vector<8x16xf32>
    %59 = vector.shape_cast %58 : vector<8x16xf32> to vector<8x16x1xf32>
    %60 = vector.broadcast %59 : vector<8x16x1xf32> to vector<8x16x16xf32>
    %61 = arith.subf %57, %60 : vector<8x16x16xf32>
    %62 = math.exp %61 : vector<8x16x16xf32>
    %cst_34 = arith.constant dense<0.000000e+00> : vector<8x16xf32>
    %63 = vector.multi_reduction <add>, %62, %cst_34 [2] : vector<8x16x16xf32> to vector<8x16xf32>
    %64 = vector.shape_cast %63 : vector<8x16xf32> to vector<8x16x1xf32>
    %65 = tpu.reciprocal %64 {approx = true} : vector<8x16x1xf32> -> vector<8x16x1xf32>
    %66 = vector.broadcast %65 : vector<8x16x1xf32> to vector<8x16x16xf32>
    %67 = arith.mulf %62, %66 : vector<8x16x16xf32>
    %68 = arith.truncf %67 : vector<8x16x16xf32> to vector<8x16x16xbf16>
    "tpu.trace_start"() <{level = 10 : i32, message = "gij,gjd->gid"}> : () -> ()
    %cst_35 = arith.constant dense<0.000000e+00> : vector<8x16x32xf32>
    %69 = tpu.matmul %68, %56, %cst_35 {dimension_numbers = #tpu.dot_dimension_numbers<[2], [1], [1], [2], [0, 0, 0, 1, 1, 2], [0], [0]>} : vector<8x16x16xbf16>, vector<8x16x32xbf16>, vector<8x16x32xf32> -> vector<8x16x32xf32>
    "tpu.trace_stop"() : () -> ()
    %70 = vector.shape_cast %69 : vector<8x16x32xf32> to vector<128x32xf32>
    %71 = arith.truncf %70 : vector<128x32xf32> to vector<128x32xbf16>
    %c0_36 = arith.constant 0 : index
    %c0_37 = arith.constant 0 : index
    %c0_38 = arith.constant 0 : index
    %72 = vector.load %arg9[%c0_36, %c0_37, %c0_38] : memref<4x32x32xbf16, #tpu.memory_space<vmem>>, vector<1x32x32xbf16>
    %73 = vector.shape_cast %72 : vector<1x32x32xbf16> to vector<32x32xbf16>
    %cst_39 = arith.constant dense<0.000000e+00> : vector<128x32xf32>
    %74 = tpu.matmul %71, %73, %cst_39 {dimension_numbers = #tpu.dot_dimension_numbers<[1], [0], [0], [1], [0, 0, 1, 1], [], []>} : vector<128x32xbf16>, vector<32x32xbf16>, vector<128x32xf32> -> vector<128x32xf32>
    %75 = vector.broadcast %41 : vector<1x32xf32> to vector<128x32xf32>
    %76 = arith.addf %75, %74 : vector<128x32xf32>
    %c1 = arith.constant 1 : index
    %c0_40 = arith.constant 0 : index
    %c0_41 = arith.constant 0 : index
    %77 = vector.load %arg6[%c1, %c0_40, %c0_41] : memref<4x32x32xbf16, #tpu.memory_space<vmem>>, vector<1x32x32xbf16>
    %78 = vector.shape_cast %77 : vector<1x32x32xbf16> to vector<32x32xbf16>
    %cst_42 = arith.constant dense<0.000000e+00> : vector<128x32xf32>
    %79 = tpu.matmul %40, %78, %cst_42 {dimension_numbers = #tpu.dot_dimension_numbers<[1], [0], [0], [1], [0, 0, 1, 1], [], []>} : vector<128x32xbf16>, vector<32x32xbf16>, vector<128x32xf32> -> vector<128x32xf32>
    %80 = arith.truncf %79 : vector<128x32xf32> to vector<128x32xbf16>
    %81 = vector.shape_cast %80 : vector<128x32xbf16> to vector<8x16x32xbf16>
    %c1_43 = arith.constant 1 : index
    %c0_44 = arith.constant 0 : index
    %c0_45 = arith.constant 0 : index
    %82 = vector.load %arg7[%c1_43, %c0_44, %c0_45] : memref<4x32x32xbf16, #tpu.memory_space<vmem>>, vector<1x32x32xbf16>
    %83 = vector.shape_cast %82 : vector<1x32x32xbf16> to vector<32x32xbf16>
    %cst_46 = arith.constant dense<0.000000e+00> : vector<128x32xf32>
    %84 = tpu.matmul %40, %83, %cst_46 {dimension_numbers = #tpu.dot_dimension_numbers<[1], [0], [0], [1], [0, 0, 1, 1], [], []>} : vector<128x32xbf16>, vector<32x32xbf16>, vector<128x32xf32> -> vector<128x32xf32>
    %85 = arith.truncf %84 : vector<128x32xf32> to vector<128x32xbf16>
    %86 = vector.shape_cast %85 : vector<128x32xbf16> to vector<8x16x32xbf16>
    %c1_47 = arith.constant 1 : index
    %c0_48 = arith.constant 0 : index
    %c0_49 = arith.constant 0 : index
    %87 = vector.load %arg8[%c1_47, %c0_48, %c0_49] : memref<4x32x32xbf16, #tpu.memory_space<vmem>>, vector<1x32x32xbf16>
    %88 = vector.shape_cast %87 : vector<1x32x32xbf16> to vector<32x32xbf16>
    %cst_50 = arith.constant dense<0.000000e+00> : vector<128x32xf32>
    %89 = tpu.matmul %40, %88, %cst_50 {dimension_numbers = #tpu.dot_dimension_numbers<[1], [0], [0], [1], [0, 0, 1, 1], [], []>} : vector<128x32xbf16>, vector<32x32xbf16>, vector<128x32xf32> -> vector<128x32xf32>
    %90 = arith.truncf %89 : vector<128x32xf32> to vector<128x32xbf16>
    %91 = vector.shape_cast %90 : vector<128x32xbf16> to vector<8x16x32xbf16>
    "tpu.trace_start"() <{level = 10 : i32, message = "gid,gjd->gij"}> : () -> ()
    %cst_51 = arith.constant dense<0.000000e+00> : vector<8x16x16xf32>
    %92 = tpu.matmul %81, %86, %cst_51 {dimension_numbers = #tpu.dot_dimension_numbers<[2], [2], [1], [1], [0, 0, 0, 1, 1, 1], [0], [0]>} : vector<8x16x32xbf16>, vector<8x16x32xbf16>, vector<8x16x16xf32> -> vector<8x16x16xf32>
    "tpu.trace_stop"() : () -> ()
    %cst_52 = arith.constant dense<0xFF800000> : vector<8x16xf32>
    %93 = vector.multi_reduction <maximumf>, %92, %cst_52 [2] : vector<8x16x16xf32> to vector<8x16xf32>
    %94 = vector.shape_cast %93 : vector<8x16xf32> to vector<8x16x1xf32>
    %95 = vector.broadcast %94 : vector<8x16x1xf32> to vector<8x16x16xf32>
    %96 = arith.subf %92, %95 : vector<8x16x16xf32>
    %97 = math.exp %96 : vector<8x16x16xf32>
    %cst_53 = arith.constant dense<0.000000e+00> : vector<8x16xf32>
    %98 = vector.multi_reduction <add>, %97, %cst_53 [2] : vector<8x16x16xf32> to vector<8x16xf32>
    %99 = vector.shape_cast %98 : vector<8x16xf32> to vector<8x16x1xf32>
    %100 = tpu.reciprocal %99 {approx = true} : vector<8x16x1xf32> -> vector<8x16x1xf32>
    %101 = vector.broadcast %100 : vector<8x16x1xf32> to vector<8x16x16xf32>
    %102 = arith.mulf %97, %101 : vector<8x16x16xf32>
    %103 = arith.truncf %102 : vector<8x16x16xf32> to vector<8x16x16xbf16>
    "tpu.trace_start"() <{level = 10 : i32, message = "gij,gjd->gid"}> : () -> ()
    %cst_54 = arith.constant dense<0.000000e+00> : vector<8x16x32xf32>
    %104 = tpu.matmul %103, %91, %cst_54 {dimension_numbers = #tpu.dot_dimension_numbers<[2], [1], [1], [2], [0, 0, 0, 1, 1, 2], [0], [0]>} : vector<8x16x16xbf16>, vector<8x16x32xbf16>, vector<8x16x32xf32> -> vector<8x16x32xf32>
    "tpu.trace_stop"() : () -> ()
    %105 = vector.shape_cast %104 : vector<8x16x32xf32> to vector<128x32xf32>
    %106 = arith.truncf %105 : vector<128x32xf32> to vector<128x32xbf16>
    %c1_55 = arith.constant 1 : index
    %c0_56 = arith.constant 0 : index
    %c0_57 = arith.constant 0 : index
    %107 = vector.load %arg9[%c1_55, %c0_56, %c0_57] : memref<4x32x32xbf16, #tpu.memory_space<vmem>>, vector<1x32x32xbf16>
    %108 = vector.shape_cast %107 : vector<1x32x32xbf16> to vector<32x32xbf16>
    %cst_58 = arith.constant dense<0.000000e+00> : vector<128x32xf32>
    %109 = tpu.matmul %106, %108, %cst_58 {dimension_numbers = #tpu.dot_dimension_numbers<[1], [0], [0], [1], [0, 0, 1, 1], [], []>} : vector<128x32xbf16>, vector<32x32xbf16>, vector<128x32xf32> -> vector<128x32xf32>
    %110 = arith.addf %76, %109 : vector<128x32xf32>
    %c2 = arith.constant 2 : index
    %c0_59 = arith.constant 0 : index
    %c0_60 = arith.constant 0 : index
    %111 = vector.load %arg6[%c2, %c0_59, %c0_60] : memref<4x32x32xbf16, #tpu.memory_space<vmem>>, vector<1x32x32xbf16>
    %112 = vector.shape_cast %111 : vector<1x32x32xbf16> to vector<32x32xbf16>
    %cst_61 = arith.constant dense<0.000000e+00> : vector<128x32xf32>
    %113 = tpu.matmul %40, %112, %cst_61 {dimension_numbers = #tpu.dot_dimension_numbers<[1], [0], [0], [1], [0, 0, 1, 1], [], []>} : vector<128x32xbf16>, vector<32x32xbf16>, vector<128x32xf32> -> vector<128x32xf32>
    %114 = arith.truncf %113 : vector<128x32xf32> to vector<128x32xbf16>
    %115 = vector.shape_cast %114 : vector<128x32xbf16> to vector<8x16x32xbf16>
    %c2_62 = arith.constant 2 : index
    %c0_63 = arith.constant 0 : index
    %c0_64 = arith.constant 0 : index
    %116 = vector.load %arg7[%c2_62, %c0_63, %c0_64] : memref<4x32x32xbf16, #tpu.memory_space<vmem>>, vector<1x32x32xbf16>
    %117 = vector.shape_cast %116 : vector<1x32x32xbf16> to vector<32x32xbf16>
    %cst_65 = arith.constant dense<0.000000e+00> : vector<128x32xf32>
    %118 = tpu.matmul %40, %117, %cst_65 {dimension_numbers = #tpu.dot_dimension_numbers<[1], [0], [0], [1], [0, 0, 1, 1], [], []>} : vector<128x32xbf16>, vector<32x32xbf16>, vector<128x32xf32> -> vector<128x32xf32>
    %119 = arith.truncf %118 : vector<128x32xf32> to vector<128x32xbf16>
    %120 = vector.shape_cast %119 : vector<128x32xbf16> to vector<8x16x32xbf16>
    %c2_66 = arith.constant 2 : index
    %c0_67 = arith.constant 0 : index
    %c0_68 = arith.constant 0 : index
    %121 = vector.load %arg8[%c2_66, %c0_67, %c0_68] : memref<4x32x32xbf16, #tpu.memory_space<vmem>>, vector<1x32x32xbf16>
    %122 = vector.shape_cast %121 : vector<1x32x32xbf16> to vector<32x32xbf16>
    %cst_69 = arith.constant dense<0.000000e+00> : vector<128x32xf32>
    %123 = tpu.matmul %40, %122, %cst_69 {dimension_numbers = #tpu.dot_dimension_numbers<[1], [0], [0], [1], [0, 0, 1, 1], [], []>} : vector<128x32xbf16>, vector<32x32xbf16>, vector<128x32xf32> -> vector<128x32xf32>
    %124 = arith.truncf %123 : vector<128x32xf32> to vector<128x32xbf16>
    %125 = vector.shape_cast %124 : vector<128x32xbf16> to vector<8x16x32xbf16>
    "tpu.trace_start"() <{level = 10 : i32, message = "gid,gjd->gij"}> : () -> ()
    %cst_70 = arith.constant dense<0.000000e+00> : vector<8x16x16xf32>
    %126 = tpu.matmul %115, %120, %cst_70 {dimension_numbers = #tpu.dot_dimension_numbers<[2], [2], [1], [1], [0, 0, 0, 1, 1, 1], [0], [0]>} : vector<8x16x32xbf16>, vector<8x16x32xbf16>, vector<8x16x16xf32> -> vector<8x16x16xf32>
    "tpu.trace_stop"() : () -> ()
    %cst_71 = arith.constant dense<0xFF800000> : vector<8x16xf32>
    %127 = vector.multi_reduction <maximumf>, %126, %cst_71 [2] : vector<8x16x16xf32> to vector<8x16xf32>
    %128 = vector.shape_cast %127 : vector<8x16xf32> to vector<8x16x1xf32>
    %129 = vector.broadcast %128 : vector<8x16x1xf32> to vector<8x16x16xf32>
    %130 = arith.subf %126, %129 : vector<8x16x16xf32>
    %131 = math.exp %130 : vector<8x16x16xf32>
    %cst_72 = arith.constant dense<0.000000e+00> : vector<8x16xf32>
    %132 = vector.multi_reduction <add>, %131, %cst_72 [2] : vector<8x16x16xf32> to vector<8x16xf32>
    %133 = vector.shape_cast %132 : vector<8x16xf32> to vector<8x16x1xf32>
    %134 = tpu.reciprocal %133 {approx = true} : vector<8x16x1xf32> -> vector<8x16x1xf32>
    %135 = vector.broadcast %134 : vector<8x16x1xf32> to vector<8x16x16xf32>
    %136 = arith.mulf %131, %135 : vector<8x16x16xf32>
    %137 = arith.truncf %136 : vector<8x16x16xf32> to vector<8x16x16xbf16>
    "tpu.trace_start"() <{level = 10 : i32, message = "gij,gjd->gid"}> : () -> ()
    %cst_73 = arith.constant dense<0.000000e+00> : vector<8x16x32xf32>
    %138 = tpu.matmul %137, %125, %cst_73 {dimension_numbers = #tpu.dot_dimension_numbers<[2], [1], [1], [2], [0, 0, 0, 1, 1, 2], [0], [0]>} : vector<8x16x16xbf16>, vector<8x16x32xbf16>, vector<8x16x32xf32> -> vector<8x16x32xf32>
    "tpu.trace_stop"() : () -> ()
    %139 = vector.shape_cast %138 : vector<8x16x32xf32> to vector<128x32xf32>
    %140 = arith.truncf %139 : vector<128x32xf32> to vector<128x32xbf16>
    %c2_74 = arith.constant 2 : index
    %c0_75 = arith.constant 0 : index
    %c0_76 = arith.constant 0 : index
    %141 = vector.load %arg9[%c2_74, %c0_75, %c0_76] : memref<4x32x32xbf16, #tpu.memory_space<vmem>>, vector<1x32x32xbf16>
    %142 = vector.shape_cast %141 : vector<1x32x32xbf16> to vector<32x32xbf16>
    %cst_77 = arith.constant dense<0.000000e+00> : vector<128x32xf32>
    %143 = tpu.matmul %140, %142, %cst_77 {dimension_numbers = #tpu.dot_dimension_numbers<[1], [0], [0], [1], [0, 0, 1, 1], [], []>} : vector<128x32xbf16>, vector<32x32xbf16>, vector<128x32xf32> -> vector<128x32xf32>
    %144 = arith.addf %110, %143 : vector<128x32xf32>
    %c3 = arith.constant 3 : index
    %c0_78 = arith.constant 0 : index
    %c0_79 = arith.constant 0 : index
    %145 = vector.load %arg6[%c3, %c0_78, %c0_79] : memref<4x32x32xbf16, #tpu.memory_space<vmem>>, vector<1x32x32xbf16>
    %146 = vector.shape_cast %145 : vector<1x32x32xbf16> to vector<32x32xbf16>
    %cst_80 = arith.constant dense<0.000000e+00> : vector<128x32xf32>
    %147 = tpu.matmul %40, %146, %cst_80 {dimension_numbers = #tpu.dot_dimension_numbers<[1], [0], [0], [1], [0, 0, 1, 1], [], []>} : vector<128x32xbf16>, vector<32x32xbf16>, vector<128x32xf32> -> vector<128x32xf32>
    %148 = arith.truncf %147 : vector<128x32xf32> to vector<128x32xbf16>
    %149 = vector.shape_cast %148 : vector<128x32xbf16> to vector<8x16x32xbf16>
    %c3_81 = arith.constant 3 : index
    %c0_82 = arith.constant 0 : index
    %c0_83 = arith.constant 0 : index
    %150 = vector.load %arg7[%c3_81, %c0_82, %c0_83] : memref<4x32x32xbf16, #tpu.memory_space<vmem>>, vector<1x32x32xbf16>
    %151 = vector.shape_cast %150 : vector<1x32x32xbf16> to vector<32x32xbf16>
    %cst_84 = arith.constant dense<0.000000e+00> : vector<128x32xf32>
    %152 = tpu.matmul %40, %151, %cst_84 {dimension_numbers = #tpu.dot_dimension_numbers<[1], [0], [0], [1], [0, 0, 1, 1], [], []>} : vector<128x32xbf16>, vector<32x32xbf16>, vector<128x32xf32> -> vector<128x32xf32>
    %153 = arith.truncf %152 : vector<128x32xf32> to vector<128x32xbf16>
    %154 = vector.shape_cast %153 : vector<128x32xbf16> to vector<8x16x32xbf16>
    %c3_85 = arith.constant 3 : index
    %c0_86 = arith.constant 0 : index
    %c0_87 = arith.constant 0 : index
    %155 = vector.load %arg8[%c3_85, %c0_86, %c0_87] : memref<4x32x32xbf16, #tpu.memory_space<vmem>>, vector<1x32x32xbf16>
    %156 = vector.shape_cast %155 : vector<1x32x32xbf16> to vector<32x32xbf16>
    %cst_88 = arith.constant dense<0.000000e+00> : vector<128x32xf32>
    %157 = tpu.matmul %40, %156, %cst_88 {dimension_numbers = #tpu.dot_dimension_numbers<[1], [0], [0], [1], [0, 0, 1, 1], [], []>} : vector<128x32xbf16>, vector<32x32xbf16>, vector<128x32xf32> -> vector<128x32xf32>
    %158 = arith.truncf %157 : vector<128x32xf32> to vector<128x32xbf16>
    %159 = vector.shape_cast %158 : vector<128x32xbf16> to vector<8x16x32xbf16>
    "tpu.trace_start"() <{level = 10 : i32, message = "gid,gjd->gij"}> : () -> ()
    %cst_89 = arith.constant dense<0.000000e+00> : vector<8x16x16xf32>
    %160 = tpu.matmul %149, %154, %cst_89 {dimension_numbers = #tpu.dot_dimension_numbers<[2], [2], [1], [1], [0, 0, 0, 1, 1, 1], [0], [0]>} : vector<8x16x32xbf16>, vector<8x16x32xbf16>, vector<8x16x16xf32> -> vector<8x16x16xf32>
    "tpu.trace_stop"() : () -> ()
    %cst_90 = arith.constant dense<0xFF800000> : vector<8x16xf32>
    %161 = vector.multi_reduction <maximumf>, %160, %cst_90 [2] : vector<8x16x16xf32> to vector<8x16xf32>
    %162 = vector.shape_cast %161 : vector<8x16xf32> to vector<8x16x1xf32>
    %163 = vector.broadcast %162 : vector<8x16x1xf32> to vector<8x16x16xf32>
    %164 = arith.subf %160, %163 : vector<8x16x16xf32>
    %165 = math.exp %164 : vector<8x16x16xf32>
    %cst_91 = arith.constant dense<0.000000e+00> : vector<8x16xf32>
    %166 = vector.multi_reduction <add>, %165, %cst_91 [2] : vector<8x16x16xf32> to vector<8x16xf32>
    %167 = vector.shape_cast %166 : vector<8x16xf32> to vector<8x16x1xf32>
    %168 = tpu.reciprocal %167 {approx = true} : vector<8x16x1xf32> -> vector<8x16x1xf32>
    %169 = vector.broadcast %168 : vector<8x16x1xf32> to vector<8x16x16xf32>
    %170 = arith.mulf %165, %169 : vector<8x16x16xf32>
    %171 = arith.truncf %170 : vector<8x16x16xf32> to vector<8x16x16xbf16>
    "tpu.trace_start"() <{level = 10 : i32, message = "gij,gjd->gid"}> : () -> ()
    %cst_92 = arith.constant dense<0.000000e+00> : vector<8x16x32xf32>
    %172 = tpu.matmul %171, %159, %cst_92 {dimension_numbers = #tpu.dot_dimension_numbers<[2], [1], [1], [2], [0, 0, 0, 1, 1, 2], [0], [0]>} : vector<8x16x16xbf16>, vector<8x16x32xbf16>, vector<8x16x32xf32> -> vector<8x16x32xf32>
    "tpu.trace_stop"() : () -> ()
    %173 = vector.shape_cast %172 : vector<8x16x32xf32> to vector<128x32xf32>
    %174 = arith.truncf %173 : vector<128x32xf32> to vector<128x32xbf16>
    %c3_93 = arith.constant 3 : index
    %c0_94 = arith.constant 0 : index
    %c0_95 = arith.constant 0 : index
    %175 = vector.load %arg9[%c3_93, %c0_94, %c0_95] : memref<4x32x32xbf16, #tpu.memory_space<vmem>>, vector<1x32x32xbf16>
    %176 = vector.shape_cast %175 : vector<1x32x32xbf16> to vector<32x32xbf16>
    %cst_96 = arith.constant dense<0.000000e+00> : vector<128x32xf32>
    %177 = tpu.matmul %174, %176, %cst_96 {dimension_numbers = #tpu.dot_dimension_numbers<[1], [0], [0], [1], [0, 0, 1, 1], [], []>} : vector<128x32xbf16>, vector<32x32xbf16>, vector<128x32xf32> -> vector<128x32xf32>
    %178 = arith.addf %144, %177 : vector<128x32xf32>
    %179 = arith.addf %178, %39 : vector<128x32xf32>
    %cst_97 = arith.constant 5.000000e-01 : f32
    %180 = vector.broadcast %cst_97 : f32 to vector<128x32xf32>
    %181 = arith.mulf %180, %179 : vector<128x32xf32>
    %182 = arith.mulf %179, %179 : vector<128x32xf32>
    %183 = arith.mulf %182, %179 : vector<128x32xf32>
    %cst_98 = arith.constant 4.471500e-02 : f32
    %184 = vector.broadcast %cst_98 : f32 to vector<128x32xf32>
    %185 = arith.mulf %184, %183 : vector<128x32xf32>
    %186 = arith.addf %179, %185 : vector<128x32xf32>
    %cst_99 = arith.constant 0.797884583 : f32
    %187 = vector.broadcast %cst_99 : f32 to vector<128x32xf32>
    %188 = arith.mulf %187, %186 : vector<128x32xf32>
    %189 = math.tanh %188 : vector<128x32xf32>
    %cst_100 = arith.constant 1.000000e+00 : f32
    %190 = vector.broadcast %cst_100 : f32 to vector<128x32xf32>
    %191 = arith.addf %190, %189 : vector<128x32xf32>
    %192 = arith.mulf %181, %191 : vector<128x32xf32>
    %193 = arith.truncf %192 : vector<128x32xf32> to vector<128x32xbf16>
    %c0_101 = arith.constant 0 : index
    %c0_102 = arith.constant 0 : index
    %194 = vector.load %arg11[%c0_101, %c0_102] : memref<32x32xbf16, #tpu.memory_space<vmem>>, vector<32x32xbf16>
    %cst_103 = arith.constant dense<0.000000e+00> : vector<128x32xf32>
    %195 = tpu.matmul %193, %194, %cst_103 {dimension_numbers = #tpu.dot_dimension_numbers<[1], [0], [0], [1], [0, 0, 1, 1], [], []>} : vector<128x32xbf16>, vector<32x32xbf16>, vector<128x32xf32> -> vector<128x32xf32>
    %c0_104 = arith.constant 0 : index
    %c0_105 = arith.constant 0 : index
    %196 = vector.load %arg12[%c0_104, %c0_105] : memref<1x32xf32, #tpu.memory_space<vmem>>, vector<1x32xf32>
    %197 = vector.broadcast %196 : vector<1x32xf32> to vector<128x32xf32>
    %198 = arith.addf %195, %197 : vector<128x32xf32>
    %199 = arith.addf %192, %198 : vector<128x32xf32>
    %cst_106 = arith.constant 5.000000e-01 : f32
    %200 = vector.broadcast %cst_106 : f32 to vector<128x32xf32>
    %201 = arith.mulf %200, %199 : vector<128x32xf32>
    %202 = arith.mulf %199, %199 : vector<128x32xf32>
    %203 = arith.mulf %202, %199 : vector<128x32xf32>
    %cst_107 = arith.constant 4.471500e-02 : f32
    %204 = vector.broadcast %cst_107 : f32 to vector<128x32xf32>
    %205 = arith.mulf %204, %203 : vector<128x32xf32>
    %206 = arith.addf %199, %205 : vector<128x32xf32>
    %cst_108 = arith.constant 0.797884583 : f32
    %207 = vector.broadcast %cst_108 : f32 to vector<128x32xf32>
    %208 = arith.mulf %207, %206 : vector<128x32xf32>
    %209 = math.tanh %208 : vector<128x32xf32>
    %cst_109 = arith.constant 1.000000e+00 : f32
    %210 = vector.broadcast %cst_109 : f32 to vector<128x32xf32>
    %211 = arith.addf %210, %209 : vector<128x32xf32>
    %212 = arith.mulf %201, %211 : vector<128x32xf32>
    %213 = vector.shape_cast %212 : vector<128x32xf32> to vector<8x16x32xf32>
    %cst_110 = arith.constant dense<0xFF800000> : vector<8x32xf32>
    %214 = vector.multi_reduction <maximumf>, %213, %cst_110 [1] : vector<8x16x32xf32> to vector<8x32xf32>
    %c0_111 = arith.constant 0 : index
    %c0_112 = arith.constant 0 : index
    %c0_113 = arith.constant 0 : index
    %215 = vector.load %arg13[%c0_111, %c0_112, %c0_113] : memref<1x8x32xf32, #tpu.memory_space<vmem>>, vector<1x8x32xf32>
    %216 = vector.shape_cast %215 : vector<1x8x32xf32> to vector<8x32xf32>
    %217 = vector.shape_cast %214 : vector<8x32xf32> to vector<1x8x32xf32>
    tpu.vector_store %arg13[%c0_111, %c0_112, %c0_113], %217 {strides = array<i32>} : memref<1x8x32xf32, #tpu.memory_space<vmem>>, vector<1x8x32xf32>,
    return
  }
  func.func @transform_0(%arg0: i32) -> (i32, i32) {
    %c0_i32 = arith.constant 0 : i32
    %c0_i32_0 = arith.constant 0 : i32
    return %arg0, %c0_i32 : i32, i32
  }
  func.func @transform_1(%arg0: i32) -> (i32, i32) {
    %c0_i32 = arith.constant 0 : i32
    %c0_i32_0 = arith.constant 0 : i32
    %c0_i32_1 = arith.constant 0 : i32
    return %c0_i32, %c0_i32_0 : i32, i32
  }
  func.func @transform_2(%arg0: i32) -> (i32, i32) {
    %c0_i32 = arith.constant 0 : i32
    %c0_i32_0 = arith.constant 0 : i32
    %c0_i32_1 = arith.constant 0 : i32
    return %c0_i32, %c0_i32_0 : i32, i32
  }
  func.func @transform_3(%arg0: i32) -> (i32, i32) {
    %c0_i32 = arith.constant 0 : i32
    %c0_i32_0 = arith.constant 0 : i32
    %c0_i32_1 = arith.constant 0 : i32
    return %c0_i32, %c0_i32_0 : i32, i32
  }
  func.func @transform_4(%arg0: i32) -> (i32, i32) {
    %c0_i32 = arith.constant 0 : i32
    %c0_i32_0 = arith.constant 0 : i32
    %c0_i32_1 = arith.constant 0 : i32
    return %c0_i32, %c0_i32_0 : i32, i32
  }
  func.func @transform_5(%arg0: i32) -> (i32, i32, i32) {
    %c0_i32 = arith.constant 0 : i32
    %c0_i32_0 = arith.constant 0 : i32
    %c0_i32_1 = arith.constant 0 : i32
    %c0_i32_2 = arith.constant 0 : i32
    return %c0_i32, %c0_i32_0, %c0_i32_1 : i32, i32, i32
  }
  func.func @transform_6(%arg0: i32) -> (i32, i32, i32) {
    %c0_i32 = arith.constant 0 : i32
    %c0_i32_0 = arith.constant 0 : i32
    %c0_i32_1 = arith.constant 0 : i32
    %c0_i32_2 = arith.constant 0 : i32
    return %c0_i32, %c0_i32_0, %c0_i32_1 : i32, i32, i32
  }
  func.func @transform_7(%arg0: i32) -> (i32, i32, i32) {
    %c0_i32 = arith.constant 0 : i32
    %c0_i32_0 = arith.constant 0 : i32
    %c0_i32_1 = arith.constant 0 : i32
    %c0_i32_2 = arith.constant 0 : i32
    return %c0_i32, %c0_i32_0, %c0_i32_1 : i32, i32, i32
  }
  func.func @transform_8(%arg0: i32) -> (i32, i32, i32) {
    %c0_i32 = arith.constant 0 : i32
    %c0_i32_0 = arith.constant 0 : i32
    %c0_i32_1 = arith.constant 0 : i32
    %c0_i32_2 = arith.constant 0 : i32
    return %c0_i32, %c0_i32_0, %c0_i32_1 : i32, i32, i32
  }
  func.func @transform_9(%arg0: i32) -> (i32, i32) {
    %c0_i32 = arith.constant 0 : i32
    %c0_i32_0 = arith.constant 0 : i32
    %c0_i32_1 = arith.constant 0 : i32
    return %c0_i32, %c0_i32_0 : i32, i32
  }
  func.func @transform_10(%arg0: i32) -> (i32, i32) {
    %c0_i32 = arith.constant 0 : i32
    %c0_i32_0 = arith.constant 0 : i32
    %c0_i32_1 = arith.constant 0 : i32
    return %c0_i32, %c0_i32_0 : i32, i32
  }
  func.func @transform_11(%arg0: i32) -> (i32, i32) {
    %c0_i32 = arith.constant 0 : i32
    %c0_i32_0 = arith.constant 0 : i32
    %c0_i32_1 = arith.constant 0 : i32
    return %c0_i32, %c0_i32_0 : i32, i32
  }
  func.func @transform_12(%arg0: i32) -> (i32, i32, i32) {
    %c0_i32 = arith.constant 0 : i32
    %c0_i32_0 = arith.constant 0 : i32
    %c0_i32_1 = arith.constant 0 : i32
    return %arg0, %c0_i32, %c0_i32_0 : i32, i32, i32
  }
}

</mosaic_0001>

<llo_original>
// kernel: tpu_custom_call.1
$region0: #{tpu_custom_call.1}
  #allocation0 [shape = 'u32[]', space=smem, size = 0x4, offset = 0x4, fixed_abs, tag = 'smem constant byte address 0x4 - core index']
  #allocation1 [shape = 'u32[72,128]{1,0:T(1,128)}', space=vmem, size = 0x9000, scoped, tag = 'internal scratch']
  %s0 = inlined_call_operand.vmem [shape: bf16[128,32], index: 0, kind: input, shape index: {}]
  %s1 = inlined_call_operand.vmem [shape: bf16[32,32], index: 1, kind: input, shape index: {}]
  %s2 = inlined_call_operand.vmem [shape: f32[1,32], index: 2, kind: input, shape index: {}]
  %s3 = inlined_call_operand.hbm [shape: bf16[32,32], index: 3, kind: input, shape index: {}]
  %s4 = inlined_call_operand.vmem [shape: f32[1,32], index: 4, kind: input, shape index: {}]
  %s5 = inlined_call_operand.vmem [shape: bf16[4,32,32], index: 5, kind: input, shape index: {}]
  %s6 = inlined_call_operand.hbm [shape: bf16[4,32,32], index: 6, kind: input, shape index: {}]
  %s7 = inlined_call_operand.hbm [shape: bf16[4,32,32], index: 7, kind: input, shape index: {}]
  %s8 = inlined_call_operand.hbm [shape: bf16[4,32,32], index: 8, kind: input, shape index: {}]
  %s9 = inlined_call_operand.vmem [shape: f32[1,32], index: 9, kind: input, shape index: {}]
  %s10 = inlined_call_operand.hbm [shape: bf16[32,32], index: 10, kind: input, shape index: {}]
  %s11 = inlined_call_operand.vmem [shape: f32[1,32], index: 11, kind: input, shape index: {}]
  %s12 = inlined_call_operand.hbm [shape: f32[1,8,32], index: 12, kind: output, shape index: {}]
  %s13 = sld [smem:[#allocation0]]
  $region78: #{tpu_custom_call.1} parent=0
    _
  %s15 = ssub.s32 1, %s13
  %s16 = scalar_select 0, %s15, %s13
  $region1: #{tpu_custom_call.1} parent=0
    #allocation2 [shape = 'u8[8192]{0}', space=vmem, size = 0x2000, scoped, tag = 'input window, operand 3, single buffered']
    #allocation3 [shape = 's32[1]{0}', space=sflag, size = 0x4, scoped, tag = 'scoped memory for tpu_custom_call.1']
    #allocation4 [shape = 's32[1]{0}', space=sflag, size = 0x4, scoped, tag = 'scoped memory for tpu_custom_call.1']
    #allocation5 [shape = 'u8[32768]{0}', space=vmem, size = 0x8000, scoped, tag = 'input window, operand 6, single buffered']
    #allocation6 [shape = 's32[1]{0}', space=sflag, size = 0x4, scoped, tag = 'scoped memory for tpu_custom_call.1']
    #allocation7 [shape = 'u8[32768]{0}', space=vmem, size = 0x8000, scoped, tag = 'input window, operand 7, single buffered']
    #allocation8 [shape = 'u8[32768]{0}', space=vmem, size = 0x8000, scoped, tag = 'input window, operand 8, single buffered']
    #allocation9 [shape = 's32[1]{0}', space=sflag, size = 0x4, scoped, tag = 'scoped memory for tpu_custom_call.1']
    #allocation10 [shape = 'u8[8192]{0}', space=vmem, size = 0x2000, scoped, tag = 'input window, operand 10, single buffered']
    #allocation11 [shape = 'u8[4096]{0}', space=vmem, size = 0x1000, scoped, tag = 'output window, operand 0, single buffered']
    %17 = vsyncpa [#allocation3], 0
    %18 = vsyncpa [#allocation6], 0
    %19 = vsyncpa [#allocation9], 0
    %20 = vsyncpa [#allocation4], 0
    // Predicated region
    $region2: #{tpu_custom_call.1} parent=1 // pred_check
      _
    $region3: #{tpu_custom_call.1} parent=1 // pred_check_branch
      %22 = sbr.rel (0) target = $region5
    $region4: #{tpu_custom_call.1} parent=1 // pred_region
      _
    $region5: #{tpu_custom_call.1} parent=1 // pred_fallthru
      _
    // Predicated region
    $region6: #{tpu_custom_call.1} parent=1 // pred_check
      _
    $region7: #{tpu_custom_call.1} parent=1 // pred_check_branch
      %24 = sbr.rel (0) target = $region9
    $region8: #{tpu_custom_call.1} parent=1 // pred_region
      _
    $region9: #{tpu_custom_call.1} parent=1 // pred_fallthru
      _
    // Predicated region
    $region10: #{tpu_custom_call.1} parent=1 // pred_check
      _
    $region11: #{tpu_custom_call.1} parent=1 // pred_check_branch
      %26 = sbr.rel (0) target = $region13
    $region12: #{tpu_custom_call.1} parent=1 // pred_region
      _
    $region13: #{tpu_custom_call.1} parent=1 // pred_fallthru
      _
    // Predicated region
    $region14: #{tpu_custom_call.1} parent=1 // pred_check
      _
    $region15: #{tpu_custom_call.1} parent=1 // pred_check_branch
      %28 = sbr.rel (0) target = $region17
    $region16: #{tpu_custom_call.1} parent=1 // pred_region
      %30 = vsyncadd [#allocation3], 0
      %s31 = sshll.u32 %s3, 4
      %s32 = int_to_ptr.hbm [resolvable:$true] %s31
      %s33 = sshll.u32 [#allocation2], 4
      %s34 = int_to_ptr.vmem [resolvable:$true] %s33
      %39 = dma.hbm_to_vmem [thread:$0]  %s32, 256, %s34, [#allocation3], 64, 64, 4
    $region17: #{tpu_custom_call.1} parent=1 // pred_fallthru
      _
    // Predicated region
    $region18: #{tpu_custom_call.1} parent=1 // pred_check
      _
    $region19: #{tpu_custom_call.1} parent=1 // pred_check_branch
      %41 = sbr.rel (0) target = $region21
    $region20: #{tpu_custom_call.1} parent=1 // pred_region
      _
    $region21: #{tpu_custom_call.1} parent=1 // pred_fallthru
      _
    // Predicated region
    $region22: #{tpu_custom_call.1} parent=1 // pred_check
      _
    $region23: #{tpu_custom_call.1} parent=1 // pred_check_branch
      %43 = sbr.rel (0) target = $region25
    $region24: #{tpu_custom_call.1} parent=1 // pred_region
      _
    $region25: #{tpu_custom_call.1} parent=1 // pred_fallthru
      _
    // Predicated region
    $region26: #{tpu_custom_call.1} parent=1 // pred_check
      _
    $region27: #{tpu_custom_call.1} parent=1 // pred_check_branch
      %45 = sbr.rel (0) target = $region29
    $region28: #{tpu_custom_call.1} parent=1 // pred_region
      %47 = vsyncadd [#allocation6], 0
      %s48 = sshll.u32 %s6, 4
      %s49 = int_to_ptr.hbm [resolvable:$true] %s48
      %s50 = sshll.u32 [#allocation5], 4
      %s51 = int_to_ptr.vmem [resolvable:$true] %s50
      %56 = dma.hbm_to_vmem [thread:$0]  %s49, 1024, %s51, [#allocation6], 64, 64, 4
    $region29: #{tpu_custom_call.1} parent=1 // pred_fallthru
      _
    // Predicated region
    $region30: #{tpu_custom_call.1} parent=1 // pred_check
      _
    $region31: #{tpu_custom_call.1} parent=1 // pred_check_branch
      %58 = sbr.rel (0) target = $region33
    $region32: #{tpu_custom_call.1} parent=1 // pred_region
      %60 = vsyncadd [#allocation6], 0
      %s61 = sshll.u32 %s7, 4
      %s62 = int_to_ptr.hbm [resolvable:$true] %s61
      %s63 = sshll.u32 [#allocation7], 4
      %s64 = int_to_ptr.vmem [resolvable:$true] %s63
      %69 = dma.hbm_to_vmem [thread:$0]  %s62, 1024, %s64, [#allocation6], 64, 64, 4
    $region33: #{tpu_custom_call.1} parent=1 // pred_fallthru
      _
    // Predicated region
    $region34: #{tpu_custom_call.1} parent=1 // pred_check
      _
    $region35: #{tpu_custom_call.1} parent=1 // pred_check_branch
      %71 = sbr.rel (0) target = $region37
    $region36: #{tpu_custom_call.1} parent=1 // pred_region
      %73 = vsyncadd [#allocation9], 0
      %s74 = sshll.u32 %s8, 4
      %s75 = int_to_ptr.hbm [resolvable:$true] %s74
      %s76 = sshll.u32 [#allocation8], 4
      %s77 = int_to_ptr.vmem [resolvable:$true] %s76
      %82 = dma.hbm_to_vmem [thread:$0]  %s75, 1024, %s77, [#allocation9], 64, 64, 4
    $region37: #{tpu_custom_call.1} parent=1 // pred_fallthru
      _
    // Predicated region
    $region38: #{tpu_custom_call.1} parent=1 // pred_check
      _
    $region39: #{tpu_custom_call.1} parent=1 // pred_check_branch
      %84 = sbr.rel (0) target = $region41
    $region40: #{tpu_custom_call.1} parent=1 // pred_region
      _
    $region41: #{tpu_custom_call.1} parent=1 // pred_fallthru
      _
    // Predicated region
    $region42: #{tpu_custom_call.1} parent=1 // pred_check
      _
    $region43: #{tpu_custom_call.1} parent=1 // pred_check_branch
      %86 = sbr.rel (0) target = $region45
    $region44: #{tpu_custom_call.1} parent=1 // pred_region
      %88 = vsyncadd [#allocation9], 0
      %s89 = sshll.u32 %s10, 4
      %s90 = int_to_ptr.hbm [resolvable:$true] %s89
      %s91 = sshll.u32 [#allocation10], 4
      %s92 = int_to_ptr.vmem [resolvable:$true] %s91
      %97 = dma.hbm_to_vmem [thread:$0]  %s90, 256, %s92, [#allocation9], 64, 64, 4
    $region45: #{tpu_custom_call.1} parent=1 // pred_fallthru
      _
    // Predicated region
    $region46: #{tpu_custom_call.1} parent=1 // pred_check
      _
    $region47: #{tpu_custom_call.1} parent=1 // pred_check_branch
      %99 = sbr.rel (0) target = $region49
    $region48: #{tpu_custom_call.1} parent=1 // pred_region
      _
    $region49: #{tpu_custom_call.1} parent=1 // pred_fallthru
      _
    // Predicated region
    $region50: #{tpu_custom_call.1} parent=1 // pred_check
      _
    $region51: #{tpu_custom_call.1} parent=1 // pred_check_branch
      %101 = sbr.rel (0) target = $region53
    $region52: #{tpu_custom_call.1} parent=1 // pred_region
      %103 = dma.done [#allocation3], 256
    $region53: #{tpu_custom_call.1} parent=1 // pred_fallthru
      _
    // Predicated region
    $region54: #{tpu_custom_call.1} parent=1 // pred_check
      _
    $region55: #{tpu_custom_call.1} parent=1 // pred_check_branch
      %105 = sbr.rel (0) target = $region57
    $region56: #{tpu_custom_call.1} parent=1 // pred_region
      %107 = dma.done [#allocation6], 1024
    $region57: #{tpu_custom_call.1} parent=1 // pred_fallthru
      _
    // Predicated region
    $region58: #{tpu_custom_call.1} parent=1 // pred_check
      _
    $region59: #{tpu_custom_call.1} parent=1 // pred_check_branch
      %109 = sbr.rel (0) target = $region61
    $region60: #{tpu_custom_call.1} parent=1 // pred_region
      %111 = dma.done [#allocation6], 1024
    $region61: #{tpu_custom_call.1} parent=1 // pred_fallthru
      _
    // Predicated region
    $region62: #{tpu_custom_call.1} parent=1 // pred_check
      _
    $region63: #{tpu_custom_call.1} parent=1 // pred_check_branch
      %113 = sbr.rel (0) target = $region65
    $region64: #{tpu_custom_call.1} parent=1 // pred_region
      %115 = dma.done [#allocation9], 1024
    $region65: #{tpu_custom_call.1} parent=1 // pred_fallthru
      _
    // Predicated region
    $region66: #{tpu_custom_call.1} parent=1 // pred_check
      _
    $region67: #{tpu_custom_call.1} parent=1 // pred_check_branch
      %117 = sbr.rel (0) target = $region69
    $region68: #{tpu_custom_call.1} parent=1 // pred_region
      %119 = dma.done [#allocation9], 256
    $region69: #{tpu_custom_call.1} parent=1 // pred_fallthru
      _
    %v121 = vld [vmem:[%s0] sm:$0xf]
    %v122 = vld [vmem:[%s0 + $0x4] sm:$0xf]
    %v123 = vld [vmem:[%s0 + $0x8] sm:$0xf]
    %v124 = vld [vmem:[%s0 + $0xc] sm:$0xf]
    %v125 = vld [vmem:[%s0 + $0x10] sm:$0xf]
    %v126 = vld [vmem:[%s0 + $0x14] sm:$0xf]
    %v127 = vld [vmem:[%s0 + $0x18] sm:$0xf]
    %v128 = vld [vmem:[%s0 + $0x1c] sm:$0xf]
    %v129 = vld [vmem:[%s0 + $0x20] sm:$0xf]
    %v130 = vld [vmem:[%s0 + $0x24] sm:$0xf]
    %v131 = vld [vmem:[%s0 + $0x28] sm:$0xf]
    %v132 = vld [vmem:[%s0 + $0x2c] sm:$0xf]
    %v133 = vld [vmem:[%s0 + $0x30] sm:$0xf]
    %v134 = vld [vmem:[%s0 + $0x34] sm:$0xf]
    %v135 = vld [vmem:[%s0 + $0x38] sm:$0xf]
    %v136 = vld [vmem:[%s0 + $0x3c] sm:$0xf]
    %v137 = vunpack.c.l.bf16 %v121
    %v138 = vunpack.c.l.bf16 %v122
    %v139 = vunpack.c.l.bf16 %v123
    %v140 = vunpack.c.l.bf16 %v124
    %v141 = vunpack.c.l.bf16 %v125
    %v142 = vunpack.c.l.bf16 %v126
    %v143 = vunpack.c.l.bf16 %v127
    %v144 = vunpack.c.l.bf16 %v128
    %v145 = vunpack.c.l.bf16 %v129
    %v146 = vunpack.c.l.bf16 %v130
    %v147 = vunpack.c.l.bf16 %v131
    %v148 = vunpack.c.l.bf16 %v132
    %v149 = vunpack.c.l.bf16 %v133
    %v150 = vunpack.c.l.bf16 %v134
    %v151 = vunpack.c.l.bf16 %v135
    %v152 = vunpack.c.l.bf16 %v136
    %v153 = vld [vmem:[%s1] sm:$0xf]
    %v154 = vld [vmem:[%s1 + $0x4] sm:$0xf]
    %v155 = vld [vmem:[%s1 + $0x8] sm:$0xf]
    %v156 = vld [vmem:[%s1 + $0xc] sm:$0xf]
    %v157 = vld [vmem:[%s2] sm:$0x1]
    %v159 = vperm.slane %v157, 0
    %v177 = vunpack.c.l.b16 %v121
    %v178 = vunpack.c.l.b16 %v122
    %v179 = vunpack.c.l.b16 %v123
    %v180 = vunpack.c.l.b16 %v124
    %v181 = vunpack.c.l.b16 %v125
    %v182 = vunpack.c.l.b16 %v126
    %v183 = vunpack.c.l.b16 %v127
    %v184 = vunpack.c.l.b16 %v128
    %v185 = vunpack.c.l.b16 %v129
    %v186 = vunpack.c.l.b16 %v130
    %v187 = vunpack.c.l.b16 %v131
    %v188 = vunpack.c.l.b16 %v132
    %v189 = vunpack.c.l.b16 %v133
    %v190 = vunpack.c.l.b16 %v134
    %v191 = vunpack.c.l.b16 %v135
    %v192 = vunpack.c.l.b16 %v136
    %v193 = vpack.c.b16 %v178, %v177
    %v194 = vpack.c.b16 %v180, %v179
    %v195 = vpack.c.b16 %v182, %v181
    %v196 = vpack.c.b16 %v184, %v183
    %v197 = vpack.c.b16 %v186, %v185
    %v198 = vpack.c.b16 %v188, %v187
    %v199 = vpack.c.b16 %v190, %v189
    %v200 = vpack.c.b16 %v192, %v191
    %v205 = vunpack.c.l.b16 %v153
    %v206 = vunpack.c.l.b16 %v154
    %v207 = vunpack.c.l.b16 %v155
    %v208 = vunpack.c.l.b16 %v156
    %v209 = vpack.c.b16 %v206, %v205
    %v210 = vpack.c.b16 %v208, %v207
    %vm213 = vcmask 261120
    %v215 = vsel %vm213, %v193, 0
    %v218 = vsel %vm213, %v194, 0
    %v221 = vsel %vm213, %v195, 0
    %v224 = vsel %vm213, %v196, 0
    %v227 = vsel %vm213, %v197, 0
    %v230 = vsel %vm213, %v198, 0
    %v233 = vsel %vm213, %v199, 0
    %v236 = vsel %vm213, %v200, 0
    %238 = vmatpush.bf16.msra.mxu0 0
    %239 = vmatpush.bf16.msra.mxu0 0
    %240 = vmatpush.bf16.msra.mxu0 0
    %241 = vmatpush.bf16.msra.mxu0 0
    %242 = vmatpush.bf16.msra.mxu0 0
    %243 = vmatpush.bf16.msra.mxu0 0
    %244 = vmatpush.bf16.msra.mxu0 %v210
    %245 = vmatpush.bf16.msra.mxu0 %v209
    %246 = vmatmul.bf16.gmra.mxu0 %v215
    %v247 = vpop.f32.mrf.mxu0
    %v248 = vadd.f32 %v159, %v247
    %v249 = vpop.f32.mrf.mxu0
    %v250 = vadd.f32 %v159, %v249
    %251 = vmatmul.bf16.gmra.mxu0 %v218
    %v252 = vpop.f32.mrf.mxu0
    %v253 = vadd.f32 %v159, %v252
    %v254 = vpop.f32.mrf.mxu0
    %v255 = vadd.f32 %v159, %v254
    %256 = vmatmul.bf16.gmra.mxu0 %v221
    %v257 = vpop.f32.mrf.mxu0
    %v258 = vadd.f32 %v159, %v257
    %v259 = vpop.f32.mrf.mxu0
    %v260 = vadd.f32 %v159, %v259
    %261 = vmatmul.bf16.gmra.mxu0 %v224
    %v262 = vpop.f32.mrf.mxu0
    %v263 = vadd.f32 %v159, %v262
    %v264 = vpop.f32.mrf.mxu0
    %v265 = vadd.f32 %v159, %v264
    %266 = vmatmul.bf16.gmra.mxu0 %v227
    %v267 = vpop.f32.mrf.mxu0
    %v268 = vadd.f32 %v159, %v267
    %v269 = vpop.f32.mrf.mxu0
    %v270 = vadd.f32 %v159, %v269
    %271 = vmatmul.bf16.gmra.mxu0 %v230
    %v272 = vpop.f32.mrf.mxu0
    %v273 = vadd.f32 %v159, %v272
    %v274 = vpop.f32.mrf.mxu0
    %v275 = vadd.f32 %v159, %v274
    %276 = vmatmul.bf16.gmra.mxu0 %v233
    %v277 = vpop.f32.mrf.mxu0
    %v278 = vadd.f32 %v159, %v277
    %v279 = vpop.f32.mrf.mxu0
    %v280 = vadd.f32 %v159, %v279
    %281 = vmatmul.bf16.gmra.mxu0 %v236
    %v282 = vpop.f32.mrf.mxu0
    %v283 = vadd.f32 %v159, %v282
    %v284 = vpop.f32.mrf.mxu0
    %v285 = vadd.f32 %v159, %v284
    %286 = vdwg.mxu0
    %v287 = vmul.f32 %v248, 0.5
    %v288 = vmul.f32 %v250, 0.5
    %v289 = vmul.f32 %v253, 0.5
    %v290 = vmul.f32 %v255, 0.5
    %v291 = vmul.f32 %v258, 0.5
    %v292 = vmul.f32 %v260, 0.5
    %v293 = vmul.f32 %v263, 0.5
    %v294 = vmul.f32 %v265, 0.5
    %v295 = vmul.f32 %v268, 0.5
    %v296 = vmul.f32 %v270, 0.5
    %v297 = vmul.f32 %v273, 0.5
    %v298 = vmul.f32 %v275, 0.5
    %v299 = vmul.f32 %v278, 0.5
    %v300 = vmul.f32 %v280, 0.5
    %v301 = vmul.f32 %v283, 0.5
    %v302 = vmul.f32 %v285, 0.5
    %v303 = vmul.f32 %v248, %v248
    %v304 = vmul.f32 %v250, %v250
    %v305 = vmul.f32 %v253, %v253
    %v306 = vmul.f32 %v255, %v255
    %v307 = vmul.f32 %v258, %v258
    %v308 = vmul.f32 %v260, %v260
    %v309 = vmul.f32 %v263, %v263
    %v310 = vmul.f32 %v265, %v265
    %v311 = vmul.f32 %v268, %v268
    %v312 = vmul.f32 %v270, %v270
    %v313 = vmul.f32 %v273, %v273
    %v314 = vmul.f32 %v275, %v275
    %v315 = vmul.f32 %v278, %v278
    %v316 = vmul.f32 %v280, %v280
    %v317 = vmul.f32 %v283, %v283
    %v318 = vmul.f32 %v285, %v285
    %v319 = vmul.f32 %v303, %v248
    %v320 = vmul.f32 %v304, %v250
    %v321 = vmul.f32 %v305, %v253
    %v322 = vmul.f32 %v306, %v255
    %v323 = vmul.f32 %v307, %v258
    %v324 = vmul.f32 %v308, %v260
    %v325 = vmul.f32 %v309, %v263
    %v326 = vmul.f32 %v310, %v265
    %v327 = vmul.f32 %v311, %v268
    %v328 = vmul.f32 %v312, %v270
    %v329 = vmul.f32 %v313, %v273
    %v330 = vmul.f32 %v314, %v275
    %v331 = vmul.f32 %v315, %v278
    %v332 = vmul.f32 %v316, %v280
    %v333 = vmul.f32 %v317, %v283
    %v334 = vmul.f32 %v318, %v285
    %v335 = vmul.f32 %v319, 0.044715
    %v336 = vmul.f32 %v320, 0.044715
    %v337 = vmul.f32 %v321, 0.044715
    %v338 = vmul.f32 %v322, 0.044715
    %v339 = vmul.f32 %v323, 0.044715
    %v340 = vmul.f32 %v324, 0.044715
    %v341 = vmul.f32 %v325, 0.044715
    %v342 = vmul.f32 %v326, 0.044715
    %v343 = vmul.f32 %v327, 0.044715
    %v344 = vmul.f32 %v328, 0.044715
    %v345 = vmul.f32 %v329, 0.044715
    %v346 = vmul.f32 %v330, 0.044715
    %v347 = vmul.f32 %v331, 0.044715
    %v348 = vmul.f32 %v332, 0.044715
    %v349 = vmul.f32 %v333, 0.044715
    %v350 = vmul.f32 %v334, 0.044715
    %v351 = vadd.f32 %v248, %v335
    %v352 = vadd.f32 %v250, %v336
    %v353 = vadd.f32 %v253, %v337
    %v354 = vadd.f32 %v255, %v338
    %v355 = vadd.f32 %v258, %v339
    %v356 = vadd.f32 %v260, %v340
    %v357 = vadd.f32 %v263, %v341
    %v358 = vadd.f32 %v265, %v342
    %v359 = vadd.f32 %v268, %v343
    %v360 = vadd.f32 %v270, %v344
    %v361 = vadd.f32 %v273, %v345
    %v362 = vadd.f32 %v275, %v346
    %v363 = vadd.f32 %v278, %v347
    %v364 = vadd.f32 %v280, %v348
    %v365 = vadd.f32 %v283, %v349
    %v366 = vadd.f32 %v285, %v350
    %v367 = vmul.f32 %v351, 0.7978846
    %v368 = vmul.f32 %v352, 0.7978846
    %v369 = vmul.f32 %v353, 0.7978846
    %v370 = vmul.f32 %v354, 0.7978846
    %v371 = vmul.f32 %v355, 0.7978846
    %v372 = vmul.f32 %v356, 0.7978846
    %v373 = vmul.f32 %v357, 0.7978846
    %v374 = vmul.f32 %v358, 0.7978846
    %v375 = vmul.f32 %v359, 0.7978846
    %v376 = vmul.f32 %v360, 0.7978846
    %v377 = vmul.f32 %v361, 0.7978846
    %v378 = vmul.f32 %v362, 0.7978846
    %v379 = vmul.f32 %v363, 0.7978846
    %v380 = vmul.f32 %v364, 0.7978846
    %v381 = vmul.f32 %v365, 0.7978846
    %v382 = vmul.f32 %v366, 0.7978846
    %v383 = vtanh.pop %v367
    %v384 = vtanh.pop %v368
    %v385 = vtanh.pop %v369
    %v386 = vtanh.pop %v370
    %v387 = vtanh.pop %v371
    %v388 = vtanh.pop %v372
    %v389 = vtanh.pop %v373
    %v390 = vtanh.pop %v374
    %v391 = vtanh.pop %v375
    %v392 = vtanh.pop %v376
    %v393 = vtanh.pop %v377
    %v394 = vtanh.pop %v378
    %v395 = vtanh.pop %v379
    %v396 = vtanh.pop %v380
    %v397 = vtanh.pop %v381
    %v398 = vtanh.pop %v382
    %v399 = vadd.f32 %v383, 1.0
    %v400 = vadd.f32 %v384, 1.0
    %v401 = vadd.f32 %v385, 1.0
    %v402 = vadd.f32 %v386, 1.0
    %v403 = vadd.f32 %v387, 1.0
    %v404 = vadd.f32 %v388, 1.0
    %v405 = vadd.f32 %v389, 1.0
    %v406 = vadd.f32 %v390, 1.0
    %v407 = vadd.f32 %v391, 1.0
    %v408 = vadd.f32 %v392, 1.0
    %v409 = vadd.f32 %v393, 1.0
    %v410 = vadd.f32 %v394, 1.0
    %v411 = vadd.f32 %v395, 1.0
    %v412 = vadd.f32 %v396, 1.0
    %v413 = vadd.f32 %v397, 1.0
    %v414 = vadd.f32 %v398, 1.0
    %v415 = vmul.f32 %v287, %v399
    %v416 = vmul.f32 %v288, %v400
    %v417 = vmul.f32 %v289, %v401
    %v418 = vmul.f32 %v290, %v402
    %v419 = vmul.f32 %v291, %v403
    %v420 = vmul.f32 %v292, %v404
    %v421 = vmul.f32 %v293, %v405
    %v422 = vmul.f32 %v294, %v406
    %v423 = vmul.f32 %v295, %v407
    %v424 = vmul.f32 %v296, %v408
    %v425 = vmul.f32 %v297, %v409
    %v426 = vmul.f32 %v298, %v410
    %v427 = vmul.f32 %v299, %v411
    %v428 = vmul.f32 %v300, %v412
    %v429 = vmul.f32 %v301, %v413
    %v430 = vmul.f32 %v302, %v414
    %v431 = vpack.c.bf16 %v416, %v415
    %v432 = vpack.c.bf16 %v418, %v417
    %v433 = vpack.c.bf16 %v420, %v419
    %v434 = vpack.c.bf16 %v422, %v421
    %v435 = vpack.c.bf16 %v424, %v423
    %v436 = vpack.c.bf16 %v426, %v425
    %v437 = vpack.c.bf16 %v428, %v427
    %v438 = vpack.c.bf16 %v430, %v429
    %v439 = vld [vmem:[#allocation2] sm:$0xf]
    %v440 = vld [vmem:[#allocation2 + $0x4] sm:$0xf]
    %v441 = vld [vmem:[#allocation2 + $0x8] sm:$0xf]
    %v442 = vld [vmem:[#allocation2 + $0xc] sm:$0xf]
    %v443 = vld [vmem:[%s4] sm:$0x1]
    %v445 = vperm.slane %v443, 0
    %v451 = vunpack.c.l.b16 %v439
    %v452 = vunpack.c.l.b16 %v440
    %v453 = vunpack.c.l.b16 %v441
    %v454 = vunpack.c.l.b16 %v442
    %v455 = vpack.c.b16 %v452, %v451
    %v456 = vpack.c.b16 %v454, %v453
    %v460 = vsel %vm213, %v431, 0
    %v463 = vsel %vm213, %v432, 0
    %v466 = vsel %vm213, %v433, 0
    %v469 = vsel %vm213, %v434, 0
    %v472 = vsel %vm213, %v435, 0
    %v475 = vsel %vm213, %v436, 0
    %v478 = vsel %vm213, %v437, 0
    %v481 = vsel %vm213, %v438, 0
    %483 = vmatpush.bf16.msra.mxu0 0
    %484 = vmatpush.bf16.msra.mxu0 0
    %485 = vmatpush.bf16.msra.mxu0 0
    %486 = vmatpush.bf16.msra.mxu0 0
    %487 = vmatpush.bf16.msra.mxu0 0
    %488 = vmatpush.bf16.msra.mxu0 0
    %489 = vmatpush.bf16.msra.mxu0 %v456
    %490 = vmatpush.bf16.msra.mxu0 %v455
    %491 = vmatmul.bf16.gmra.mxu0 %v460
    %v492 = vpop.f32.mrf.mxu0
    %v493 = vadd.f32 %v445, %v492
    %v494 = vpop.f32.mrf.mxu0
    %v495 = vadd.f32 %v445, %v494
    %496 = vmatmul.bf16.gmra.mxu0 %v463
    %v497 = vpop.f32.mrf.mxu0
    %v498 = vadd.f32 %v445, %v497
    %v499 = vpop.f32.mrf.mxu0
    %v500 = vadd.f32 %v445, %v499
    %501 = vmatmul.bf16.gmra.mxu0 %v466
    %v502 = vpop.f32.mrf.mxu0
    %v503 = vadd.f32 %v445, %v502
    %v504 = vpop.f32.mrf.mxu0
    %v505 = vadd.f32 %v445, %v504
    %506 = vmatmul.bf16.gmra.mxu0 %v469
    %v507 = vpop.f32.mrf.mxu0
    %v508 = vadd.f32 %v445, %v507
    %v509 = vpop.f32.mrf.mxu0
    %v510 = vadd.f32 %v445, %v509
    %511 = vmatmul.bf16.gmra.mxu0 %v472
    %v512 = vpop.f32.mrf.mxu0
    %v513 = vadd.f32 %v445, %v512
    %v514 = vpop.f32.mrf.mxu0
    %v515 = vadd.f32 %v445, %v514
    %516 = vmatmul.bf16.gmra.mxu0 %v475
    %v517 = vpop.f32.mrf.mxu0
    %v518 = vadd.f32 %v445, %v517
    %v519 = vpop.f32.mrf.mxu0
    %v520 = vadd.f32 %v445, %v519
    %521 = vmatmul.bf16.gmra.mxu0 %v478
    %v522 = vpop.f32.mrf.mxu0
    %v523 = vadd.f32 %v445, %v522
    %v524 = vpop.f32.mrf.mxu0
    %v525 = vadd.f32 %v445, %v524
    %526 = vmatmul.bf16.gmra.mxu0 %v481
    %v527 = vpop.f32.mrf.mxu0
    %v528 = vadd.f32 %v445, %v527
    %v529 = vpop.f32.mrf.mxu0
    %v530 = vadd.f32 %v445, %v529
    %531 = vdwg.mxu0
    %v532 = vadd.f32 %v493, %v137
    %v533 = vadd.f32 %v495, %v138
    %v534 = vadd.f32 %v498, %v139
    %v535 = vadd.f32 %v500, %v140
    %v536 = vadd.f32 %v503, %v141
    %v537 = vadd.f32 %v505, %v142
    %v538 = vadd.f32 %v508, %v143
    %v539 = vadd.f32 %v510, %v144
    %v540 = vadd.f32 %v513, %v145
    %v541 = vadd.f32 %v515, %v146
    %v542 = vadd.f32 %v518, %v147
    %v543 = vadd.f32 %v520, %v148
    %v544 = vadd.f32 %v523, %v149
    %v545 = vadd.f32 %v525, %v150
    %v546 = vadd.f32 %v528, %v151
    %v547 = vadd.f32 %v530, %v152
    %v548 = vmul.f32 %v532, 0.5
    %v549 = vmul.f32 %v533, 0.5
    %v550 = vmul.f32 %v534, 0.5
    %v551 = vmul.f32 %v535, 0.5
    %v552 = vmul.f32 %v536, 0.5
    %v553 = vmul.f32 %v537, 0.5
    %v554 = vmul.f32 %v538, 0.5
    %v555 = vmul.f32 %v539, 0.5
    %v556 = vmul.f32 %v540, 0.5
    %v557 = vmul.f32 %v541, 0.5
    %v558 = vmul.f32 %v542, 0.5
    %v559 = vmul.f32 %v543, 0.5
    %v560 = vmul.f32 %v544, 0.5
    %v561 = vmul.f32 %v545, 0.5
    %v562 = vmul.f32 %v546, 0.5
    %v563 = vmul.f32 %v547, 0.5
    %v564 = vmul.f32 %v532, %v532
    %v565 = vmul.f32 %v533, %v533
    %v566 = vmul.f32 %v534, %v534
    %v567 = vmul.f32 %v535, %v535
    %v568 = vmul.f32 %v536, %v536
    %v569 = vmul.f32 %v537, %v537
    %v570 = vmul.f32 %v538, %v538
    %v571 = vmul.f32 %v539, %v539
    %v572 = vmul.f32 %v540, %v540
    %v573 = vmul.f32 %v541, %v541
    %v574 = vmul.f32 %v542, %v542
    %v575 = vmul.f32 %v543, %v543
    %v576 = vmul.f32 %v544, %v544
    %v577 = vmul.f32 %v545, %v545
    %v578 = vmul.f32 %v546, %v546
    %v579 = vmul.f32 %v547, %v547
    %v580 = vmul.f32 %v564, %v532
    %v581 = vmul.f32 %v565, %v533
    %v582 = vmul.f32 %v566, %v534
    %v583 = vmul.f32 %v567, %v535
    %v584 = vmul.f32 %v568, %v536
    %v585 = vmul.f32 %v569, %v537
    %v586 = vmul.f32 %v570, %v538
    %v587 = vmul.f32 %v571, %v539
    %v588 = vmul.f32 %v572, %v540
    %v589 = vmul.f32 %v573, %v541
    %v590 = vmul.f32 %v574, %v542
    %v591 = vmul.f32 %v575, %v543
    %v592 = vmul.f32 %v576, %v544
    %v593 = vmul.f32 %v577, %v545
    %v594 = vmul.f32 %v578, %v546
    %v595 = vmul.f32 %v579, %v547
    %v596 = vmul.f32 %v580, 0.044715
    %v597 = vmul.f32 %v581, 0.044715
    %v598 = vmul.f32 %v582, 0.044715
    %v599 = vmul.f32 %v583, 0.044715
    %v600 = vmul.f32 %v584, 0.044715
    %v601 = vmul.f32 %v585, 0.044715
    %v602 = vmul.f32 %v586, 0.044715
    %v603 = vmul.f32 %v587, 0.044715
    %v604 = vmul.f32 %v588, 0.044715
    %v605 = vmul.f32 %v589, 0.044715
    %v606 = vmul.f32 %v590, 0.044715
    %v607 = vmul.f32 %v591, 0.044715
    %v608 = vmul.f32 %v592, 0.044715
    %v609 = vmul.f32 %v593, 0.044715
    %v610 = vmul.f32 %v594, 0.044715
    %v611 = vmul.f32 %v595, 0.044715
    %v612 = vadd.f32 %v532, %v596
    %v613 = vadd.f32 %v533, %v597
    %v614 = vadd.f32 %v534, %v598
    %v615 = vadd.f32 %v535, %v599
    %v616 = vadd.f32 %v536, %v600
    %v617 = vadd.f32 %v537, %v601
    %v618 = vadd.f32 %v538, %v602
    %v619 = vadd.f32 %v539, %v603
    %v620 = vadd.f32 %v540, %v604
    %v621 = vadd.f32 %v541, %v605
    %v622 = vadd.f32 %v542, %v606
    %v623 = vadd.f32 %v543, %v607
    %v624 = vadd.f32 %v544, %v608
    %v625 = vadd.f32 %v545, %v609
    %v626 = vadd.f32 %v546, %v610
    %v627 = vadd.f32 %v547, %v611
    %v628 = vmul.f32 %v612, 0.7978846
    %v629 = vmul.f32 %v613, 0.7978846
    %v630 = vmul.f32 %v614, 0.7978846
    %v631 = vmul.f32 %v615, 0.7978846
    %v632 = vmul.f32 %v616, 0.7978846
    %v633 = vmul.f32 %v617, 0.7978846
    %v634 = vmul.f32 %v618, 0.7978846
    %v635 = vmul.f32 %v619, 0.7978846
    %v636 = vmul.f32 %v620, 0.7978846
    %v637 = vmul.f32 %v621, 0.7978846
    %v638 = vmul.f32 %v622, 0.7978846
    %v639 = vmul.f32 %v623, 0.7978846
    %v640 = vmul.f32 %v624, 0.7978846
    %v641 = vmul.f32 %v625, 0.7978846
    %v642 = vmul.f32 %v626, 0.7978846
    %v643 = vmul.f32 %v627, 0.7978846
    %v644 = vtanh.pop %v628
    %v645 = vtanh.pop %v629
    %v646 = vtanh.pop %v630
    %v647 = vtanh.pop %v631
    %v648 = vtanh.pop %v632
    %v649 = vtanh.pop %v633
    %v650 = vtanh.pop %v634
    %v651 = vtanh.pop %v635
    %v652 = vtanh.pop %v636
    %v653 = vtanh.pop %v637
    %v654 = vtanh.pop %v638
    %v655 = vtanh.pop %v639
    %v656 = vtanh.pop %v640
    %v657 = vtanh.pop %v641
    %v658 = vtanh.pop %v642
    %v659 = vtanh.pop %v643
    %v660 = vadd.f32 %v644, 1.0
    %v661 = vadd.f32 %v645, 1.0
    %v662 = vadd.f32 %v646, 1.0
    %v663 = vadd.f32 %v647, 1.0
    %v664 = vadd.f32 %v648, 1.0
    %v665 = vadd.f32 %v649, 1.0
    %v666 = vadd.f32 %v650, 1.0
    %v667 = vadd.f32 %v651, 1.0
    %v668 = vadd.f32 %v652, 1.0
    %v669 = vadd.f32 %v653, 1.0
    %v670 = vadd.f32 %v654, 1.0
    %v671 = vadd.f32 %v655, 1.0
    %v672 = vadd.f32 %v656, 1.0
    %v673 = vadd.f32 %v657, 1.0
    %v674 = vadd.f32 %v658, 1.0
    %v675 = vadd.f32 %v659, 1.0
    %v676 = vmul.f32 %v548, %v660
    %v677 = vmul.f32 %v549, %v661
    %v678 = vmul.f32 %v550, %v662
    %v679 = vmul.f32 %v551, %v663
    %v680 = vmul.f32 %v552, %v664
    %v681 = vmul.f32 %v553, %v665
    %v682 = vmul.f32 %v554, %v666
    %v683 = vmul.f32 %v555, %v667
    %v684 = vmul.f32 %v556, %v668
    %v685 = vmul.f32 %v557, %v669
    %v686 = vmul.f32 %v558, %v670
    %v687 = vmul.f32 %v559, %v671
    %v688 = vmul.f32 %v560, %v672
    %v689 = vmul.f32 %v561, %v673
    %v690 = vmul.f32 %v562, %v674
    %v691 = vmul.f32 %v563, %v675
    %v692 = vpack.c.bf16 %v677, %v676
    %v693 = vpack.c.bf16 %v679, %v678
    %v694 = vpack.c.bf16 %v681, %v680
    %v695 = vpack.c.bf16 %v683, %v682
    %v696 = vpack.c.bf16 %v685, %v684
    %v697 = vpack.c.bf16 %v687, %v686
    %v698 = vpack.c.bf16 %v689, %v688
    %v699 = vpack.c.bf16 %v691, %v690
    %v700 = vld [vmem:[%s9] sm:$0x1]
    %v701 = vld [vmem:[%s5] sm:$0xf]
    %v702 = vld [vmem:[%s5 + $0x4] sm:$0xf]
    %v703 = vld [vmem:[%s5 + $0x8] sm:$0xf]
    %v704 = vld [vmem:[%s5 + $0xc] sm:$0xf]
    %v709 = vunpack.c.l.b16 %v701
    %v710 = vunpack.c.l.b16 %v702
    %v711 = vunpack.c.l.b16 %v703
    %v712 = vunpack.c.l.b16 %v704
    %v713 = vpack.c.b16 %v710, %v709
    %v714 = vpack.c.b16 %v712, %v711
    %v718 = vsel %vm213, %v692, 0
    %v721 = vsel %vm213, %v693, 0
    %v724 = vsel %vm213, %v694, 0
    %v727 = vsel %vm213, %v695, 0
    %v730 = vsel %vm213, %v696, 0
    %v733 = vsel %vm213, %v697, 0
    %v736 = vsel %vm213, %v698, 0
    %v739 = vsel %vm213, %v699, 0
    %741 = vmatpush.bf16.msra.mxu0 0
    %742 = vmatpush.bf16.msra.mxu0 0
    %743 = vmatpush.bf16.msra.mxu0 0
    %744 = vmatpush.bf16.msra.mxu0 0
    %745 = vmatpush.bf16.msra.mxu0 0
    %746 = vmatpush.bf16.msra.mxu0 0
    %747 = vmatpush.bf16.msra.mxu0 %v714
    %748 = vmatpush.bf16.msra.mxu0 %v713
    %749 = vmatmul.bf16.gmra.mxu0 %v718
    %v750 = vpop.f32.mrf.mxu0
    %v751 = vadd.f32 0.0, %v750
    %v752 = vpop.f32.mrf.mxu0
    %v753 = vadd.f32 0.0, %v752
    %754 = vmatmul.bf16.gmra.mxu0 %v721
    %v755 = vpop.f32.mrf.mxu0
    %v756 = vadd.f32 0.0, %v755
    %v757 = vpop.f32.mrf.mxu0
    %v758 = vadd.f32 0.0, %v757
    %759 = vmatmul.bf16.gmra.mxu0 %v724
    %v760 = vpop.f32.mrf.mxu0
    %v761 = vadd.f32 0.0, %v760
    %v762 = vpop.f32.mrf.mxu0
    %v763 = vadd.f32 0.0, %v762
    %764 = vmatmul.bf16.gmra.mxu0 %v727
    %v765 = vpop.f32.mrf.mxu0
    %v766 = vadd.f32 0.0, %v765
    %v767 = vpop.f32.mrf.mxu0
    %v768 = vadd.f32 0.0, %v767
    %769 = vmatmul.bf16.gmra.mxu0 %v730
    %v770 = vpop.f32.mrf.mxu0
    %v771 = vadd.f32 0.0, %v770
    %v772 = vpop.f32.mrf.mxu0
    %v773 = vadd.f32 0.0, %v772
    %774 = vmatmul.bf16.gmra.mxu0 %v733
    %v775 = vpop.f32.mrf.mxu0
    %v776 = vadd.f32 0.0, %v775
    %v777 = vpop.f32.mrf.mxu0
    %v778 = vadd.f32 0.0, %v777
    %779 = vmatmul.bf16.gmra.mxu0 %v736
    %v780 = vpop.f32.mrf.mxu0
    %v781 = vadd.f32 0.0, %v780
    %v782 = vpop.f32.mrf.mxu0
    %v783 = vadd.f32 0.0, %v782
    %784 = vmatmul.bf16.gmra.mxu0 %v739
    %v785 = vpop.f32.mrf.mxu0
    %v786 = vadd.f32 0.0, %v785
    %v787 = vpop.f32.mrf.mxu0
    %v788 = vadd.f32 0.0, %v787
    %789 = vdwg.mxu0
    %v790 = vpack.c.bf16 %v751, %v751
    %v791 = vpack.c.bf16 %v753, %v753
    %v792 = vpack.c.bf16 %v756, %v756
    %v793 = vpack.c.bf16 %v758, %v758
    %v794 = vpack.c.bf16 %v761, %v761
    %v795 = vpack.c.bf16 %v763, %v763
    %v796 = vpack.c.bf16 %v766, %v766
    %v797 = vpack.c.bf16 %v768, %v768
    %v798 = vpack.c.bf16 %v771, %v771
    %v799 = vpack.c.bf16 %v773, %v773
    %v800 = vpack.c.bf16 %v776, %v776
    %v801 = vpack.c.bf16 %v778, %v778
    %v802 = vpack.c.bf16 %v781, %v781
    %v803 = vpack.c.bf16 %v783, %v783
    %v804 = vpack.c.bf16 %v786, %v786
    %v805 = vpack.c.bf16 %v788, %v788
    %v806 = vld [vmem:[#allocation5] sm:$0xf]
    %v807 = vld [vmem:[#allocation5 + $0x4] sm:$0xf]
    %v808 = vld [vmem:[#allocation5 + $0x8] sm:$0xf]
    %v809 = vld [vmem:[#allocation5 + $0xc] sm:$0xf]
    %v814 = vunpack.c.l.b16 %v806
    %v815 = vunpack.c.l.b16 %v807
    %v816 = vunpack.c.l.b16 %v808
    %v817 = vunpack.c.l.b16 %v809
    %v818 = vpack.c.b16 %v815, %v814
    %v819 = vpack.c.b16 %v817, %v816
    %822 = vmatpush.bf16.msra.mxu0 0
    %823 = vmatpush.bf16.msra.mxu0 0
    %824 = vmatpush.bf16.msra.mxu0 0
    %825 = vmatpush.bf16.msra.mxu0 0
    %826 = vmatpush.bf16.msra.mxu0 0
    %827 = vmatpush.bf16.msra.mxu0 0
    %828 = vmatpush.bf16.msra.mxu0 %v819
    %829 = vmatpush.bf16.msra.mxu0 %v818
    %830 = vmatmul.bf16.gmra.mxu0 %v718
    %v831 = vpop.f32.mrf.mxu0
    %v832 = vadd.f32 0.0, %v831
    %v833 = vpop.f32.mrf.mxu0
    %v834 = vadd.f32 0.0, %v833
    %835 = vmatmul.bf16.gmra.mxu0 %v721
    %v836 = vpop.f32.mrf.mxu0
    %v837 = vadd.f32 0.0, %v836
    %v838 = vpop.f32.mrf.mxu0
    %v839 = vadd.f32 0.0, %v838
    %840 = vmatmul.bf16.gmra.mxu0 %v724
    %v841 = vpop.f32.mrf.mxu0
    %v842 = vadd.f32 0.0, %v841
    %v843 = vpop.f32.mrf.mxu0
    %v844 = vadd.f32 0.0, %v843
    %845 = vmatmul.bf16.gmra.mxu0 %v727
    %v846 = vpop.f32.mrf.mxu0
    %v847 = vadd.f32 0.0, %v846
    %v848 = vpop.f32.mrf.mxu0
    %v849 = vadd.f32 0.0, %v848
    %850 = vmatmul.bf16.gmra.mxu0 %v730
    %v851 = vpop.f32.mrf.mxu0
    %v852 = vadd.f32 0.0, %v851
    %v853 = vpop.f32.mrf.mxu0
    %v854 = vadd.f32 0.0, %v853
    %855 = vmatmul.bf16.gmra.mxu0 %v733
    %v856 = vpop.f32.mrf.mxu0
    %v857 = vadd.f32 0.0, %v856
    %v858 = vpop.f32.mrf.mxu0
    %v859 = vadd.f32 0.0, %v858
    %860 = vmatmul.bf16.gmra.mxu0 %v736
    %v861 = vpop.f32.mrf.mxu0
    %v862 = vadd.f32 0.0, %v861
    %v863 = vpop.f32.mrf.mxu0
    %v864 = vadd.f32 0.0, %v863
    %865 = vmatmul.bf16.gmra.mxu0 %v739
    %v866 = vpop.f32.mrf.mxu0
    %v867 = vadd.f32 0.0, %v866
    %v868 = vpop.f32.mrf.mxu0
    %v869 = vadd.f32 0.0, %v868
    %870 = vdwg.mxu0
    %v871 = vpack.c.bf16 %v832, %v832
    %v872 = vpack.c.bf16 %v834, %v834
    %v873 = vpack.c.bf16 %v837, %v837
    %v874 = vpack.c.bf16 %v839, %v839
    %v875 = vpack.c.bf16 %v842, %v842
    %v876 = vpack.c.bf16 %v844, %v844
    %v877 = vpack.c.bf16 %v847, %v847
    %v878 = vpack.c.bf16 %v849, %v849
    %v879 = vpack.c.bf16 %v852, %v852
    %v880 = vpack.c.bf16 %v854, %v854
    %v881 = vpack.c.bf16 %v857, %v857
    %v882 = vpack.c.bf16 %v859, %v859
    %v883 = vpack.c.bf16 %v862, %v862
    %v884 = vpack.c.bf16 %v864, %v864
    %v885 = vpack.c.bf16 %v867, %v867
    %v886 = vpack.c.bf16 %v869, %v869
    %v887 = vld [vmem:[#allocation7] sm:$0xf]
    %v888 = vld [vmem:[#allocation7 + $0x4] sm:$0xf]
    %v889 = vld [vmem:[#allocation7 + $0x8] sm:$0xf]
    %v890 = vld [vmem:[#allocation7 + $0xc] sm:$0xf]
    %v895 = vunpack.c.l.b16 %v887
    %v896 = vunpack.c.l.b16 %v888
    %v897 = vunpack.c.l.b16 %v889
    %v898 = vunpack.c.l.b16 %v890
    %v899 = vpack.c.b16 %v896, %v895
    %v900 = vpack.c.b16 %v898, %v897
    %903 = vmatpush.bf16.msra.mxu0 0
    %904 = vmatpush.bf16.msra.mxu0 0
    %905 = vmatpush.bf16.msra.mxu0 0
    %906 = vmatpush.bf16.msra.mxu0 0
    %907 = vmatpush.bf16.msra.mxu0 0
    %908 = vmatpush.bf16.msra.mxu0 0
    %909 = vmatpush.bf16.msra.mxu0 %v900
    %910 = vmatpush.bf16.msra.mxu0 %v899
    %911 = vmatmul.bf16.gmra.mxu0 %v718
    %v912 = vpop.f32.mrf.mxu0
    %v913 = vadd.f32 0.0, %v912
    %v914 = vpop.f32.mrf.mxu0
    %v915 = vadd.f32 0.0, %v914
    %916 = vmatmul.bf16.gmra.mxu0 %v721
    %v917 = vpop.f32.mrf.mxu0
    %v918 = vadd.f32 0.0, %v917
    %v919 = vpop.f32.mrf.mxu0
    %v920 = vadd.f32 0.0, %v919
    %921 = vmatmul.bf16.gmra.mxu0 %v724
    %v922 = vpop.f32.mrf.mxu0
    %v923 = vadd.f32 0.0, %v922
    %v924 = vpop.f32.mrf.mxu0
    %v925 = vadd.f32 0.0, %v924
    %926 = vmatmul.bf16.gmra.mxu0 %v727
    %v927 = vpop.f32.mrf.mxu0
    %v928 = vadd.f32 0.0, %v927
    %v929 = vpop.f32.mrf.mxu0
    %v930 = vadd.f32 0.0, %v929
    %931 = vmatmul.bf16.gmra.mxu0 %v730
    %v932 = vpop.f32.mrf.mxu0
    %v933 = vadd.f32 0.0, %v932
    %v934 = vpop.f32.mrf.mxu0
    %v935 = vadd.f32 0.0, %v934
    %936 = vmatmul.bf16.gmra.mxu0 %v733
    %v937 = vpop.f32.mrf.mxu0
    %v938 = vadd.f32 0.0, %v937
    %v939 = vpop.f32.mrf.mxu0
    %v940 = vadd.f32 0.0, %v939
    %941 = vmatmul.bf16.gmra.mxu0 %v736
    %v942 = vpop.f32.mrf.mxu0
    %v943 = vadd.f32 0.0, %v942
    %v944 = vpop.f32.mrf.mxu0
    %v945 = vadd.f32 0.0, %v944
    %946 = vmatmul.bf16.gmra.mxu0 %v739
    %v947 = vpop.f32.mrf.mxu0
    %v948 = vadd.f32 0.0, %v947
    %v949 = vpop.f32.mrf.mxu0
    %v950 = vadd.f32 0.0, %v949
    %951 = vdwg.mxu0
    %v952 = vpack.c.bf16 %v913, %v913
    %v953 = vpack.c.bf16 %v915, %v915
    %v954 = vpack.c.bf16 %v918, %v918
    %v955 = vpack.c.bf16 %v920, %v920
    %v956 = vpack.c.bf16 %v923, %v923
    %v957 = vpack.c.bf16 %v925, %v925
    %v958 = vpack.c.bf16 %v928, %v928
    %v959 = vpack.c.bf16 %v930, %v930
    %v960 = vpack.c.bf16 %v933, %v933
    %v961 = vpack.c.bf16 %v935, %v935
    %v962 = vpack.c.bf16 %v938, %v938
    %v963 = vpack.c.bf16 %v940, %v940
    %v964 = vpack.c.bf16 %v943, %v943
    %v965 = vpack.c.bf16 %v945, %v945
    %v966 = vpack.c.bf16 %v948, %v948
    %v967 = vpack.c.bf16 %v950, %v950
    %v970 = vunpack.c.l.b16 %v790
    %v971 = vunpack.c.l.b16 %v791
    %v972 = vpack.c.b16 %v971, %v970
    %v975 = vunpack.c.l.b16 %v871
    %v976 = vunpack.c.l.b16 %v872
    %v977 = vpack.c.b16 %v976, %v975
    %v979 = vsel %vm213, %v972, 0
    %v982 = vsel %vm213, %v977, 0
    %984 = vmatpush.bf16.xpose.msra.mxu0 0
    %985 = vmatpush.bf16.xpose.msra.mxu0 0
    %986 = vmatpush.bf16.xpose.msra.mxu0 0
    %987 = vmatpush.bf16.xpose.msra.mxu0 0
    %988 = vmatpush.bf16.xpose.msra.mxu0 0
    %989 = vmatpush.bf16.xpose.msra.mxu0 0
    %990 = vmatpush.bf16.xpose.msra.mxu0 0
    %991 = vmatpush.bf16.xpose.msra.mxu0 %v982
    %992 = vmatmul.bf16.gmra.mxu0 %v979
    %v993 = vpop.f32.mrf.mxu0
    %v994 = vadd.f32 0.0, %v993
    %v995 = vpop.f32.mrf.mxu0
    %v996 = vadd.f32 0.0, %v995
    %997 = vdwg.mxu0
    %v1000 = vunpack.c.l.b16 %v792
    %v1001 = vunpack.c.l.b16 %v793
    %v1002 = vpack.c.b16 %v1001, %v1000
    %v1005 = vunpack.c.l.b16 %v873
    %v1006 = vunpack.c.l.b16 %v874
    %v1007 = vpack.c.b16 %v1006, %v1005
    %v1009 = vsel %vm213, %v1002, 0
    %v1012 = vsel %vm213, %v1007, 0
    %1014 = vmatpush.bf16.xpose.msra.mxu0 0
    %1015 = vmatpush.bf16.xpose.msra.mxu0 0
    %1016 = vmatpush.bf16.xpose.msra.mxu0 0
    %1017 = vmatpush.bf16.xpose.msra.mxu0 0
    %1018 = vmatpush.bf16.xpose.msra.mxu0 0
    %1019 = vmatpush.bf16.xpose.msra.mxu0 0
    %1020 = vmatpush.bf16.xpose.msra.mxu0 0
    %1021 = vmatpush.bf16.xpose.msra.mxu0 %v1012
    %1022 = vmatmul.bf16.gmra.mxu0 %v1009
    %v1023 = vpop.f32.mrf.mxu0
    %v1024 = vadd.f32 0.0, %v1023
    %v1025 = vpop.f32.mrf.mxu0
    %v1026 = vadd.f32 0.0, %v1025
    %1027 = vdwg.mxu0
    %v1030 = vunpack.c.l.b16 %v794
    %v1031 = vunpack.c.l.b16 %v795
    %v1032 = vpack.c.b16 %v1031, %v1030
    %v1035 = vunpack.c.l.b16 %v875
    %v1036 = vunpack.c.l.b16 %v876
    %v1037 = vpack.c.b16 %v1036, %v1035
    %v1039 = vsel %vm213, %v1032, 0
    %v1042 = vsel %vm213, %v1037, 0
    %1044 = vmatpush.bf16.xpose.msra.mxu0 0
    %1045 = vmatpush.bf16.xpose.msra.mxu0 0
    %1046 = vmatpush.bf16.xpose.msra.mxu0 0
    %1047 = vmatpush.bf16.xpose.msra.mxu0 0
    %1048 = vmatpush.bf16.xpose.msra.mxu0 0
    %1049 = vmatpush.bf16.xpose.msra.mxu0 0
    %1050 = vmatpush.bf16.xpose.msra.mxu0 0
    %1051 = vmatpush.bf16.xpose.msra.mxu0 %v1042
    %1052 = vmatmul.bf16.gmra.mxu0 %v1039
    %v1053 = vpop.f32.mrf.mxu0
    %v1054 = vadd.f32 0.0, %v1053
    %v1055 = vpop.f32.mrf.mxu0
    %v1056 = vadd.f32 0.0, %v1055
    %1057 = vdwg.mxu0
    %v1060 = vunpack.c.l.b16 %v796
    %v1061 = vunpack.c.l.b16 %v797
    %v1062 = vpack.c.b16 %v1061, %v1060
    %v1065 = vunpack.c.l.b16 %v877
    %v1066 = vunpack.c.l.b16 %v878
    %v1067 = vpack.c.b16 %v1066, %v1065
    %v1069 = vsel %vm213, %v1062, 0
    %v1072 = vsel %vm213, %v1067, 0
    %1074 = vmatpush.bf16.xpose.msra.mxu0 0
    %1075 = vmatpush.bf16.xpose.msra.mxu0 0
    %1076 = vmatpush.bf16.xpose.msra.mxu0 0
    %1077 = vmatpush.bf16.xpose.msra.mxu0 0
    %1078 = vmatpush.bf16.xpose.msra.mxu0 0
    %1079 = vmatpush.bf16.xpose.msra.mxu0 0
    %1080 = vmatpush.bf16.xpose.msra.mxu0 0
    %1081 = vmatpush.bf16.xpose.msra.mxu0 %v1072
    %1082 = vmatmul.bf16.gmra.mxu0 %v1069
    %v1083 = vpop.f32.mrf.mxu0
    %v1084 = vadd.f32 0.0, %v1083
    %v1085 = vpop.f32.mrf.mxu0
    %v1086 = vadd.f32 0.0, %v1085
    %1087 = vdwg.mxu0
    %v1090 = vunpack.c.l.b16 %v798
    %v1091 = vunpack.c.l.b16 %v799
    %v1092 = vpack.c.b16 %v1091, %v1090
    %v1095 = vunpack.c.l.b16 %v879
    %v1096 = vunpack.c.l.b16 %v880
    %v1097 = vpack.c.b16 %v1096, %v1095
    %v1099 = vsel %vm213, %v1092, 0
    %v1102 = vsel %vm213, %v1097, 0
    %1104 = vmatpush.bf16.xpose.msra.mxu0 0
    %1105 = vmatpush.bf16.xpose.msra.mxu0 0
    %1106 = vmatpush.bf16.xpose.msra.mxu0 0
    %1107 = vmatpush.bf16.xpose.msra.mxu0 0
    %1108 = vmatpush.bf16.xpose.msra.mxu0 0
    %1109 = vmatpush.bf16.xpose.msra.mxu0 0
    %1110 = vmatpush.bf16.xpose.msra.mxu0 0
    %1111 = vmatpush.bf16.xpose.msra.mxu0 %v1102
    %1112 = vmatmul.bf16.gmra.mxu0 %v1099
    %v1113 = vpop.f32.mrf.mxu0
    %v1114 = vadd.f32 0.0, %v1113
    %v1115 = vpop.f32.mrf.mxu0
    %v1116 = vadd.f32 0.0, %v1115
    %1117 = vdwg.mxu0
    %v1120 = vunpack.c.l.b16 %v800
    %v1121 = vunpack.c.l.b16 %v801
    %v1122 = vpack.c.b16 %v1121, %v1120
    %v1125 = vunpack.c.l.b16 %v881
    %v1126 = vunpack.c.l.b16 %v882
    %v1127 = vpack.c.b16 %v1126, %v1125
    %v1129 = vsel %vm213, %v1122, 0
    %v1132 = vsel %vm213, %v1127, 0
    %1134 = vmatpush.bf16.xpose.msra.mxu0 0
    %1135 = vmatpush.bf16.xpose.msra.mxu0 0
    %1136 = vmatpush.bf16.xpose.msra.mxu0 0
    %1137 = vmatpush.bf16.xpose.msra.mxu0 0
    %1138 = vmatpush.bf16.xpose.msra.mxu0 0
    %1139 = vmatpush.bf16.xpose.msra.mxu0 0
    %1140 = vmatpush.bf16.xpose.msra.mxu0 0
    %1141 = vmatpush.bf16.xpose.msra.mxu0 %v1132
    %1142 = vmatmul.bf16.gmra.mxu0 %v1129
    %v1143 = vpop.f32.mrf.mxu0
    %v1144 = vadd.f32 0.0, %v1143
    %v1145 = vpop.f32.mrf.mxu0
    %v1146 = vadd.f32 0.0, %v1145
    %1147 = vdwg.mxu0
    %v1150 = vunpack.c.l.b16 %v802
    %v1151 = vunpack.c.l.b16 %v803
    %v1152 = vpack.c.b16 %v1151, %v1150
    %v1155 = vunpack.c.l.b16 %v883
    %v1156 = vunpack.c.l.b16 %v884
    %v1157 = vpack.c.b16 %v1156, %v1155
    %v1159 = vsel %vm213, %v1152, 0
    %v1162 = vsel %vm213, %v1157, 0
    %1164 = vmatpush.bf16.xpose.msra.mxu0 0
    %1165 = vmatpush.bf16.xpose.msra.mxu0 0
    %1166 = vmatpush.bf16.xpose.msra.mxu0 0
    %1167 = vmatpush.bf16.xpose.msra.mxu0 0
    %1168 = vmatpush.bf16.xpose.msra.mxu0 0
    %1169 = vmatpush.bf16.xpose.msra.mxu0 0
    %1170 = vmatpush.bf16.xpose.msra.mxu0 0
    %1171 = vmatpush.bf16.xpose.msra.mxu0 %v1162
    %1172 = vmatmul.bf16.gmra.mxu0 %v1159
    %v1173 = vpop.f32.mrf.mxu0
    %v1174 = vadd.f32 0.0, %v1173
    %v1175 = vpop.f32.mrf.mxu0
    %v1176 = vadd.f32 0.0, %v1175
    %1177 = vdwg.mxu0
    %v1180 = vunpack.c.l.b16 %v804
    %v1181 = vunpack.c.l.b16 %v805
    %v1182 = vpack.c.b16 %v1181, %v1180
    %v1185 = vunpack.c.l.b16 %v885
    %v1186 = vunpack.c.l.b16 %v886
    %v1187 = vpack.c.b16 %v1186, %v1185
    %v1189 = vsel %vm213, %v1182, 0
    %v1192 = vsel %vm213, %v1187, 0
    %1194 = vmatpush.bf16.xpose.msra.mxu0 0
    %1195 = vmatpush.bf16.xpose.msra.mxu0 0
    %1196 = vmatpush.bf16.xpose.msra.mxu0 0
    %1197 = vmatpush.bf16.xpose.msra.mxu0 0
    %1198 = vmatpush.bf16.xpose.msra.mxu0 0
    %1199 = vmatpush.bf16.xpose.msra.mxu0 0
    %1200 = vmatpush.bf16.xpose.msra.mxu0 0
    %1201 = vmatpush.bf16.xpose.msra.mxu0 %v1192
    %1202 = vmatmul.bf16.gmra.mxu0 %v1189
    %v1203 = vpop.f32.mrf.mxu0
    %v1204 = vadd.f32 0.0, %v1203
    %v1205 = vpop.f32.mrf.mxu0
    %v1206 = vadd.f32 0.0, %v1205
    %1207 = vdwg.mxu0
    %vm1208 = vcmask 130048
    %v1209 = vsel %vm1208, %v994, -inf
    %1210 = vmax.xlane.f32.xlu0 %v1209
    %v1211 = vpop.xlane.xlu0 %1210
    %v1212 = vsel %vm1208, %v996, -inf
    %1213 = vmax.xlane.f32.xlu0 %v1212
    %v1214 = vpop.xlane.xlu0 %1213
    %v1215 = vsel %vm1208, %v1024, -inf
    %1216 = vmax.xlane.f32.xlu0 %v1215
    %v1217 = vpop.xlane.xlu0 %1216
    %v1218 = vsel %vm1208, %v1026, -inf
    %1219 = vmax.xlane.f32.xlu0 %v1218
    %v1220 = vpop.xlane.xlu0 %1219
    %v1221 = vsel %vm1208, %v1054, -inf
    %1222 = vmax.xlane.f32.xlu0 %v1221
    %v1223 = vpop.xlane.xlu0 %1222
    %v1224 = vsel %vm1208, %v1056, -inf
    %1225 = vmax.xlane.f32.xlu0 %v1224
    %v1226 = vpop.xlane.xlu0 %1225
    %v1227 = vsel %vm1208, %v1084, -inf
    %1228 = vmax.xlane.f32.xlu0 %v1227
    %v1229 = vpop.xlane.xlu0 %1228
    %v1230 = vsel %vm1208, %v1086, -inf
    %1231 = vmax.xlane.f32.xlu0 %v1230
    %v1232 = vpop.xlane.xlu0 %1231
    %v1233 = vsel %vm1208, %v1114, -inf
    %1234 = vmax.xlane.f32.xlu0 %v1233
    %v1235 = vpop.xlane.xlu0 %1234
    %v1236 = vsel %vm1208, %v1116, -inf
    %1237 = vmax.xlane.f32.xlu0 %v1236
    %v1238 = vpop.xlane.xlu0 %1237
    %v1239 = vsel %vm1208, %v1144, -inf
    %1240 = vmax.xlane.f32.xlu0 %v1239
    %v1241 = vpop.xlane.xlu0 %1240
    %v1242 = vsel %vm1208, %v1146, -inf
    %1243 = vmax.xlane.f32.xlu0 %v1242
    %v1244 = vpop.xlane.xlu0 %1243
    %v1245 = vsel %vm1208, %v1174, -inf
    %1246 = vmax.xlane.f32.xlu0 %v1245
    %v1247 = vpop.xlane.xlu0 %1246
    %v1248 = vsel %vm1208, %v1176, -inf
    %1249 = vmax.xlane.f32.xlu0 %v1248
    %v1250 = vpop.xlane.xlu0 %1249
    %v1251 = vsel %vm1208, %v1204, -inf
    %1252 = vmax.xlane.f32.xlu0 %v1251
    %v1253 = vpop.xlane.xlu0 %1252
    %v1254 = vsel %vm1208, %v1206, -inf
    %1255 = vmax.xlane.f32.xlu0 %v1254
    %v1256 = vpop.xlane.xlu0 %1255
    %v1257 = vsub.f32 %v994, %v1211
    %v1258 = vsub.f32 %v996, %v1214
    %v1259 = vsub.f32 %v1024, %v1217
    %v1260 = vsub.f32 %v1026, %v1220
    %v1261 = vsub.f32 %v1054, %v1223
    %v1262 = vsub.f32 %v1056, %v1226
    %v1263 = vsub.f32 %v1084, %v1229
    %v1264 = vsub.f32 %v1086, %v1232
    %v1265 = vsub.f32 %v1114, %v1235
    %v1266 = vsub.f32 %v1116, %v1238
    %v1267 = vsub.f32 %v1144, %v1241
    %v1268 = vsub.f32 %v1146, %v1244
    %v1269 = vsub.f32 %v1174, %v1247
    %v1270 = vsub.f32 %v1176, %v1250
    %v1271 = vsub.f32 %v1204, %v1253
    %v1272 = vsub.f32 %v1206, %v1256
    %v1273 = vmul.f32 %v1257, 1.442695
    %v1274 = vpow.pop %v1273
    %v1275 = vmul.f32 %v1258, 1.442695
    %v1276 = vpow.pop %v1275
    %v1277 = vmul.f32 %v1259, 1.442695
    %v1278 = vpow.pop %v1277
    %v1279 = vmul.f32 %v1260, 1.442695
    %v1280 = vpow.pop %v1279
    %v1281 = vmul.f32 %v1261, 1.442695
    %v1282 = vpow.pop %v1281
    %v1283 = vmul.f32 %v1262, 1.442695
    %v1284 = vpow.pop %v1283
    %v1285 = vmul.f32 %v1263, 1.442695
    %v1286 = vpow.pop %v1285
    %v1287 = vmul.f32 %v1264, 1.442695
    %v1288 = vpow.pop %v1287
    %v1289 = vmul.f32 %v1265, 1.442695
    %v1290 = vpow.pop %v1289
    %v1291 = vmul.f32 %v1266, 1.442695
    %v1292 = vpow.pop %v1291
    %v1293 = vmul.f32 %v1267, 1.442695
    %v1294 = vpow.pop %v1293
    %v1295 = vmul.f32 %v1268, 1.442695
    %v1296 = vpow.pop %v1295
    %v1297 = vmul.f32 %v1269, 1.442695
    %v1298 = vpow.pop %v1297
    %v1299 = vmul.f32 %v1270, 1.442695
    %v1300 = vpow.pop %v1299
    %v1301 = vmul.f32 %v1271, 1.442695
    %v1302 = vpow.pop %v1301
    %v1303 = vmul.f32 %v1272, 1.442695
    %v1304 = vpow.pop %v1303
    %v1305 = vsel %vm1208, %v1274, 0.0
    %1306 = vadd.xlane.f32.xlu0 %v1305
    %v1307 = vpop.xlane.xlu0 %1306
    %v1308 = vsel %vm1208, %v1276, 0.0
    %1309 = vadd.xlane.f32.xlu0 %v1308
    %v1310 = vpop.xlane.xlu0 %1309
    %v1311 = vsel %vm1208, %v1278, 0.0
    %1312 = vadd.xlane.f32.xlu0 %v1311
    %v1313 = vpop.xlane.xlu0 %1312
    %v1314 = vsel %vm1208, %v1280, 0.0
    %1315 = vadd.xlane.f32.xlu0 %v1314
    %v1316 = vpop.xlane.xlu0 %1315
    %v1317 = vsel %vm1208, %v1282, 0.0
    %1318 = vadd.xlane.f32.xlu0 %v1317
    %v1319 = vpop.xlane.xlu0 %1318
    %v1320 = vsel %vm1208, %v1284, 0.0
    %1321 = vadd.xlane.f32.xlu0 %v1320
    %v1322 = vpop.xlane.xlu0 %1321
    %v1323 = vsel %vm1208, %v1286, 0.0
    %1324 = vadd.xlane.f32.xlu0 %v1323
    %v1325 = vpop.xlane.xlu0 %1324
    %v1326 = vsel %vm1208, %v1288, 0.0
    %1327 = vadd.xlane.f32.xlu0 %v1326
    %v1328 = vpop.xlane.xlu0 %1327
    %v1329 = vsel %vm1208, %v1290, 0.0
    %1330 = vadd.xlane.f32.xlu0 %v1329
    %v1331 = vpop.xlane.xlu0 %1330
    %v1332 = vsel %vm1208, %v1292, 0.0
    %1333 = vadd.xlane.f32.xlu0 %v1332
    %v1334 = vpop.xlane.xlu0 %1333
    %v1335 = vsel %vm1208, %v1294, 0.0
    %1336 = vadd.xlane.f32.xlu0 %v1335
    %v1337 = vpop.xlane.xlu0 %1336
    %v1338 = vsel %vm1208, %v1296, 0.0
    %1339 = vadd.xlane.f32.xlu0 %v1338
    %v1340 = vpop.xlane.xlu0 %1339
    %v1341 = vsel %vm1208, %v1298, 0.0
    %1342 = vadd.xlane.f32.xlu0 %v1341
    %v1343 = vpop.xlane.xlu0 %1342
    %v1344 = vsel %vm1208, %v1300, 0.0
    %1345 = vadd.xlane.f32.xlu0 %v1344
    %v1346 = vpop.xlane.xlu0 %1345
    %v1347 = vsel %vm1208, %v1302, 0.0
    %1348 = vadd.xlane.f32.xlu0 %v1347
    %v1349 = vpop.xlane.xlu0 %1348
    %v1350 = vsel %vm1208, %v1304, 0.0
    %1351 = vadd.xlane.f32.xlu0 %v1350
    %v1352 = vpop.xlane.xlu0 %1351
    %v1353 = vrcp.pop %v1307
    %v1354 = vrcp.pop %v1310
    %v1355 = vrcp.pop %v1313
    %v1356 = vrcp.pop %v1316
    %v1357 = vrcp.pop %v1319
    %v1358 = vrcp.pop %v1322
    %v1359 = vrcp.pop %v1325
    %v1360 = vrcp.pop %v1328
    %v1361 = vrcp.pop %v1331
    %v1362 = vrcp.pop %v1334
    %v1363 = vrcp.pop %v1337
    %v1364 = vrcp.pop %v1340
    %v1365 = vrcp.pop %v1343
    %v1366 = vrcp.pop %v1346
    %v1367 = vrcp.pop %v1349
    %v1368 = vrcp.pop %v1352
    %v1369 = vmul.f32 %v1274, %v1353
    %v1370 = vmul.f32 %v1276, %v1354
    %v1371 = vmul.f32 %v1278, %v1355
    %v1372 = vmul.f32 %v1280, %v1356
    %v1373 = vmul.f32 %v1282, %v1357
    %v1374 = vmul.f32 %v1284, %v1358
    %v1375 = vmul.f32 %v1286, %v1359
    %v1376 = vmul.f32 %v1288, %v1360
    %v1377 = vmul.f32 %v1290, %v1361
    %v1378 = vmul.f32 %v1292, %v1362
    %v1379 = vmul.f32 %v1294, %v1363
    %v1380 = vmul.f32 %v1296, %v1364
    %v1381 = vmul.f32 %v1298, %v1365
    %v1382 = vmul.f32 %v1300, %v1366
    %v1383 = vmul.f32 %v1302, %v1367
    %v1384 = vmul.f32 %v1304, %v1368
    %v1385 = vpack.c.bf16 %v1369, %v1369
    %v1386 = vpack.c.bf16 %v1370, %v1370
    %v1387 = vpack.c.bf16 %v1371, %v1371
    %v1388 = vpack.c.bf16 %v1372, %v1372
    %v1389 = vpack.c.bf16 %v1373, %v1373
    %v1390 = vpack.c.bf16 %v1374, %v1374
    %v1391 = vpack.c.bf16 %v1375, %v1375
    %v1392 = vpack.c.bf16 %v1376, %v1376
    %v1393 = vpack.c.bf16 %v1377, %v1377
    %v1394 = vpack.c.bf16 %v1378, %v1378
    %v1395 = vpack.c.bf16 %v1379, %v1379
    %v1396 = vpack.c.bf16 %v1380, %v1380
    %v1397 = vpack.c.bf16 %v1381, %v1381
    %v1398 = vpack.c.bf16 %v1382, %v1382
    %v1399 = vpack.c.bf16 %v1383, %v1383
    %v1400 = vpack.c.bf16 %v1384, %v1384
    %v1403 = vunpack.c.l.b16 %v1385
    %v1404 = vunpack.c.l.b16 %v1386
    %v1405 = vpack.c.b16 %v1404, %v1403
    %v1408 = vunpack.c.l.b16 %v952
    %v1409 = vunpack.c.l.b16 %v953
    %v1410 = vpack.c.b16 %v1409, %v1408
    %v1413 = vsel %vm1208, %v1405, 0
    %1415 = vmatpush.bf16.msra.mxu0 0
    %1416 = vmatpush.bf16.msra.mxu0 0
    %1417 = vmatpush.bf16.msra.mxu0 0
    %1418 = vmatpush.bf16.msra.mxu0 0
    %1419 = vmatpush.bf16.msra.mxu0 0
    %1420 = vmatpush.bf16.msra.mxu0 0
    %1421 = vmatpush.bf16.msra.mxu0 0
    %1422 = vmatpush.bf16.msra.mxu0 %v1410
    %1423 = vmatmul.bf16.gmra.mxu0 %v1413
    %v1424 = vpop.f32.mrf.mxu0
    %v1425 = vadd.f32 0.0, %v1424
    %v1426 = vpop.f32.mrf.mxu0
    %v1427 = vadd.f32 0.0, %v1426
    %1428 = vdwg.mxu0
    %v1431 = vunpack.c.l.b16 %v1387
    %v1432 = vunpack.c.l.b16 %v1388
    %v1433 = vpack.c.b16 %v1432, %v1431
    %v1436 = vunpack.c.l.b16 %v954
    %v1437 = vunpack.c.l.b16 %v955
    %v1438 = vpack.c.b16 %v1437, %v1436
    %v1441 = vsel %vm1208, %v1433, 0
    %1443 = vmatpush.bf16.msra.mxu0 0
    %1444 = vmatpush.bf16.msra.mxu0 0
    %1445 = vmatpush.bf16.msra.mxu0 0
    %1446 = vmatpush.bf16.msra.mxu0 0
    %1447 = vmatpush.bf16.msra.mxu0 0
    %1448 = vmatpush.bf16.msra.mxu0 0
    %1449 = vmatpush.bf16.msra.mxu0 0
    %1450 = vmatpush.bf16.msra.mxu0 %v1438
    %1451 = vmatmul.bf16.gmra.mxu0 %v1441
    %v1452 = vpop.f32.mrf.mxu0
    %v1453 = vadd.f32 0.0, %v1452
    %v1454 = vpop.f32.mrf.mxu0
    %v1455 = vadd.f32 0.0, %v1454
    %1456 = vdwg.mxu0
    %v1459 = vunpack.c.l.b16 %v1389
    %v1460 = vunpack.c.l.b16 %v1390
    %v1461 = vpack.c.b16 %v1460, %v1459
    %v1464 = vunpack.c.l.b16 %v956
    %v1465 = vunpack.c.l.b16 %v957
    %v1466 = vpack.c.b16 %v1465, %v1464
    %v1469 = vsel %vm1208, %v1461, 0
    %1471 = vmatpush.bf16.msra.mxu0 0
    %1472 = vmatpush.bf16.msra.mxu0 0
    %1473 = vmatpush.bf16.msra.mxu0 0
    %1474 = vmatpush.bf16.msra.mxu0 0
    %1475 = vmatpush.bf16.msra.mxu0 0
    %1476 = vmatpush.bf16.msra.mxu0 0
    %1477 = vmatpush.bf16.msra.mxu0 0
    %1478 = vmatpush.bf16.msra.mxu0 %v1466
    %1479 = vmatmul.bf16.gmra.mxu0 %v1469
    %v1480 = vpop.f32.mrf.mxu0
    %v1481 = vadd.f32 0.0, %v1480
    %v1482 = vpop.f32.mrf.mxu0
    %v1483 = vadd.f32 0.0, %v1482
    %1484 = vdwg.mxu0
    %v1487 = vunpack.c.l.b16 %v1391
    %v1488 = vunpack.c.l.b16 %v1392
    %v1489 = vpack.c.b16 %v1488, %v1487
    %v1492 = vunpack.c.l.b16 %v958
    %v1493 = vunpack.c.l.b16 %v959
    %v1494 = vpack.c.b16 %v1493, %v1492
    %v1497 = vsel %vm1208, %v1489, 0
    %1499 = vmatpush.bf16.msra.mxu0 0
    %1500 = vmatpush.bf16.msra.mxu0 0
    %1501 = vmatpush.bf16.msra.mxu0 0
    %1502 = vmatpush.bf16.msra.mxu0 0
    %1503 = vmatpush.bf16.msra.mxu0 0
    %1504 = vmatpush.bf16.msra.mxu0 0
    %1505 = vmatpush.bf16.msra.mxu0 0
    %1506 = vmatpush.bf16.msra.mxu0 %v1494
    %1507 = vmatmul.bf16.gmra.mxu0 %v1497
    %v1508 = vpop.f32.mrf.mxu0
    %v1509 = vadd.f32 0.0, %v1508
    %v1510 = vpop.f32.mrf.mxu0
    %v1511 = vadd.f32 0.0, %v1510
    %1512 = vdwg.mxu0
    %v1515 = vunpack.c.l.b16 %v1393
    %v1516 = vunpack.c.l.b16 %v1394
    %v1517 = vpack.c.b16 %v1516, %v1515
    %v1520 = vunpack.c.l.b16 %v960
    %v1521 = vunpack.c.l.b16 %v961
    %v1522 = vpack.c.b16 %v1521, %v1520
    %v1525 = vsel %vm1208, %v1517, 0
    %1527 = vmatpush.bf16.msra.mxu0 0
    %1528 = vmatpush.bf16.msra.mxu0 0
    %1529 = vmatpush.bf16.msra.mxu0 0
    %1530 = vmatpush.bf16.msra.mxu0 0
    %1531 = vmatpush.bf16.msra.mxu0 0
    %1532 = vmatpush.bf16.msra.mxu0 0
    %1533 = vmatpush.bf16.msra.mxu0 0
    %1534 = vmatpush.bf16.msra.mxu0 %v1522
    %1535 = vmatmul.bf16.gmra.mxu0 %v1525
    %v1536 = vpop.f32.mrf.mxu0
    %v1537 = vadd.f32 0.0, %v1536
    %v1538 = vpop.f32.mrf.mxu0
    %v1539 = vadd.f32 0.0, %v1538
    %1540 = vdwg.mxu0
    %v1543 = vunpack.c.l.b16 %v1395
    %v1544 = vunpack.c.l.b16 %v1396
    %v1545 = vpack.c.b16 %v1544, %v1543
    %v1548 = vunpack.c.l.b16 %v962
    %v1549 = vunpack.c.l.b16 %v963
    %v1550 = vpack.c.b16 %v1549, %v1548
    %v1553 = vsel %vm1208, %v1545, 0
    %1555 = vmatpush.bf16.msra.mxu0 0
    %1556 = vmatpush.bf16.msra.mxu0 0
    %1557 = vmatpush.bf16.msra.mxu0 0
    %1558 = vmatpush.bf16.msra.mxu0 0
    %1559 = vmatpush.bf16.msra.mxu0 0
    %1560 = vmatpush.bf16.msra.mxu0 0
    %1561 = vmatpush.bf16.msra.mxu0 0
    %1562 = vmatpush.bf16.msra.mxu0 %v1550
    %1563 = vmatmul.bf16.gmra.mxu0 %v1553
    %v1564 = vpop.f32.mrf.mxu0
    %v1565 = vadd.f32 0.0, %v1564
    %v1566 = vpop.f32.mrf.mxu0
    %v1567 = vadd.f32 0.0, %v1566
    %1568 = vdwg.mxu0
    %v1571 = vunpack.c.l.b16 %v1397
    %v1572 = vunpack.c.l.b16 %v1398
    %v1573 = vpack.c.b16 %v1572, %v1571
    %v1576 = vunpack.c.l.b16 %v964
    %v1577 = vunpack.c.l.b16 %v965
    %v1578 = vpack.c.b16 %v1577, %v1576
    %v1581 = vsel %vm1208, %v1573, 0
    %1583 = vmatpush.bf16.msra.mxu0 0
    %1584 = vmatpush.bf16.msra.mxu0 0
    %1585 = vmatpush.bf16.msra.mxu0 0
    %1586 = vmatpush.bf16.msra.mxu0 0
    %1587 = vmatpush.bf16.msra.mxu0 0
    %1588 = vmatpush.bf16.msra.mxu0 0
    %1589 = vmatpush.bf16.msra.mxu0 0
    %1590 = vmatpush.bf16.msra.mxu0 %v1578
    %1591 = vmatmul.bf16.gmra.mxu0 %v1581
    %v1592 = vpop.f32.mrf.mxu0
    %v1593 = vadd.f32 0.0, %v1592
    %v1594 = vpop.f32.mrf.mxu0
    %v1595 = vadd.f32 0.0, %v1594
    %1596 = vdwg.mxu0
    %v1599 = vunpack.c.l.b16 %v1399
    %v1600 = vunpack.c.l.b16 %v1400
    %v1601 = vpack.c.b16 %v1600, %v1599
    %v1604 = vunpack.c.l.b16 %v966
    %v1605 = vunpack.c.l.b16 %v967
    %v1606 = vpack.c.b16 %v1605, %v1604
    %v1609 = vsel %vm1208, %v1601, 0
    %1611 = vmatpush.bf16.msra.mxu0 0
    %1612 = vmatpush.bf16.msra.mxu0 0
    %1613 = vmatpush.bf16.msra.mxu0 0
    %1614 = vmatpush.bf16.msra.mxu0 0
    %1615 = vmatpush.bf16.msra.mxu0 0
    %1616 = vmatpush.bf16.msra.mxu0 0
    %1617 = vmatpush.bf16.msra.mxu0 0
    %1618 = vmatpush.bf16.msra.mxu0 %v1606
    %1619 = vmatmul.bf16.gmra.mxu0 %v1609
    %v1620 = vpop.f32.mrf.mxu0
    %v1621 = vadd.f32 0.0, %v1620
    %v1622 = vpop.f32.mrf.mxu0
    %v1623 = vadd.f32 0.0, %v1622
    %1624 = vdwg.mxu0
    %v1625 = vpack.c.bf16 %v1427, %v1425
    %v1626 = vpack.c.bf16 %v1455, %v1453
    %v1627 = vpack.c.bf16 %v1483, %v1481
    %v1628 = vpack.c.bf16 %v1511, %v1509
    %v1629 = vpack.c.bf16 %v1539, %v1537
    %v1630 = vpack.c.bf16 %v1567, %v1565
    %v1631 = vpack.c.bf16 %v1595, %v1593
    %v1632 = vpack.c.bf16 %v1623, %v1621
    %v1633 = vld [vmem:[#allocation8] sm:$0xf]
    %v1634 = vld [vmem:[#allocation8 + $0x4] sm:$0xf]
    %v1635 = vld [vmem:[#allocation8 + $0x8] sm:$0xf]
    %v1636 = vld [vmem:[#allocation8 + $0xc] sm:$0xf]
    %v1641 = vunpack.c.l.b16 %v1633
    %v1642 = vunpack.c.l.b16 %v1634
    %v1643 = vunpack.c.l.b16 %v1635
    %v1644 = vunpack.c.l.b16 %v1636
    %v1645 = vpack.c.b16 %v1642, %v1641
    %v1646 = vpack.c.b16 %v1644, %v1643
    %v1650 = vsel %vm213, %v1625, 0
    %v1653 = vsel %vm213, %v1626, 0
    %v1656 = vsel %vm213, %v1627, 0
    %v1659 = vsel %vm213, %v1628, 0
    %v1662 = vsel %vm213, %v1629, 0
    %v1665 = vsel %vm213, %v1630, 0
    %v1668 = vsel %vm213, %v1631, 0
    %v1671 = vsel %vm213, %v1632, 0
    %1673 = vmatpush.bf16.msra.mxu0 0
    %1674 = vmatpush.bf16.msra.mxu0 0
    %1675 = vmatpush.bf16.msra.mxu0 0
    %1676 = vmatpush.bf16.msra.mxu0 0
    %1677 = vmatpush.bf16.msra.mxu0 0
    %1678 = vmatpush.bf16.msra.mxu0 0
    %1679 = vmatpush.bf16.msra.mxu0 %v1646
    %1680 = vmatpush.bf16.msra.mxu0 %v1645
    %1681 = vmatmul.bf16.gmra.mxu0 %v1650
    %v1682 = vpop.f32.mrf.mxu0
    %v1683 = vadd.f32 0.0, %v1682
    %v1684 = vpop.f32.mrf.mxu0
    %v1685 = vadd.f32 0.0, %v1684
    %1686 = vmatmul.bf16.gmra.mxu0 %v1653
    %v1687 = vpop.f32.mrf.mxu0
    %v1688 = vadd.f32 0.0, %v1687
    %v1689 = vpop.f32.mrf.mxu0
    %v1690 = vadd.f32 0.0, %v1689
    %1691 = vmatmul.bf16.gmra.mxu0 %v1656
    %v1692 = vpop.f32.mrf.mxu0
    %v1693 = vadd.f32 0.0, %v1692
    %v1694 = vpop.f32.mrf.mxu0
    %v1695 = vadd.f32 0.0, %v1694
    %1696 = vmatmul.bf16.gmra.mxu0 %v1659
    %v1697 = vpop.f32.mrf.mxu0
    %v1698 = vadd.f32 0.0, %v1697
    %v1699 = vpop.f32.mrf.mxu0
    %v1700 = vadd.f32 0.0, %v1699
    %1701 = vmatmul.bf16.gmra.mxu0 %v1662
    %v1702 = vpop.f32.mrf.mxu0
    %v1703 = vadd.f32 0.0, %v1702
    %v1704 = vpop.f32.mrf.mxu0
    %v1705 = vadd.f32 0.0, %v1704
    %1706 = vmatmul.bf16.gmra.mxu0 %v1665
    %v1707 = vpop.f32.mrf.mxu0
    %v1708 = vadd.f32 0.0, %v1707
    %v1709 = vpop.f32.mrf.mxu0
    %v1710 = vadd.f32 0.0, %v1709
    %1711 = vmatmul.bf16.gmra.mxu0 %v1668
    %v1712 = vpop.f32.mrf.mxu0
    %v1713 = vadd.f32 0.0, %v1712
    %v1714 = vpop.f32.mrf.mxu0
    %v1715 = vadd.f32 0.0, %v1714
    %1716 = vmatmul.bf16.gmra.mxu0 %v1671
    %v1717 = vpop.f32.mrf.mxu0
    %v1718 = vadd.f32 0.0, %v1717
    %v1719 = vpop.f32.mrf.mxu0
    %v1720 = vadd.f32 0.0, %v1719
    %1721 = vdwg.mxu0
    %v1723 = vperm.slane %v700, 0
    %v1725 = vadd.f32 %v1723, %v1683
    %v1726 = vadd.f32 %v1723, %v1685
    %v1727 = vadd.f32 %v1723, %v1688
    %v1728 = vadd.f32 %v1723, %v1690
    %v1729 = vadd.f32 %v1723, %v1693
    %v1730 = vadd.f32 %v1723, %v1695
    %v1731 = vadd.f32 %v1723, %v1698
    %v1732 = vadd.f32 %v1723, %v1700
    %v1733 = vadd.f32 %v1723, %v1703
    %v1734 = vadd.f32 %v1723, %v1705
    %v1735 = vadd.f32 %v1723, %v1708
    %v1736 = vadd.f32 %v1723, %v1710
    %v1737 = vadd.f32 %v1723, %v1713
    %v1738 = vadd.f32 %v1723, %v1715
    %v1739 = vadd.f32 %v1723, %v1718
    %v1740 = vadd.f32 %v1723, %v1720
    %s1741 = scalar_lea.vmem %s5, 16
    %v1742 = vld [vmem:[%s1741] sm:$0xf]
    %v1743 = vld [vmem:[%s1741 + $0x4] sm:$0xf]
    %v1744 = vld [vmem:[%s1741 + $0x8] sm:$0xf]
    %v1745 = vld [vmem:[%s1741 + $0xc] sm:$0xf]
    %v1750 = vunpack.c.l.b16 %v1742
    %v1751 = vunpack.c.l.b16 %v1743
    %v1752 = vunpack.c.l.b16 %v1744
    %v1753 = vunpack.c.l.b16 %v1745
    %v1754 = vpack.c.b16 %v1751, %v1750
    %v1755 = vpack.c.b16 %v1753, %v1752
    %1758 = vmatpush.bf16.msra.mxu0 0
    %1759 = vmatpush.bf16.msra.mxu0 0
    %1760 = vmatpush.bf16.msra.mxu0 0
    %1761 = vmatpush.bf16.msra.mxu0 0
    %1762 = vmatpush.bf16.msra.mxu0 0
    %1763 = vmatpush.bf16.msra.mxu0 0
    %1764 = vmatpush.bf16.msra.mxu0 %v1755
    %1765 = vmatpush.bf16.msra.mxu0 %v1754
    %1766 = vmatmul.bf16.gmra.mxu0 %v718
    %v1767 = vpop.f32.mrf.mxu0
    %v1768 = vadd.f32 0.0, %v1767
    %v1769 = vpop.f32.mrf.mxu0
    %v1770 = vadd.f32 0.0, %v1769
    %1771 = vmatmul.bf16.gmra.mxu0 %v721
    %v1772 = vpop.f32.mrf.mxu0
    %v1773 = vadd.f32 0.0, %v1772
    %v1774 = vpop.f32.mrf.mxu0
    %v1775 = vadd.f32 0.0, %v1774
    %1776 = vmatmul.bf16.gmra.mxu0 %v724
    %v1777 = vpop.f32.mrf.mxu0
    %v1778 = vadd.f32 0.0, %v1777
    %v1779 = vpop.f32.mrf.mxu0
    %v1780 = vadd.f32 0.0, %v1779
    %1781 = vmatmul.bf16.gmra.mxu0 %v727
    %v1782 = vpop.f32.mrf.mxu0
    %v1783 = vadd.f32 0.0, %v1782
    %v1784 = vpop.f32.mrf.mxu0
    %v1785 = vadd.f32 0.0, %v1784
    %1786 = vmatmul.bf16.gmra.mxu0 %v730
    %v1787 = vpop.f32.mrf.mxu0
    %v1788 = vadd.f32 0.0, %v1787
    %v1789 = vpop.f32.mrf.mxu0
    %v1790 = vadd.f32 0.0, %v1789
    %1791 = vmatmul.bf16.gmra.mxu0 %v733
    %v1792 = vpop.f32.mrf.mxu0
    %v1793 = vadd.f32 0.0, %v1792
    %v1794 = vpop.f32.mrf.mxu0
    %v1795 = vadd.f32 0.0, %v1794
    %1796 = vmatmul.bf16.gmra.mxu0 %v736
    %v1797 = vpop.f32.mrf.mxu0
    %v1798 = vadd.f32 0.0, %v1797
    %v1799 = vpop.f32.mrf.mxu0
    %v1800 = vadd.f32 0.0, %v1799
    %1801 = vmatmul.bf16.gmra.mxu0 %v739
    %v1802 = vpop.f32.mrf.mxu0
    %v1803 = vadd.f32 0.0, %v1802
    %v1804 = vpop.f32.mrf.mxu0
    %v1805 = vadd.f32 0.0, %v1804
    %1806 = vdwg.mxu0
    %v1807 = vpack.c.bf16 %v1768, %v1768
    %v1808 = vpack.c.bf16 %v1770, %v1770
    %v1809 = vpack.c.bf16 %v1773, %v1773
    %v1810 = vpack.c.bf16 %v1775, %v1775
    %v1811 = vpack.c.bf16 %v1778, %v1778
    %v1812 = vpack.c.bf16 %v1780, %v1780
    %v1813 = vpack.c.bf16 %v1783, %v1783
    %v1814 = vpack.c.bf16 %v1785, %v1785
    %v1815 = vpack.c.bf16 %v1788, %v1788
    %v1816 = vpack.c.bf16 %v1790, %v1790
    %v1817 = vpack.c.bf16 %v1793, %v1793
    %v1818 = vpack.c.bf16 %v1795, %v1795
    %v1819 = vpack.c.bf16 %v1798, %v1798
    %v1820 = vpack.c.bf16 %v1800, %v1800
    %v1821 = vpack.c.bf16 %v1803, %v1803
    %v1822 = vpack.c.bf16 %v1805, %v1805
    %s1823 = scalar_lea.vmem [#allocation5], 16
    %v1824 = vld [vmem:[%s1823] sm:$0xf]
    %v1825 = vld [vmem:[%s1823 + $0x4] sm:$0xf]
    %v1826 = vld [vmem:[%s1823 + $0x8] sm:$0xf]
    %v1827 = vld [vmem:[%s1823 + $0xc] sm:$0xf]
    %v1832 = vunpack.c.l.b16 %v1824
    %v1833 = vunpack.c.l.b16 %v1825
    %v1834 = vunpack.c.l.b16 %v1826
    %v1835 = vunpack.c.l.b16 %v1827
    %v1836 = vpack.c.b16 %v1833, %v1832
    %v1837 = vpack.c.b16 %v1835, %v1834
    %1840 = vmatpush.bf16.msra.mxu0 0
    %1841 = vmatpush.bf16.msra.mxu0 0
    %1842 = vmatpush.bf16.msra.mxu0 0
    %1843 = vmatpush.bf16.msra.mxu0 0
    %1844 = vmatpush.bf16.msra.mxu0 0
    %1845 = vmatpush.bf16.msra.mxu0 0
    %1846 = vmatpush.bf16.msra.mxu0 %v1837
    %1847 = vmatpush.bf16.msra.mxu0 %v1836
    %1848 = vmatmul.bf16.gmra.mxu0 %v718
    %v1849 = vpop.f32.mrf.mxu0
    %v1850 = vadd.f32 0.0, %v1849
    %v1851 = vpop.f32.mrf.mxu0
    %v1852 = vadd.f32 0.0, %v1851
    %1853 = vmatmul.bf16.gmra.mxu0 %v721
    %v1854 = vpop.f32.mrf.mxu0
    %v1855 = vadd.f32 0.0, %v1854
    %v1856 = vpop.f32.mrf.mxu0
    %v1857 = vadd.f32 0.0, %v1856
    %1858 = vmatmul.bf16.gmra.mxu0 %v724
    %v1859 = vpop.f32.mrf.mxu0
    %v1860 = vadd.f32 0.0, %v1859
    %v1861 = vpop.f32.mrf.mxu0
    %v1862 = vadd.f32 0.0, %v1861
    %1863 = vmatmul.bf16.gmra.mxu0 %v727
    %v1864 = vpop.f32.mrf.mxu0
    %v1865 = vadd.f32 0.0, %v1864
    %v1866 = vpop.f32.mrf.mxu0
    %v1867 = vadd.f32 0.0, %v1866
    %1868 = vmatmul.bf16.gmra.mxu0 %v730
    %v1869 = vpop.f32.mrf.mxu0
    %v1870 = vadd.f32 0.0, %v1869
    %v1871 = vpop.f32.mrf.mxu0
    %v1872 = vadd.f32 0.0, %v1871
    %1873 = vmatmul.bf16.gmra.mxu0 %v733
    %v1874 = vpop.f32.mrf.mxu0
    %v1875 = vadd.f32 0.0, %v1874
    %v1876 = vpop.f32.mrf.mxu0
    %v1877 = vadd.f32 0.0, %v1876
    %1878 = vmatmul.bf16.gmra.mxu0 %v736
    %v1879 = vpop.f32.mrf.mxu0
    %v1880 = vadd.f32 0.0, %v1879
    %v1881 = vpop.f32.mrf.mxu0
    %v1882 = vadd.f32 0.0, %v1881
    %1883 = vmatmul.bf16.gmra.mxu0 %v739
    %v1884 = vpop.f32.mrf.mxu0
    %v1885 = vadd.f32 0.0, %v1884
    %v1886 = vpop.f32.mrf.mxu0
    %v1887 = vadd.f32 0.0, %v1886
    %1888 = vdwg.mxu0
    %v1889 = vpack.c.bf16 %v1850, %v1850
    %v1890 = vpack.c.bf16 %v1852, %v1852
    %v1891 = vpack.c.bf16 %v1855, %v1855
    %v1892 = vpack.c.bf16 %v1857, %v1857
    %v1893 = vpack.c.bf16 %v1860, %v1860
    %v1894 = vpack.c.bf16 %v1862, %v1862
    %v1895 = vpack.c.bf16 %v1865, %v1865
    %v1896 = vpack.c.bf16 %v1867, %v1867
    %v1897 = vpack.c.bf16 %v1870, %v1870
    %v1898 = vpack.c.bf16 %v1872, %v1872
    %v1899 = vpack.c.bf16 %v1875, %v1875
    %v1900 = vpack.c.bf16 %v1877, %v1877
    %v1901 = vpack.c.bf16 %v1880, %v1880
    %v1902 = vpack.c.bf16 %v1882, %v1882
    %v1903 = vpack.c.bf16 %v1885, %v1885
    %v1904 = vpack.c.bf16 %v1887, %v1887
    %s1905 = scalar_lea.vmem [#allocation7], 16
    %v1906 = vld [vmem:[%s1905] sm:$0xf]
    %v1907 = vld [vmem:[%s1905 + $0x4] sm:$0xf]
    %v1908 = vld [vmem:[%s1905 + $0x8] sm:$0xf]
    %v1909 = vld [vmem:[%s1905 + $0xc] sm:$0xf]
    %v1914 = vunpack.c.l.b16 %v1906
    %v1915 = vunpack.c.l.b16 %v1907
    %v1916 = vunpack.c.l.b16 %v1908
    %v1917 = vunpack.c.l.b16 %v1909
    %v1918 = vpack.c.b16 %v1915, %v1914
    %v1919 = vpack.c.b16 %v1917, %v1916
    %1922 = vmatpush.bf16.msra.mxu0 0
    %1923 = vmatpush.bf16.msra.mxu0 0
    %1924 = vmatpush.bf16.msra.mxu0 0
    %1925 = vmatpush.bf16.msra.mxu0 0
    %1926 = vmatpush.bf16.msra.mxu0 0
    %1927 = vmatpush.bf16.msra.mxu0 0
    %1928 = vmatpush.bf16.msra.mxu0 %v1919
    %1929 = vmatpush.bf16.msra.mxu0 %v1918
    %1930 = vmatmul.bf16.gmra.mxu0 %v718
    %v1931 = vpop.f32.mrf.mxu0
    %v1932 = vadd.f32 0.0, %v1931
    %v1933 = vpop.f32.mrf.mxu0
    %v1934 = vadd.f32 0.0, %v1933
    %1935 = vmatmul.bf16.gmra.mxu0 %v721
    %v1936 = vpop.f32.mrf.mxu0
    %v1937 = vadd.f32 0.0, %v1936
    %v1938 = vpop.f32.mrf.mxu0
    %v1939 = vadd.f32 0.0, %v1938
    %1940 = vmatmul.bf16.gmra.mxu0 %v724
    %v1941 = vpop.f32.mrf.mxu0
    %v1942 = vadd.f32 0.0, %v1941
    %v1943 = vpop.f32.mrf.mxu0
    %v1944 = vadd.f32 0.0, %v1943
    %1945 = vmatmul.bf16.gmra.mxu0 %v727
    %v1946 = vpop.f32.mrf.mxu0
    %v1947 = vadd.f32 0.0, %v1946
    %v1948 = vpop.f32.mrf.mxu0
    %v1949 = vadd.f32 0.0, %v1948
    %1950 = vmatmul.bf16.gmra.mxu0 %v730
    %v1951 = vpop.f32.mrf.mxu0
    %v1952 = vadd.f32 0.0, %v1951
    %v1953 = vpop.f32.mrf.mxu0
    %v1954 = vadd.f32 0.0, %v1953
    %1955 = vmatmul.bf16.gmra.mxu0 %v733
    %v1956 = vpop.f32.mrf.mxu0
    %v1957 = vadd.f32 0.0, %v1956
    %v1958 = vpop.f32.mrf.mxu0
    %v1959 = vadd.f32 0.0, %v1958
    %1960 = vmatmul.bf16.gmra.mxu0 %v736
    %v1961 = vpop.f32.mrf.mxu0
    %v1962 = vadd.f32 0.0, %v1961
    %v1963 = vpop.f32.mrf.mxu0
    %v1964 = vadd.f32 0.0, %v1963
    %1965 = vmatmul.bf16.gmra.mxu0 %v739
    %v1966 = vpop.f32.mrf.mxu0
    %v1967 = vadd.f32 0.0, %v1966
    %v1968 = vpop.f32.mrf.mxu0
    %v1969 = vadd.f32 0.0, %v1968
    %1970 = vdwg.mxu0
    %v1971 = vpack.c.bf16 %v1932, %v1932
    %v1972 = vpack.c.bf16 %v1934, %v1934
    %v1973 = vpack.c.bf16 %v1937, %v1937
    %v1974 = vpack.c.bf16 %v1939, %v1939
    %v1975 = vpack.c.bf16 %v1942, %v1942
    %v1976 = vpack.c.bf16 %v1944, %v1944
    %v1977 = vpack.c.bf16 %v1947, %v1947
    %v1978 = vpack.c.bf16 %v1949, %v1949
    %v1979 = vpack.c.bf16 %v1952, %v1952
    %v1980 = vpack.c.bf16 %v1954, %v1954
    %v1981 = vpack.c.bf16 %v1957, %v1957
    %v1982 = vpack.c.bf16 %v1959, %v1959
    %v1983 = vpack.c.bf16 %v1962, %v1962
    %v1984 = vpack.c.bf16 %v1964, %v1964
    %v1985 = vpack.c.bf16 %v1967, %v1967
    %v1986 = vpack.c.bf16 %v1969, %v1969
    %v1989 = vunpack.c.l.b16 %v1807
    %v1990 = vunpack.c.l.b16 %v1808
    %v1991 = vpack.c.b16 %v1990, %v1989
    %v1994 = vunpack.c.l.b16 %v1889
    %v1995 = vunpack.c.l.b16 %v1890
    %v1996 = vpack.c.b16 %v1995, %v1994
    %v1998 = vsel %vm213, %v1991, 0
    %v2001 = vsel %vm213, %v1996, 0
    %2003 = vmatpush.bf16.xpose.msra.mxu0 0
    %2004 = vmatpush.bf16.xpose.msra.mxu0 0
    %2005 = vmatpush.bf16.xpose.msra.mxu0 0
    %2006 = vmatpush.bf16.xpose.msra.mxu0 0
    %2007 = vmatpush.bf16.xpose.msra.mxu0 0
    %2008 = vmatpush.bf16.xpose.msra.mxu0 0
    %2009 = vmatpush.bf16.xpose.msra.mxu0 0
    %2010 = vmatpush.bf16.xpose.msra.mxu0 %v2001
    %2011 = vmatmul.bf16.gmra.mxu0 %v1998
    %v2012 = vpop.f32.mrf.mxu0
    %v2013 = vadd.f32 0.0, %v2012
    %v2014 = vpop.f32.mrf.mxu0
    %v2015 = vadd.f32 0.0, %v2014
    %2016 = vdwg.mxu0
    %v2019 = vunpack.c.l.b16 %v1809
    %v2020 = vunpack.c.l.b16 %v1810
    %v2021 = vpack.c.b16 %v2020, %v2019
    %v2024 = vunpack.c.l.b16 %v1891
    %v2025 = vunpack.c.l.b16 %v1892
    %v2026 = vpack.c.b16 %v2025, %v2024
    %v2028 = vsel %vm213, %v2021, 0
    %v2031 = vsel %vm213, %v2026, 0
    %2033 = vmatpush.bf16.xpose.msra.mxu0 0
    %2034 = vmatpush.bf16.xpose.msra.mxu0 0
    %2035 = vmatpush.bf16.xpose.msra.mxu0 0
    %2036 = vmatpush.bf16.xpose.msra.mxu0 0
    %2037 = vmatpush.bf16.xpose.msra.mxu0 0
    %2038 = vmatpush.bf16.xpose.msra.mxu0 0
    %2039 = vmatpush.bf16.xpose.msra.mxu0 0
    %2040 = vmatpush.bf16.xpose.msra.mxu0 %v2031
    %2041 = vmatmul.bf16.gmra.mxu0 %v2028
    %v2042 = vpop.f32.mrf.mxu0
    %v2043 = vadd.f32 0.0, %v2042
    %v2044 = vpop.f32.mrf.mxu0
    %v2045 = vadd.f32 0.0, %v2044
    %2046 = vdwg.mxu0
    %v2049 = vunpack.c.l.b16 %v1811
    %v2050 = vunpack.c.l.b16 %v1812
    %v2051 = vpack.c.b16 %v2050, %v2049
    %v2054 = vunpack.c.l.b16 %v1893
    %v2055 = vunpack.c.l.b16 %v1894
    %v2056 = vpack.c.b16 %v2055, %v2054
    %v2058 = vsel %vm213, %v2051, 0
    %v2061 = vsel %vm213, %v2056, 0
    %2063 = vmatpush.bf16.xpose.msra.mxu0 0
    %2064 = vmatpush.bf16.xpose.msra.mxu0 0
    %2065 = vmatpush.bf16.xpose.msra.mxu0 0
    %2066 = vmatpush.bf16.xpose.msra.mxu0 0
    %2067 = vmatpush.bf16.xpose.msra.mxu0 0
    %2068 = vmatpush.bf16.xpose.msra.mxu0 0
    %2069 = vmatpush.bf16.xpose.msra.mxu0 0
    %2070 = vmatpush.bf16.xpose.msra.mxu0 %v2061
    %2071 = vmatmul.bf16.gmra.mxu0 %v2058
    %v2072 = vpop.f32.mrf.mxu0
    %v2073 = vadd.f32 0.0, %v2072
    %v2074 = vpop.f32.mrf.mxu0
    %v2075 = vadd.f32 0.0, %v2074
    %2076 = vdwg.mxu0
    %v2079 = vunpack.c.l.b16 %v1813
    %v2080 = vunpack.c.l.b16 %v1814
    %v2081 = vpack.c.b16 %v2080, %v2079
    %v2084 = vunpack.c.l.b16 %v1895
    %v2085 = vunpack.c.l.b16 %v1896
    %v2086 = vpack.c.b16 %v2085, %v2084
    %v2088 = vsel %vm213, %v2081, 0
    %v2091 = vsel %vm213, %v2086, 0
    %2093 = vmatpush.bf16.xpose.msra.mxu0 0
    %2094 = vmatpush.bf16.xpose.msra.mxu0 0
    %2095 = vmatpush.bf16.xpose.msra.mxu0 0
    %2096 = vmatpush.bf16.xpose.msra.mxu0 0
    %2097 = vmatpush.bf16.xpose.msra.mxu0 0
    %2098 = vmatpush.bf16.xpose.msra.mxu0 0
    %2099 = vmatpush.bf16.xpose.msra.mxu0 0
    %2100 = vmatpush.bf16.xpose.msra.mxu0 %v2091
    %2101 = vmatmul.bf16.gmra.mxu0 %v2088
    %v2102 = vpop.f32.mrf.mxu0
    %v2103 = vadd.f32 0.0, %v2102
    %v2104 = vpop.f32.mrf.mxu0
    %v2105 = vadd.f32 0.0, %v2104
    %2106 = vdwg.mxu0
    %v2109 = vunpack.c.l.b16 %v1815
    %v2110 = vunpack.c.l.b16 %v1816
    %v2111 = vpack.c.b16 %v2110, %v2109
    %v2114 = vunpack.c.l.b16 %v1897
    %v2115 = vunpack.c.l.b16 %v1898
    %v2116 = vpack.c.b16 %v2115, %v2114
    %v2118 = vsel %vm213, %v2111, 0
    %v2121 = vsel %vm213, %v2116, 0
    %2123 = vmatpush.bf16.xpose.msra.mxu0 0
    %2124 = vmatpush.bf16.xpose.msra.mxu0 0
    %2125 = vmatpush.bf16.xpose.msra.mxu0 0
    %2126 = vmatpush.bf16.xpose.msra.mxu0 0
    %2127 = vmatpush.bf16.xpose.msra.mxu0 0
    %2128 = vmatpush.bf16.xpose.msra.mxu0 0
    %2129 = vmatpush.bf16.xpose.msra.mxu0 0
    %2130 = vmatpush.bf16.xpose.msra.mxu0 %v2121
    %2131 = vmatmul.bf16.gmra.mxu0 %v2118
    %v2132 = vpop.f32.mrf.mxu0
    %v2133 = vadd.f32 0.0, %v2132
    %v2134 = vpop.f32.mrf.mxu0
    %v2135 = vadd.f32 0.0, %v2134
    %2136 = vdwg.mxu0
    %v2139 = vunpack.c.l.b16 %v1817
    %v2140 = vunpack.c.l.b16 %v1818
    %v2141 = vpack.c.b16 %v2140, %v2139
    %v2144 = vunpack.c.l.b16 %v1899
    %v2145 = vunpack.c.l.b16 %v1900
    %v2146 = vpack.c.b16 %v2145, %v2144
    %v2148 = vsel %vm213, %v2141, 0
    %v2151 = vsel %vm213, %v2146, 0
    %2153 = vmatpush.bf16.xpose.msra.mxu0 0
    %2154 = vmatpush.bf16.xpose.msra.mxu0 0
    %2155 = vmatpush.bf16.xpose.msra.mxu0 0
    %2156 = vmatpush.bf16.xpose.msra.mxu0 0
    %2157 = vmatpush.bf16.xpose.msra.mxu0 0
    %2158 = vmatpush.bf16.xpose.msra.mxu0 0
    %2159 = vmatpush.bf16.xpose.msra.mxu0 0
    %2160 = vmatpush.bf16.xpose.msra.mxu0 %v2151
    %2161 = vmatmul.bf16.gmra.mxu0 %v2148
    %v2162 = vpop.f32.mrf.mxu0
    %v2163 = vadd.f32 0.0, %v2162
    %v2164 = vpop.f32.mrf.mxu0
    %v2165 = vadd.f32 0.0, %v2164
    %2166 = vdwg.mxu0
    %v2169 = vunpack.c.l.b16 %v1819
    %v2170 = vunpack.c.l.b16 %v1820
    %v2171 = vpack.c.b16 %v2170, %v2169
    %v2174 = vunpack.c.l.b16 %v1901
    %v2175 = vunpack.c.l.b16 %v1902
    %v2176 = vpack.c.b16 %v2175, %v2174
    %v2178 = vsel %vm213, %v2171, 0
    %v2181 = vsel %vm213, %v2176, 0
    %2183 = vmatpush.bf16.xpose.msra.mxu0 0
    %2184 = vmatpush.bf16.xpose.msra.mxu0 0
    %2185 = vmatpush.bf16.xpose.msra.mxu0 0
    %2186 = vmatpush.bf16.xpose.msra.mxu0 0
    %2187 = vmatpush.bf16.xpose.msra.mxu0 0
    %2188 = vmatpush.bf16.xpose.msra.mxu0 0
    %2189 = vmatpush.bf16.xpose.msra.mxu0 0
    %2190 = vmatpush.bf16.xpose.msra.mxu0 %v2181
    %2191 = vmatmul.bf16.gmra.mxu0 %v2178
    %v2192 = vpop.f32.mrf.mxu0
    %v2193 = vadd.f32 0.0, %v2192
    %v2194 = vpop.f32.mrf.mxu0
    %v2195 = vadd.f32 0.0, %v2194
    %2196 = vdwg.mxu0
    %v2199 = vunpack.c.l.b16 %v1821
    %v2200 = vunpack.c.l.b16 %v1822
    %v2201 = vpack.c.b16 %v2200, %v2199
    %v2204 = vunpack.c.l.b16 %v1903
    %v2205 = vunpack.c.l.b16 %v1904
    %v2206 = vpack.c.b16 %v2205, %v2204
    %v2208 = vsel %vm213, %v2201, 0
    %v2211 = vsel %vm213, %v2206, 0
    %2213 = vmatpush.bf16.xpose.msra.mxu0 0
    %2214 = vmatpush.bf16.xpose.msra.mxu0 0
    %2215 = vmatpush.bf16.xpose.msra.mxu0 0
    %2216 = vmatpush.bf16.xpose.msra.mxu0 0
    %2217 = vmatpush.bf16.xpose.msra.mxu0 0
    %2218 = vmatpush.bf16.xpose.msra.mxu0 0
    %2219 = vmatpush.bf16.xpose.msra.mxu0 0
    %2220 = vmatpush.bf16.xpose.msra.mxu0 %v2211
    %2221 = vmatmul.bf16.gmra.mxu0 %v2208
    %v2222 = vpop.f32.mrf.mxu0
    %v2223 = vadd.f32 0.0, %v2222
    %v2224 = vpop.f32.mrf.mxu0
    %v2225 = vadd.f32 0.0, %v2224
    %2226 = vdwg.mxu0
    %v2227 = vsel %vm1208, %v2013, -inf
    %2228 = vmax.xlane.f32.xlu0 %v2227
    %v2229 = vpop.xlane.xlu0 %2228
    %v2230 = vsel %vm1208, %v2015, -inf
    %2231 = vmax.xlane.f32.xlu0 %v2230
    %v2232 = vpop.xlane.xlu0 %2231
    %v2233 = vsel %vm1208, %v2043, -inf
    %2234 = vmax.xlane.f32.xlu0 %v2233
    %v2235 = vpop.xlane.xlu0 %2234
    %v2236 = vsel %vm1208, %v2045, -inf
    %2237 = vmax.xlane.f32.xlu0 %v2236
    %v2238 = vpop.xlane.xlu0 %2237
    %v2239 = vsel %vm1208, %v2073, -inf
    %2240 = vmax.xlane.f32.xlu0 %v2239
    %v2241 = vpop.xlane.xlu0 %2240
    %v2242 = vsel %vm1208, %v2075, -inf
    %2243 = vmax.xlane.f32.xlu0 %v2242
    %v2244 = vpop.xlane.xlu0 %2243
    %v2245 = vsel %vm1208, %v2103, -inf
    %2246 = vmax.xlane.f32.xlu0 %v2245
    %v2247 = vpop.xlane.xlu0 %2246
    %v2248 = vsel %vm1208, %v2105, -inf
    %2249 = vmax.xlane.f32.xlu0 %v2248
    %v2250 = vpop.xlane.xlu0 %2249
    %v2251 = vsel %vm1208, %v2133, -inf
    %2252 = vmax.xlane.f32.xlu0 %v2251
    %v2253 = vpop.xlane.xlu0 %2252
    %v2254 = vsel %vm1208, %v2135, -inf
    %2255 = vmax.xlane.f32.xlu0 %v2254
    %v2256 = vpop.xlane.xlu0 %2255
    %v2257 = vsel %vm1208, %v2163, -inf
    %2258 = vmax.xlane.f32.xlu0 %v2257
    %v2259 = vpop.xlane.xlu0 %2258
    %v2260 = vsel %vm1208, %v2165, -inf
    %2261 = vmax.xlane.f32.xlu0 %v2260
    %v2262 = vpop.xlane.xlu0 %2261
    %v2263 = vsel %vm1208, %v2193, -inf
    %2264 = vmax.xlane.f32.xlu0 %v2263
    %v2265 = vpop.xlane.xlu0 %2264
    %v2266 = vsel %vm1208, %v2195, -inf
    %2267 = vmax.xlane.f32.xlu0 %v2266
    %v2268 = vpop.xlane.xlu0 %2267
    %v2269 = vsel %vm1208, %v2223, -inf
    %2270 = vmax.xlane.f32.xlu0 %v2269
    %v2271 = vpop.xlane.xlu0 %2270
    %v2272 = vsel %vm1208, %v2225, -inf
    %2273 = vmax.xlane.f32.xlu0 %v2272
    %v2274 = vpop.xlane.xlu0 %2273
    %v2275 = vsub.f32 %v2013, %v2229
    %v2276 = vsub.f32 %v2015, %v2232
    %v2277 = vsub.f32 %v2043, %v2235
    %v2278 = vsub.f32 %v2045, %v2238
    %v2279 = vsub.f32 %v2073, %v2241
    %v2280 = vsub.f32 %v2075, %v2244
    %v2281 = vsub.f32 %v2103, %v2247
    %v2282 = vsub.f32 %v2105, %v2250
    %v2283 = vsub.f32 %v2133, %v2253
    %v2284 = vsub.f32 %v2135, %v2256
    %v2285 = vsub.f32 %v2163, %v2259
    %v2286 = vsub.f32 %v2165, %v2262
    %v2287 = vsub.f32 %v2193, %v2265
    %v2288 = vsub.f32 %v2195, %v2268
    %v2289 = vsub.f32 %v2223, %v2271
    %v2290 = vsub.f32 %v2225, %v2274
    %v2291 = vmul.f32 %v2275, 1.442695
    %v2292 = vpow.pop %v2291
    %v2293 = vmul.f32 %v2276, 1.442695
    %v2294 = vpow.pop %v2293
    %v2295 = vmul.f32 %v2277, 1.442695
    %v2296 = vpow.pop %v2295
    %v2297 = vmul.f32 %v2278, 1.442695
    %v2298 = vpow.pop %v2297
    %v2299 = vmul.f32 %v2279, 1.442695
    %v2300 = vpow.pop %v2299
    %v2301 = vmul.f32 %v2280, 1.442695
    %v2302 = vpow.pop %v2301
    %v2303 = vmul.f32 %v2281, 1.442695
    %v2304 = vpow.pop %v2303
    %v2305 = vmul.f32 %v2282, 1.442695
    %v2306 = vpow.pop %v2305
    %v2307 = vmul.f32 %v2283, 1.442695
    %v2308 = vpow.pop %v2307
    %v2309 = vmul.f32 %v2284, 1.442695
    %v2310 = vpow.pop %v2309
    %v2311 = vmul.f32 %v2285, 1.442695
    %v2312 = vpow.pop %v2311
    %v2313 = vmul.f32 %v2286, 1.442695
    %v2314 = vpow.pop %v2313
    %v2315 = vmul.f32 %v2287, 1.442695
    %v2316 = vpow.pop %v2315
    %v2317 = vmul.f32 %v2288, 1.442695
    %v2318 = vpow.pop %v2317
    %v2319 = vmul.f32 %v2289, 1.442695
    %v2320 = vpow.pop %v2319
    %v2321 = vmul.f32 %v2290, 1.442695
    %v2322 = vpow.pop %v2321
    %v2323 = vsel %vm1208, %v2292, 0.0
    %2324 = vadd.xlane.f32.xlu0 %v2323
    %v2325 = vpop.xlane.xlu0 %2324
    %v2326 = vsel %vm1208, %v2294, 0.0
    %2327 = vadd.xlane.f32.xlu0 %v2326
    %v2328 = vpop.xlane.xlu0 %2327
    %v2329 = vsel %vm1208, %v2296, 0.0
    %2330 = vadd.xlane.f32.xlu0 %v2329
    %v2331 = vpop.xlane.xlu0 %2330
    %v2332 = vsel %vm1208, %v2298, 0.0
    %2333 = vadd.xlane.f32.xlu0 %v2332
    %v2334 = vpop.xlane.xlu0 %2333
    %v2335 = vsel %vm1208, %v2300, 0.0
    %2336 = vadd.xlane.f32.xlu0 %v2335
    %v2337 = vpop.xlane.xlu0 %2336
    %v2338 = vsel %vm1208, %v2302, 0.0
    %2339 = vadd.xlane.f32.xlu0 %v2338
    %v2340 = vpop.xlane.xlu0 %2339
    %v2341 = vsel %vm1208, %v2304, 0.0
    %2342 = vadd.xlane.f32.xlu0 %v2341
    %v2343 = vpop.xlane.xlu0 %2342
    %v2344 = vsel %vm1208, %v2306, 0.0
    %2345 = vadd.xlane.f32.xlu0 %v2344
    %v2346 = vpop.xlane.xlu0 %2345
    %v2347 = vsel %vm1208, %v2308, 0.0
    %2348 = vadd.xlane.f32.xlu0 %v2347
    %v2349 = vpop.xlane.xlu0 %2348
    %v2350 = vsel %vm1208, %v2310, 0.0
    %2351 = vadd.xlane.f32.xlu0 %v2350
    %v2352 = vpop.xlane.xlu0 %2351
    %v2353 = vsel %vm1208, %v2312, 0.0
    %2354 = vadd.xlane.f32.xlu0 %v2353
    %v2355 = vpop.xlane.xlu0 %2354
    %v2356 = vsel %vm1208, %v2314, 0.0
    %2357 = vadd.xlane.f32.xlu0 %v2356
    %v2358 = vpop.xlane.xlu0 %2357
    %v2359 = vsel %vm1208, %v2316, 0.0
    %2360 = vadd.xlane.f32.xlu0 %v2359
    %v2361 = vpop.xlane.xlu0 %2360
    %v2362 = vsel %vm1208, %v2318, 0.0
    %2363 = vadd.xlane.f32.xlu0 %v2362
    %v2364 = vpop.xlane.xlu0 %2363
    %v2365 = vsel %vm1208, %v2320, 0.0
    %2366 = vadd.xlane.f32.xlu0 %v2365
    %v2367 = vpop.xlane.xlu0 %2366
    %v2368 = vsel %vm1208, %v2322, 0.0
    %2369 = vadd.xlane.f32.xlu0 %v2368
    %v2370 = vpop.xlane.xlu0 %2369
    %v2371 = vrcp.pop %v2325
    %v2372 = vrcp.pop %v2328
    %v2373 = vrcp.pop %v2331
    %v2374 = vrcp.pop %v2334
    %v2375 = vrcp.pop %v2337
    %v2376 = vrcp.pop %v2340
    %v2377 = vrcp.pop %v2343
    %v2378 = vrcp.pop %v2346
    %v2379 = vrcp.pop %v2349
    %v2380 = vrcp.pop %v2352
    %v2381 = vrcp.pop %v2355
    %v2382 = vrcp.pop %v2358
    %v2383 = vrcp.pop %v2361
    %v2384 = vrcp.pop %v2364
    %v2385 = vrcp.pop %v2367
    %v2386 = vrcp.pop %v2370
    %v2387 = vmul.f32 %v2292, %v2371
    %v2388 = vmul.f32 %v2294, %v2372
    %v2389 = vmul.f32 %v2296, %v2373
    %v2390 = vmul.f32 %v2298, %v2374
    %v2391 = vmul.f32 %v2300, %v2375
    %v2392 = vmul.f32 %v2302, %v2376
    %v2393 = vmul.f32 %v2304, %v2377
    %v2394 = vmul.f32 %v2306, %v2378
    %v2395 = vmul.f32 %v2308, %v2379
    %v2396 = vmul.f32 %v2310, %v2380
    %v2397 = vmul.f32 %v2312, %v2381
    %v2398 = vmul.f32 %v2314, %v2382
    %v2399 = vmul.f32 %v2316, %v2383
    %v2400 = vmul.f32 %v2318, %v2384
    %v2401 = vmul.f32 %v2320, %v2385
    %v2402 = vmul.f32 %v2322, %v2386
    %v2403 = vpack.c.bf16 %v2387, %v2387
    %v2404 = vpack.c.bf16 %v2388, %v2388
    %v2405 = vpack.c.bf16 %v2389, %v2389
    %v2406 = vpack.c.bf16 %v2390, %v2390
    %v2407 = vpack.c.bf16 %v2391, %v2391
    %v2408 = vpack.c.bf16 %v2392, %v2392
    %v2409 = vpack.c.bf16 %v2393, %v2393
    %v2410 = vpack.c.bf16 %v2394, %v2394
    %v2411 = vpack.c.bf16 %v2395, %v2395
    %v2412 = vpack.c.bf16 %v2396, %v2396
    %v2413 = vpack.c.bf16 %v2397, %v2397
    %v2414 = vpack.c.bf16 %v2398, %v2398
    %v2415 = vpack.c.bf16 %v2399, %v2399
    %v2416 = vpack.c.bf16 %v2400, %v2400
    %v2417 = vpack.c.bf16 %v2401, %v2401
    %v2418 = vpack.c.bf16 %v2402, %v2402
    %v2421 = vunpack.c.l.b16 %v2403
    %v2422 = vunpack.c.l.b16 %v2404
    %v2423 = vpack.c.b16 %v2422, %v2421
    %v2426 = vunpack.c.l.b16 %v1971
    %v2427 = vunpack.c.l.b16 %v1972
    %v2428 = vpack.c.b16 %v2427, %v2426
    %v2431 = vsel %vm1208, %v2423, 0
    %2433 = vmatpush.bf16.msra.mxu0 0
    %2434 = vmatpush.bf16.msra.mxu0 0
    %2435 = vmatpush.bf16.msra.mxu0 0
    %2436 = vmatpush.bf16.msra.mxu0 0
    %2437 = vmatpush.bf16.msra.mxu0 0
    %2438 = vmatpush.bf16.msra.mxu0 0
    %2439 = vmatpush.bf16.msra.mxu0 0
    %2440 = vmatpush.bf16.msra.mxu0 %v2428
    %2441 = vmatmul.bf16.gmra.mxu0 %v2431
    %v2442 = vpop.f32.mrf.mxu0
    %v2443 = vadd.f32 0.0, %v2442
    %v2444 = vpop.f32.mrf.mxu0
    %v2445 = vadd.f32 0.0, %v2444
    %2446 = vdwg.mxu0
    %v2449 = vunpack.c.l.b16 %v2405
    %v2450 = vunpack.c.l.b16 %v2406
    %v2451 = vpack.c.b16 %v2450, %v2449
    %v2454 = vunpack.c.l.b16 %v1973
    %v2455 = vunpack.c.l.b16 %v1974
    %v2456 = vpack.c.b16 %v2455, %v2454
    %v2459 = vsel %vm1208, %v2451, 0
    %2461 = vmatpush.bf16.msra.mxu0 0
    %2462 = vmatpush.bf16.msra.mxu0 0
    %2463 = vmatpush.bf16.msra.mxu0 0
    %2464 = vmatpush.bf16.msra.mxu0 0
    %2465 = vmatpush.bf16.msra.mxu0 0
    %2466 = vmatpush.bf16.msra.mxu0 0
    %2467 = vmatpush.bf16.msra.mxu0 0
    %2468 = vmatpush.bf16.msra.mxu0 %v2456
    %2469 = vmatmul.bf16.gmra.mxu0 %v2459
    %v2470 = vpop.f32.mrf.mxu0
    %v2471 = vadd.f32 0.0, %v2470
    %v2472 = vpop.f32.mrf.mxu0
    %v2473 = vadd.f32 0.0, %v2472
    %2474 = vdwg.mxu0
    %v2477 = vunpack.c.l.b16 %v2407
    %v2478 = vunpack.c.l.b16 %v2408
    %v2479 = vpack.c.b16 %v2478, %v2477
    %v2482 = vunpack.c.l.b16 %v1975
    %v2483 = vunpack.c.l.b16 %v1976
    %v2484 = vpack.c.b16 %v2483, %v2482
    %v2487 = vsel %vm1208, %v2479, 0
    %2489 = vmatpush.bf16.msra.mxu0 0
    %2490 = vmatpush.bf16.msra.mxu0 0
    %2491 = vmatpush.bf16.msra.mxu0 0
    %2492 = vmatpush.bf16.msra.mxu0 0
    %2493 = vmatpush.bf16.msra.mxu0 0
    %2494 = vmatpush.bf16.msra.mxu0 0
    %2495 = vmatpush.bf16.msra.mxu0 0
    %2496 = vmatpush.bf16.msra.mxu0 %v2484
    %2497 = vmatmul.bf16.gmra.mxu0 %v2487
    %v2498 = vpop.f32.mrf.mxu0
    %v2499 = vadd.f32 0.0, %v2498
    %v2500 = vpop.f32.mrf.mxu0
    %v2501 = vadd.f32 0.0, %v2500
    %2502 = vdwg.mxu0
    %v2505 = vunpack.c.l.b16 %v2409
    %v2506 = vunpack.c.l.b16 %v2410
    %v2507 = vpack.c.b16 %v2506, %v2505
    %v2510 = vunpack.c.l.b16 %v1977
    %v2511 = vunpack.c.l.b16 %v1978
    %v2512 = vpack.c.b16 %v2511, %v2510
    %v2515 = vsel %vm1208, %v2507, 0
    %2517 = vmatpush.bf16.msra.mxu0 0
    %2518 = vmatpush.bf16.msra.mxu0 0
    %2519 = vmatpush.bf16.msra.mxu0 0
    %2520 = vmatpush.bf16.msra.mxu0 0
    %2521 = vmatpush.bf16.msra.mxu0 0
    %2522 = vmatpush.bf16.msra.mxu0 0
    %2523 = vmatpush.bf16.msra.mxu0 0
    %2524 = vmatpush.bf16.msra.mxu0 %v2512
    %2525 = vmatmul.bf16.gmra.mxu0 %v2515
    %v2526 = vpop.f32.mrf.mxu0
    %v2527 = vadd.f32 0.0, %v2526
    %v2528 = vpop.f32.mrf.mxu0
    %v2529 = vadd.f32 0.0, %v2528
    %2530 = vdwg.mxu0
    %v2533 = vunpack.c.l.b16 %v2411
    %v2534 = vunpack.c.l.b16 %v2412
    %v2535 = vpack.c.b16 %v2534, %v2533
    %v2538 = vunpack.c.l.b16 %v1979
    %v2539 = vunpack.c.l.b16 %v1980
    %v2540 = vpack.c.b16 %v2539, %v2538
    %v2543 = vsel %vm1208, %v2535, 0
    %2545 = vmatpush.bf16.msra.mxu0 0
    %2546 = vmatpush.bf16.msra.mxu0 0
    %2547 = vmatpush.bf16.msra.mxu0 0
    %2548 = vmatpush.bf16.msra.mxu0 0
    %2549 = vmatpush.bf16.msra.mxu0 0
    %2550 = vmatpush.bf16.msra.mxu0 0
    %2551 = vmatpush.bf16.msra.mxu0 0
    %2552 = vmatpush.bf16.msra.mxu0 %v2540
    %2553 = vmatmul.bf16.gmra.mxu0 %v2543
    %v2554 = vpop.f32.mrf.mxu0
    %v2555 = vadd.f32 0.0, %v2554
    %v2556 = vpop.f32.mrf.mxu0
    %v2557 = vadd.f32 0.0, %v2556
    %2558 = vdwg.mxu0
    %v2561 = vunpack.c.l.b16 %v2413
    %v2562 = vunpack.c.l.b16 %v2414
    %v2563 = vpack.c.b16 %v2562, %v2561
    %v2566 = vunpack.c.l.b16 %v1981
    %v2567 = vunpack.c.l.b16 %v1982
    %v2568 = vpack.c.b16 %v2567, %v2566
    %v2571 = vsel %vm1208, %v2563, 0
    %2573 = vmatpush.bf16.msra.mxu0 0
    %2574 = vmatpush.bf16.msra.mxu0 0
    %2575 = vmatpush.bf16.msra.mxu0 0
    %2576 = vmatpush.bf16.msra.mxu0 0
    %2577 = vmatpush.bf16.msra.mxu0 0
    %2578 = vmatpush.bf16.msra.mxu0 0
    %2579 = vmatpush.bf16.msra.mxu0 0
    %2580 = vmatpush.bf16.msra.mxu0 %v2568
    %2581 = vmatmul.bf16.gmra.mxu0 %v2571
    %v2582 = vpop.f32.mrf.mxu0
    %v2583 = vadd.f32 0.0, %v2582
    %v2584 = vpop.f32.mrf.mxu0
    %v2585 = vadd.f32 0.0, %v2584
    %2586 = vdwg.mxu0
    %v2589 = vunpack.c.l.b16 %v2415
    %v2590 = vunpack.c.l.b16 %v2416
    %v2591 = vpack.c.b16 %v2590, %v2589
    %v2594 = vunpack.c.l.b16 %v1983
    %v2595 = vunpack.c.l.b16 %v1984
    %v2596 = vpack.c.b16 %v2595, %v2594
    %v2599 = vsel %vm1208, %v2591, 0
    %2601 = vmatpush.bf16.msra.mxu0 0
    %2602 = vmatpush.bf16.msra.mxu0 0
    %2603 = vmatpush.bf16.msra.mxu0 0
    %2604 = vmatpush.bf16.msra.mxu0 0
    %2605 = vmatpush.bf16.msra.mxu0 0
    %2606 = vmatpush.bf16.msra.mxu0 0
    %2607 = vmatpush.bf16.msra.mxu0 0
    %2608 = vmatpush.bf16.msra.mxu0 %v2596
    %2609 = vmatmul.bf16.gmra.mxu0 %v2599
    %v2610 = vpop.f32.mrf.mxu0
    %v2611 = vadd.f32 0.0, %v2610
    %v2612 = vpop.f32.mrf.mxu0
    %v2613 = vadd.f32 0.0, %v2612
    %2614 = vdwg.mxu0
    %v2617 = vunpack.c.l.b16 %v2417
    %v2618 = vunpack.c.l.b16 %v2418
    %v2619 = vpack.c.b16 %v2618, %v2617
    %v2622 = vunpack.c.l.b16 %v1985
    %v2623 = vunpack.c.l.b16 %v1986
    %v2624 = vpack.c.b16 %v2623, %v2622
    %v2627 = vsel %vm1208, %v2619, 0
    %2629 = vmatpush.bf16.msra.mxu0 0
    %2630 = vmatpush.bf16.msra.mxu0 0
    %2631 = vmatpush.bf16.msra.mxu0 0
    %2632 = vmatpush.bf16.msra.mxu0 0
    %2633 = vmatpush.bf16.msra.mxu0 0
    %2634 = vmatpush.bf16.msra.mxu0 0
    %2635 = vmatpush.bf16.msra.mxu0 0
    %2636 = vmatpush.bf16.msra.mxu0 %v2624
    %2637 = vmatmul.bf16.gmra.mxu0 %v2627
    %v2638 = vpop.f32.mrf.mxu0
    %v2639 = vadd.f32 0.0, %v2638
    %v2640 = vpop.f32.mrf.mxu0
    %v2641 = vadd.f32 0.0, %v2640
    %2642 = vdwg.mxu0
    %v2643 = vpack.c.bf16 %v2445, %v2443
    %v2644 = vpack.c.bf16 %v2473, %v2471
    %v2645 = vpack.c.bf16 %v2501, %v2499
    %v2646 = vpack.c.bf16 %v2529, %v2527
    %v2647 = vpack.c.bf16 %v2557, %v2555
    %v2648 = vpack.c.bf16 %v2585, %v2583
    %v2649 = vpack.c.bf16 %v2613, %v2611
    %v2650 = vpack.c.bf16 %v2641, %v2639
    %s2651 = scalar_lea.vmem [#allocation8], 16
    %v2652 = vld [vmem:[%s2651] sm:$0xf]
    %v2653 = vld [vmem:[%s2651 + $0x4] sm:$0xf]
    %v2654 = vld [vmem:[%s2651 + $0x8] sm:$0xf]
    %v2655 = vld [vmem:[%s2651 + $0xc] sm:$0xf]
    %v2660 = vunpack.c.l.b16 %v2652
    %v2661 = vunpack.c.l.b16 %v2653
    %v2662 = vunpack.c.l.b16 %v2654
    %v2663 = vunpack.c.l.b16 %v2655
    %v2664 = vpack.c.b16 %v2661, %v2660
    %v2665 = vpack.c.b16 %v2663, %v2662
    %v2669 = vsel %vm213, %v2643, 0
    %v2672 = vsel %vm213, %v2644, 0
    %v2675 = vsel %vm213, %v2645, 0
    %v2678 = vsel %vm213, %v2646, 0
    %v2681 = vsel %vm213, %v2647, 0
    %v2684 = vsel %vm213, %v2648, 0
    %v2687 = vsel %vm213, %v2649, 0
    %v2690 = vsel %vm213, %v2650, 0
    %2692 = vmatpush.bf16.msra.mxu0 0
    %2693 = vmatpush.bf16.msra.mxu0 0
    %2694 = vmatpush.bf16.msra.mxu0 0
    %2695 = vmatpush.bf16.msra.mxu0 0
    %2696 = vmatpush.bf16.msra.mxu0 0
    %2697 = vmatpush.bf16.msra.mxu0 0
    %2698 = vmatpush.bf16.msra.mxu0 %v2665
    %2699 = vmatpush.bf16.msra.mxu0 %v2664
    %2700 = vmatmul.bf16.gmra.mxu0 %v2669
    %v2701 = vpop.f32.mrf.mxu0
    %v2702 = vadd.f32 0.0, %v2701
    %v2703 = vpop.f32.mrf.mxu0
    %v2704 = vadd.f32 0.0, %v2703
    %2705 = vmatmul.bf16.gmra.mxu0 %v2672
    %v2706 = vpop.f32.mrf.mxu0
    %v2707 = vadd.f32 0.0, %v2706
    %v2708 = vpop.f32.mrf.mxu0
    %v2709 = vadd.f32 0.0, %v2708
    %2710 = vmatmul.bf16.gmra.mxu0 %v2675
    %v2711 = vpop.f32.mrf.mxu0
    %v2712 = vadd.f32 0.0, %v2711
    %v2713 = vpop.f32.mrf.mxu0
    %v2714 = vadd.f32 0.0, %v2713
    %2715 = vmatmul.bf16.gmra.mxu0 %v2678
    %v2716 = vpop.f32.mrf.mxu0
    %v2717 = vadd.f32 0.0, %v2716
    %v2718 = vpop.f32.mrf.mxu0
    %v2719 = vadd.f32 0.0, %v2718
    %2720 = vmatmul.bf16.gmra.mxu0 %v2681
    %v2721 = vpop.f32.mrf.mxu0
    %v2722 = vadd.f32 0.0, %v2721
    %v2723 = vpop.f32.mrf.mxu0
    %v2724 = vadd.f32 0.0, %v2723
    %2725 = vmatmul.bf16.gmra.mxu0 %v2684
    %v2726 = vpop.f32.mrf.mxu0
    %v2727 = vadd.f32 0.0, %v2726
    %v2728 = vpop.f32.mrf.mxu0
    %v2729 = vadd.f32 0.0, %v2728
    %2730 = vmatmul.bf16.gmra.mxu0 %v2687
    %v2731 = vpop.f32.mrf.mxu0
    %v2732 = vadd.f32 0.0, %v2731
    %v2733 = vpop.f32.mrf.mxu0
    %v2734 = vadd.f32 0.0, %v2733
    %2735 = vmatmul.bf16.gmra.mxu0 %v2690
    %v2736 = vpop.f32.mrf.mxu0
    %v2737 = vadd.f32 0.0, %v2736
    %v2738 = vpop.f32.mrf.mxu0
    %v2739 = vadd.f32 0.0, %v2738
    %2740 = vdwg.mxu0
    %v2741 = vadd.f32 %v1725, %v2702
    %v2742 = vadd.f32 %v1726, %v2704
    %v2743 = vadd.f32 %v1727, %v2707
    %v2744 = vadd.f32 %v1728, %v2709
    %v2745 = vadd.f32 %v1729, %v2712
    %v2746 = vadd.f32 %v1730, %v2714
    %v2747 = vadd.f32 %v1731, %v2717
    %v2748 = vadd.f32 %v1732, %v2719
    %v2749 = vadd.f32 %v1733, %v2722
    %v2750 = vadd.f32 %v1734, %v2724
    %v2751 = vadd.f32 %v1735, %v2727
    %v2752 = vadd.f32 %v1736, %v2729
    %v2753 = vadd.f32 %v1737, %v2732
    %v2754 = vadd.f32 %v1738, %v2734
    %v2755 = vadd.f32 %v1739, %v2737
    %v2756 = vadd.f32 %v1740, %v2739
    %s2757 = scalar_lea.vmem %s5, 32
    %v2758 = vld [vmem:[%s2757] sm:$0xf]
    %v2759 = vld [vmem:[%s2757 + $0x4] sm:$0xf]
    %v2760 = vld [vmem:[%s2757 + $0x8] sm:$0xf]
    %v2761 = vld [vmem:[%s2757 + $0xc] sm:$0xf]
    %v2766 = vunpack.c.l.b16 %v2758
    %v2767 = vunpack.c.l.b16 %v2759
    %v2768 = vunpack.c.l.b16 %v2760
    %v2769 = vunpack.c.l.b16 %v2761
    %v2770 = vpack.c.b16 %v2767, %v2766
    %v2771 = vpack.c.b16 %v2769, %v2768
    %2774 = vmatpush.bf16.msra.mxu0 0
    %2775 = vmatpush.bf16.msra.mxu0 0
    %2776 = vmatpush.bf16.msra.mxu0 0
    %2777 = vmatpush.bf16.msra.mxu0 0
    %2778 = vmatpush.bf16.msra.mxu0 0
    %2779 = vmatpush.bf16.msra.mxu0 0
    %2780 = vmatpush.bf16.msra.mxu0 %v2771
    %2781 = vmatpush.bf16.msra.mxu0 %v2770
    %2782 = vmatmul.bf16.gmra.mxu0 %v718
    %v2783 = vpop.f32.mrf.mxu0
    %v2784 = vadd.f32 0.0, %v2783
    %v2785 = vpop.f32.mrf.mxu0
    %v2786 = vadd.f32 0.0, %v2785
    %2787 = vmatmul.bf16.gmra.mxu0 %v721
    %v2788 = vpop.f32.mrf.mxu0
    %v2789 = vadd.f32 0.0, %v2788
    %v2790 = vpop.f32.mrf.mxu0
    %v2791 = vadd.f32 0.0, %v2790
    %2792 = vmatmul.bf16.gmra.mxu0 %v724
    %v2793 = vpop.f32.mrf.mxu0
    %v2794 = vadd.f32 0.0, %v2793
    %v2795 = vpop.f32.mrf.mxu0
    %v2796 = vadd.f32 0.0, %v2795
    %2797 = vmatmul.bf16.gmra.mxu0 %v727
    %v2798 = vpop.f32.mrf.mxu0
    %v2799 = vadd.f32 0.0, %v2798
    %v2800 = vpop.f32.mrf.mxu0
    %v2801 = vadd.f32 0.0, %v2800
    %2802 = vmatmul.bf16.gmra.mxu0 %v730
    %v2803 = vpop.f32.mrf.mxu0
    %v2804 = vadd.f32 0.0, %v2803
    %v2805 = vpop.f32.mrf.mxu0
    %v2806 = vadd.f32 0.0, %v2805
    %2807 = vmatmul.bf16.gmra.mxu0 %v733
    %v2808 = vpop.f32.mrf.mxu0
    %v2809 = vadd.f32 0.0, %v2808
    %v2810 = vpop.f32.mrf.mxu0
    %v2811 = vadd.f32 0.0, %v2810
    %2812 = vmatmul.bf16.gmra.mxu0 %v736
    %v2813 = vpop.f32.mrf.mxu0
    %v2814 = vadd.f32 0.0, %v2813
    %v2815 = vpop.f32.mrf.mxu0
    %v2816 = vadd.f32 0.0, %v2815
    %2817 = vmatmul.bf16.gmra.mxu0 %v739
    %v2818 = vpop.f32.mrf.mxu0
    %v2819 = vadd.f32 0.0, %v2818
    %v2820 = vpop.f32.mrf.mxu0
    %v2821 = vadd.f32 0.0, %v2820
    %2822 = vdwg.mxu0
    %v2823 = vpack.c.bf16 %v2784, %v2784
    %v2824 = vpack.c.bf16 %v2786, %v2786
    %v2825 = vpack.c.bf16 %v2789, %v2789
    %v2826 = vpack.c.bf16 %v2791, %v2791
    %v2827 = vpack.c.bf16 %v2794, %v2794
    %v2828 = vpack.c.bf16 %v2796, %v2796
    %v2829 = vpack.c.bf16 %v2799, %v2799
    %v2830 = vpack.c.bf16 %v2801, %v2801
    %v2831 = vpack.c.bf16 %v2804, %v2804
    %v2832 = vpack.c.bf16 %v2806, %v2806
    %v2833 = vpack.c.bf16 %v2809, %v2809
    %v2834 = vpack.c.bf16 %v2811, %v2811
    %v2835 = vpack.c.bf16 %v2814, %v2814
    %v2836 = vpack.c.bf16 %v2816, %v2816
    %v2837 = vpack.c.bf16 %v2819, %v2819
    %v2838 = vpack.c.bf16 %v2821, %v2821
    %s2839 = scalar_lea.vmem [#allocation5], 32
    %v2840 = vld [vmem:[%s2839] sm:$0xf]
    %v2841 = vld [vmem:[%s2839 + $0x4] sm:$0xf]
    %v2842 = vld [vmem:[%s2839 + $0x8] sm:$0xf]
    %v2843 = vld [vmem:[%s2839 + $0xc] sm:$0xf]
    %v2848 = vunpack.c.l.b16 %v2840
    %v2849 = vunpack.c.l.b16 %v2841
    %v2850 = vunpack.c.l.b16 %v2842
    %v2851 = vunpack.c.l.b16 %v2843
    %v2852 = vpack.c.b16 %v2849, %v2848
    %v2853 = vpack.c.b16 %v2851, %v2850
    %2856 = vmatpush.bf16.msra.mxu0 0
    %2857 = vmatpush.bf16.msra.mxu0 0
    %2858 = vmatpush.bf16.msra.mxu0 0
    %2859 = vmatpush.bf16.msra.mxu0 0
    %2860 = vmatpush.bf16.msra.mxu0 0
    %2861 = vmatpush.bf16.msra.mxu0 0
    %2862 = vmatpush.bf16.msra.mxu0 %v2853
    %2863 = vmatpush.bf16.msra.mxu0 %v2852
    %2864 = vmatmul.bf16.gmra.mxu0 %v718
    %v2865 = vpop.f32.mrf.mxu0
    %v2866 = vadd.f32 0.0, %v2865
    %v2867 = vpop.f32.mrf.mxu0
    %v2868 = vadd.f32 0.0, %v2867
    %2869 = vmatmul.bf16.gmra.mxu0 %v721
    %v2870 = vpop.f32.mrf.mxu0
    %v2871 = vadd.f32 0.0, %v2870
    %v2872 = vpop.f32.mrf.mxu0
    %v2873 = vadd.f32 0.0, %v2872
    %2874 = vmatmul.bf16.gmra.mxu0 %v724
    %v2875 = vpop.f32.mrf.mxu0
    %v2876 = vadd.f32 0.0, %v2875
    %v2877 = vpop.f32.mrf.mxu0
    %v2878 = vadd.f32 0.0, %v2877
    %2879 = vmatmul.bf16.gmra.mxu0 %v727
    %v2880 = vpop.f32.mrf.mxu0
    %v2881 = vadd.f32 0.0, %v2880
    %v2882 = vpop.f32.mrf.mxu0
    %v2883 = vadd.f32 0.0, %v2882
    %2884 = vmatmul.bf16.gmra.mxu0 %v730
    %v2885 = vpop.f32.mrf.mxu0
    %v2886 = vadd.f32 0.0, %v2885
    %v2887 = vpop.f32.mrf.mxu0
    %v2888 = vadd.f32 0.0, %v2887
    %2889 = vmatmul.bf16.gmra.mxu0 %v733
    %v2890 = vpop.f32.mrf.mxu0
    %v2891 = vadd.f32 0.0, %v2890
    %v2892 = vpop.f32.mrf.mxu0
    %v2893 = vadd.f32 0.0, %v2892
    %2894 = vmatmul.bf16.gmra.mxu0 %v736
    %v2895 = vpop.f32.mrf.mxu0
    %v2896 = vadd.f32 0.0, %v2895
    %v2897 = vpop.f32.mrf.mxu0
    %v2898 = vadd.f32 0.0, %v2897
    %2899 = vmatmul.bf16.gmra.mxu0 %v739
    %v2900 = vpop.f32.mrf.mxu0
    %v2901 = vadd.f32 0.0, %v2900
    %v2902 = vpop.f32.mrf.mxu0
    %v2903 = vadd.f32 0.0, %v2902
    %2904 = vdwg.mxu0
    %v2905 = vpack.c.bf16 %v2866, %v2866
    %v2906 = vpack.c.bf16 %v2868, %v2868
    %v2907 = vpack.c.bf16 %v2871, %v2871
    %v2908 = vpack.c.bf16 %v2873, %v2873
    %v2909 = vpack.c.bf16 %v2876, %v2876
    %v2910 = vpack.c.bf16 %v2878, %v2878
    %v2911 = vpack.c.bf16 %v2881, %v2881
    %v2912 = vpack.c.bf16 %v2883, %v2883
    %v2913 = vpack.c.bf16 %v2886, %v2886
    %v2914 = vpack.c.bf16 %v2888, %v2888
    %v2915 = vpack.c.bf16 %v2891, %v2891
    %v2916 = vpack.c.bf16 %v2893, %v2893
    %v2917 = vpack.c.bf16 %v2896, %v2896
    %v2918 = vpack.c.bf16 %v2898, %v2898
    %v2919 = vpack.c.bf16 %v2901, %v2901
    %v2920 = vpack.c.bf16 %v2903, %v2903
    %s2921 = scalar_lea.vmem [#allocation7], 32
    %v2922 = vld [vmem:[%s2921] sm:$0xf]
    %v2923 = vld [vmem:[%s2921 + $0x4] sm:$0xf]
    %v2924 = vld [vmem:[%s2921 + $0x8] sm:$0xf]
    %v2925 = vld [vmem:[%s2921 + $0xc] sm:$0xf]
    %v2930 = vunpack.c.l.b16 %v2922
    %v2931 = vunpack.c.l.b16 %v2923
    %v2932 = vunpack.c.l.b16 %v2924
    %v2933 = vunpack.c.l.b16 %v2925
    %v2934 = vpack.c.b16 %v2931, %v2930
    %v2935 = vpack.c.b16 %v2933, %v2932
    %2938 = vmatpush.bf16.msra.mxu0 0
    %2939 = vmatpush.bf16.msra.mxu0 0
    %2940 = vmatpush.bf16.msra.mxu0 0
    %2941 = vmatpush.bf16.msra.mxu0 0
    %2942 = vmatpush.bf16.msra.mxu0 0
    %2943 = vmatpush.bf16.msra.mxu0 0
    %2944 = vmatpush.bf16.msra.mxu0 %v2935
    %2945 = vmatpush.bf16.msra.mxu0 %v2934
    %2946 = vmatmul.bf16.gmra.mxu0 %v718
    %v2947 = vpop.f32.mrf.mxu0
    %v2948 = vadd.f32 0.0, %v2947
    %v2949 = vpop.f32.mrf.mxu0
    %v2950 = vadd.f32 0.0, %v2949
    %2951 = vmatmul.bf16.gmra.mxu0 %v721
    %v2952 = vpop.f32.mrf.mxu0
    %v2953 = vadd.f32 0.0, %v2952
    %v2954 = vpop.f32.mrf.mxu0
    %v2955 = vadd.f32 0.0, %v2954
    %2956 = vmatmul.bf16.gmra.mxu0 %v724
    %v2957 = vpop.f32.mrf.mxu0
    %v2958 = vadd.f32 0.0, %v2957
    %v2959 = vpop.f32.mrf.mxu0
    %v2960 = vadd.f32 0.0, %v2959
    %2961 = vmatmul.bf16.gmra.mxu0 %v727
    %v2962 = vpop.f32.mrf.mxu0
    %v2963 = vadd.f32 0.0, %v2962
    %v2964 = vpop.f32.mrf.mxu0
    %v2965 = vadd.f32 0.0, %v2964
    %2966 = vmatmul.bf16.gmra.mxu0 %v730
    %v2967 = vpop.f32.mrf.mxu0
    %v2968 = vadd.f32 0.0, %v2967
    %v2969 = vpop.f32.mrf.mxu0
    %v2970 = vadd.f32 0.0, %v2969
    %2971 = vmatmul.bf16.gmra.mxu0 %v733
    %v2972 = vpop.f32.mrf.mxu0
    %v2973 = vadd.f32 0.0, %v2972
    %v2974 = vpop.f32.mrf.mxu0
    %v2975 = vadd.f32 0.0, %v2974
    %2976 = vmatmul.bf16.gmra.mxu0 %v736
    %v2977 = vpop.f32.mrf.mxu0
    %v2978 = vadd.f32 0.0, %v2977
    %v2979 = vpop.f32.mrf.mxu0
    %v2980 = vadd.f32 0.0, %v2979
    %2981 = vmatmul.bf16.gmra.mxu0 %v739
    %v2982 = vpop.f32.mrf.mxu0
    %v2983 = vadd.f32 0.0, %v2982
    %v2984 = vpop.f32.mrf.mxu0
    %v2985 = vadd.f32 0.0, %v2984
    %2986 = vdwg.mxu0
    %v2987 = vpack.c.bf16 %v2948, %v2948
    %v2988 = vpack.c.bf16 %v2950, %v2950
    %v2989 = vpack.c.bf16 %v2953, %v2953
    %v2990 = vpack.c.bf16 %v2955, %v2955
    %v2991 = vpack.c.bf16 %v2958, %v2958
    %v2992 = vpack.c.bf16 %v2960, %v2960
    %v2993 = vpack.c.bf16 %v2963, %v2963
    %v2994 = vpack.c.bf16 %v2965, %v2965
    %v2995 = vpack.c.bf16 %v2968, %v2968
    %v2996 = vpack.c.bf16 %v2970, %v2970
    %v2997 = vpack.c.bf16 %v2973, %v2973
    %v2998 = vpack.c.bf16 %v2975, %v2975
    %v2999 = vpack.c.bf16 %v2978, %v2978
    %v3000 = vpack.c.bf16 %v2980, %v2980
    %v3001 = vpack.c.bf16 %v2983, %v2983
    %v3002 = vpack.c.bf16 %v2985, %v2985
    %v3005 = vunpack.c.l.b16 %v2823
    %v3006 = vunpack.c.l.b16 %v2824
    %v3007 = vpack.c.b16 %v3006, %v3005
    %v3010 = vunpack.c.l.b16 %v2905
    %v3011 = vunpack.c.l.b16 %v2906
    %v3012 = vpack.c.b16 %v3011, %v3010
    %v3014 = vsel %vm213, %v3007, 0
    %v3017 = vsel %vm213, %v3012, 0
    %3019 = vmatpush.bf16.xpose.msra.mxu0 0
    %3020 = vmatpush.bf16.xpose.msra.mxu0 0
    %3021 = vmatpush.bf16.xpose.msra.mxu0 0
    %3022 = vmatpush.bf16.xpose.msra.mxu0 0
    %3023 = vmatpush.bf16.xpose.msra.mxu0 0
    %3024 = vmatpush.bf16.xpose.msra.mxu0 0
    %3025 = vmatpush.bf16.xpose.msra.mxu0 0
    %3026 = vmatpush.bf16.xpose.msra.mxu0 %v3017
    %3027 = vmatmul.bf16.gmra.mxu0 %v3014
    %v3028 = vpop.f32.mrf.mxu0
    %v3029 = vadd.f32 0.0, %v3028
    %v3030 = vpop.f32.mrf.mxu0
    %v3031 = vadd.f32 0.0, %v3030
    %3032 = vdwg.mxu0
    %v3035 = vunpack.c.l.b16 %v2825
    %v3036 = vunpack.c.l.b16 %v2826
    %v3037 = vpack.c.b16 %v3036, %v3035
    %v3040 = vunpack.c.l.b16 %v2907
    %v3041 = vunpack.c.l.b16 %v2908
    %v3042 = vpack.c.b16 %v3041, %v3040
    %v3044 = vsel %vm213, %v3037, 0
    %v3047 = vsel %vm213, %v3042, 0
    %3049 = vmatpush.bf16.xpose.msra.mxu0 0
    %3050 = vmatpush.bf16.xpose.msra.mxu0 0
    %3051 = vmatpush.bf16.xpose.msra.mxu0 0
    %3052 = vmatpush.bf16.xpose.msra.mxu0 0
    %3053 = vmatpush.bf16.xpose.msra.mxu0 0
    %3054 = vmatpush.bf16.xpose.msra.mxu0 0
    %3055 = vmatpush.bf16.xpose.msra.mxu0 0
    %3056 = vmatpush.bf16.xpose.msra.mxu0 %v3047
    %3057 = vmatmul.bf16.gmra.mxu0 %v3044
    %v3058 = vpop.f32.mrf.mxu0
    %v3059 = vadd.f32 0.0, %v3058
    %v3060 = vpop.f32.mrf.mxu0
    %v3061 = vadd.f32 0.0, %v3060
    %3062 = vdwg.mxu0
    %v3065 = vunpack.c.l.b16 %v2827
    %v3066 = vunpack.c.l.b16 %v2828
    %v3067 = vpack.c.b16 %v3066, %v3065
    %v3070 = vunpack.c.l.b16 %v2909
    %v3071 = vunpack.c.l.b16 %v2910
    %v3072 = vpack.c.b16 %v3071, %v3070
    %v3074 = vsel %vm213, %v3067, 0
    %v3077 = vsel %vm213, %v3072, 0
    %3079 = vmatpush.bf16.xpose.msra.mxu0 0
    %3080 = vmatpush.bf16.xpose.msra.mxu0 0
    %3081 = vmatpush.bf16.xpose.msra.mxu0 0
    %3082 = vmatpush.bf16.xpose.msra.mxu0 0
    %3083 = vmatpush.bf16.xpose.msra.mxu0 0
    %3084 = vmatpush.bf16.xpose.msra.mxu0 0
    %3085 = vmatpush.bf16.xpose.msra.mxu0 0
    %3086 = vmatpush.bf16.xpose.msra.mxu0 %v3077
    %3087 = vmatmul.bf16.gmra.mxu0 %v3074
    %v3088 = vpop.f32.mrf.mxu0
    %v3089 = vadd.f32 0.0, %v3088
    %v3090 = vpop.f32.mrf.mxu0
    %v3091 = vadd.f32 0.0, %v3090
    %3092 = vdwg.mxu0
    %v3095 = vunpack.c.l.b16 %v2829
    %v3096 = vunpack.c.l.b16 %v2830
    %v3097 = vpack.c.b16 %v3096, %v3095
    %v3100 = vunpack.c.l.b16 %v2911
    %v3101 = vunpack.c.l.b16 %v2912
    %v3102 = vpack.c.b16 %v3101, %v3100
    %v3104 = vsel %vm213, %v3097, 0
    %v3107 = vsel %vm213, %v3102, 0
    %3109 = vmatpush.bf16.xpose.msra.mxu0 0
    %3110 = vmatpush.bf16.xpose.msra.mxu0 0
    %3111 = vmatpush.bf16.xpose.msra.mxu0 0
    %3112 = vmatpush.bf16.xpose.msra.mxu0 0
    %3113 = vmatpush.bf16.xpose.msra.mxu0 0
    %3114 = vmatpush.bf16.xpose.msra.mxu0 0
    %3115 = vmatpush.bf16.xpose.msra.mxu0 0
    %3116 = vmatpush.bf16.xpose.msra.mxu0 %v3107
    %3117 = vmatmul.bf16.gmra.mxu0 %v3104
    %v3118 = vpop.f32.mrf.mxu0
    %v3119 = vadd.f32 0.0, %v3118
    %v3120 = vpop.f32.mrf.mxu0
    %v3121 = vadd.f32 0.0, %v3120
    %3122 = vdwg.mxu0
    %v3125 = vunpack.c.l.b16 %v2831
    %v3126 = vunpack.c.l.b16 %v2832
    %v3127 = vpack.c.b16 %v3126, %v3125
    %v3130 = vunpack.c.l.b16 %v2913
    %v3131 = vunpack.c.l.b16 %v2914
    %v3132 = vpack.c.b16 %v3131, %v3130
    %v3134 = vsel %vm213, %v3127, 0
    %v3137 = vsel %vm213, %v3132, 0
    %3139 = vmatpush.bf16.xpose.msra.mxu0 0
    %3140 = vmatpush.bf16.xpose.msra.mxu0 0
    %3141 = vmatpush.bf16.xpose.msra.mxu0 0
    %3142 = vmatpush.bf16.xpose.msra.mxu0 0
    %3143 = vmatpush.bf16.xpose.msra.mxu0 0
    %3144 = vmatpush.bf16.xpose.msra.mxu0 0
    %3145 = vmatpush.bf16.xpose.msra.mxu0 0
    %3146 = vmatpush.bf16.xpose.msra.mxu0 %v3137
    %3147 = vmatmul.bf16.gmra.mxu0 %v3134
    %v3148 = vpop.f32.mrf.mxu0
    %v3149 = vadd.f32 0.0, %v3148
    %v3150 = vpop.f32.mrf.mxu0
    %v3151 = vadd.f32 0.0, %v3150
    %3152 = vdwg.mxu0
    %v3155 = vunpack.c.l.b16 %v2833
    %v3156 = vunpack.c.l.b16 %v2834
    %v3157 = vpack.c.b16 %v3156, %v3155
    %v3160 = vunpack.c.l.b16 %v2915
    %v3161 = vunpack.c.l.b16 %v2916
    %v3162 = vpack.c.b16 %v3161, %v3160
    %v3164 = vsel %vm213, %v3157, 0
    %v3167 = vsel %vm213, %v3162, 0
    %3169 = vmatpush.bf16.xpose.msra.mxu0 0
    %3170 = vmatpush.bf16.xpose.msra.mxu0 0
    %3171 = vmatpush.bf16.xpose.msra.mxu0 0
    %3172 = vmatpush.bf16.xpose.msra.mxu0 0
    %3173 = vmatpush.bf16.xpose.msra.mxu0 0
    %3174 = vmatpush.bf16.xpose.msra.mxu0 0
    %3175 = vmatpush.bf16.xpose.msra.mxu0 0
    %3176 = vmatpush.bf16.xpose.msra.mxu0 %v3167
    %3177 = vmatmul.bf16.gmra.mxu0 %v3164
    %v3178 = vpop.f32.mrf.mxu0
    %v3179 = vadd.f32 0.0, %v3178
    %v3180 = vpop.f32.mrf.mxu0
    %v3181 = vadd.f32 0.0, %v3180
    %3182 = vdwg.mxu0
    %v3185 = vunpack.c.l.b16 %v2835
    %v3186 = vunpack.c.l.b16 %v2836
    %v3187 = vpack.c.b16 %v3186, %v3185
    %v3190 = vunpack.c.l.b16 %v2917
    %v3191 = vunpack.c.l.b16 %v2918
    %v3192 = vpack.c.b16 %v3191, %v3190
    %v3194 = vsel %vm213, %v3187, 0
    %v3197 = vsel %vm213, %v3192, 0
    %3199 = vmatpush.bf16.xpose.msra.mxu0 0
    %3200 = vmatpush.bf16.xpose.msra.mxu0 0
    %3201 = vmatpush.bf16.xpose.msra.mxu0 0
    %3202 = vmatpush.bf16.xpose.msra.mxu0 0
    %3203 = vmatpush.bf16.xpose.msra.mxu0 0
    %3204 = vmatpush.bf16.xpose.msra.mxu0 0
    %3205 = vmatpush.bf16.xpose.msra.mxu0 0
    %3206 = vmatpush.bf16.xpose.msra.mxu0 %v3197
    %3207 = vmatmul.bf16.gmra.mxu0 %v3194
    %v3208 = vpop.f32.mrf.mxu0
    %v3209 = vadd.f32 0.0, %v3208
    %v3210 = vpop.f32.mrf.mxu0
    %v3211 = vadd.f32 0.0, %v3210
    %3212 = vdwg.mxu0
    %v3215 = vunpack.c.l.b16 %v2837
    %v3216 = vunpack.c.l.b16 %v2838
    %v3217 = vpack.c.b16 %v3216, %v3215
    %v3220 = vunpack.c.l.b16 %v2919
    %v3221 = vunpack.c.l.b16 %v2920
    %v3222 = vpack.c.b16 %v3221, %v3220
    %v3224 = vsel %vm213, %v3217, 0
    %v3227 = vsel %vm213, %v3222, 0
    %3229 = vmatpush.bf16.xpose.msra.mxu0 0
    %3230 = vmatpush.bf16.xpose.msra.mxu0 0
    %3231 = vmatpush.bf16.xpose.msra.mxu0 0
    %3232 = vmatpush.bf16.xpose.msra.mxu0 0
    %3233 = vmatpush.bf16.xpose.msra.mxu0 0
    %3234 = vmatpush.bf16.xpose.msra.mxu0 0
    %3235 = vmatpush.bf16.xpose.msra.mxu0 0
    %3236 = vmatpush.bf16.xpose.msra.mxu0 %v3227
    %3237 = vmatmul.bf16.gmra.mxu0 %v3224
    %v3238 = vpop.f32.mrf.mxu0
    %v3239 = vadd.f32 0.0, %v3238
    %v3240 = vpop.f32.mrf.mxu0
    %v3241 = vadd.f32 0.0, %v3240
    %3242 = vdwg.mxu0
    %v3243 = vsel %vm1208, %v3029, -inf
    %3244 = vmax.xlane.f32.xlu0 %v3243
    %v3245 = vpop.xlane.xlu0 %3244
    %v3246 = vsel %vm1208, %v3031, -inf
    %3247 = vmax.xlane.f32.xlu0 %v3246
    %v3248 = vpop.xlane.xlu0 %3247
    %v3249 = vsel %vm1208, %v3059, -inf
    %3250 = vmax.xlane.f32.xlu0 %v3249
    %v3251 = vpop.xlane.xlu0 %3250
    %v3252 = vsel %vm1208, %v3061, -inf
    %3253 = vmax.xlane.f32.xlu0 %v3252
    %v3254 = vpop.xlane.xlu0 %3253
    %v3255 = vsel %vm1208, %v3089, -inf
    %3256 = vmax.xlane.f32.xlu0 %v3255
    %v3257 = vpop.xlane.xlu0 %3256
    %v3258 = vsel %vm1208, %v3091, -inf
    %3259 = vmax.xlane.f32.xlu0 %v3258
    %v3260 = vpop.xlane.xlu0 %3259
    %v3261 = vsel %vm1208, %v3119, -inf
    %3262 = vmax.xlane.f32.xlu0 %v3261
    %v3263 = vpop.xlane.xlu0 %3262
    %v3264 = vsel %vm1208, %v3121, -inf
    %3265 = vmax.xlane.f32.xlu0 %v3264
    %v3266 = vpop.xlane.xlu0 %3265
    %v3267 = vsel %vm1208, %v3149, -inf
    %3268 = vmax.xlane.f32.xlu0 %v3267
    %v3269 = vpop.xlane.xlu0 %3268
    %v3270 = vsel %vm1208, %v3151, -inf
    %3271 = vmax.xlane.f32.xlu0 %v3270
    %v3272 = vpop.xlane.xlu0 %3271
    %v3273 = vsel %vm1208, %v3179, -inf
    %3274 = vmax.xlane.f32.xlu0 %v3273
    %v3275 = vpop.xlane.xlu0 %3274
    %v3276 = vsel %vm1208, %v3181, -inf
    %3277 = vmax.xlane.f32.xlu0 %v3276
    %v3278 = vpop.xlane.xlu0 %3277
    %v3279 = vsel %vm1208, %v3209, -inf
    %3280 = vmax.xlane.f32.xlu0 %v3279
    %v3281 = vpop.xlane.xlu0 %3280
    %v3282 = vsel %vm1208, %v3211, -inf
    %3283 = vmax.xlane.f32.xlu0 %v3282
    %v3284 = vpop.xlane.xlu0 %3283
    %v3285 = vsel %vm1208, %v3239, -inf
    %3286 = vmax.xlane.f32.xlu0 %v3285
    %v3287 = vpop.xlane.xlu0 %3286
    %v3288 = vsel %vm1208, %v3241, -inf
    %3289 = vmax.xlane.f32.xlu0 %v3288
    %v3290 = vpop.xlane.xlu0 %3289
    %v3291 = vsub.f32 %v3029, %v3245
    %v3292 = vsub.f32 %v3031, %v3248
    %v3293 = vsub.f32 %v3059, %v3251
    %v3294 = vsub.f32 %v3061, %v3254
    %v3295 = vsub.f32 %v3089, %v3257
    %v3296 = vsub.f32 %v3091, %v3260
    %v3297 = vsub.f32 %v3119, %v3263
    %v3298 = vsub.f32 %v3121, %v3266
    %v3299 = vsub.f32 %v3149, %v3269
    %v3300 = vsub.f32 %v3151, %v3272
    %v3301 = vsub.f32 %v3179, %v3275
    %v3302 = vsub.f32 %v3181, %v3278
    %v3303 = vsub.f32 %v3209, %v3281
    %v3304 = vsub.f32 %v3211, %v3284
    %v3305 = vsub.f32 %v3239, %v3287
    %v3306 = vsub.f32 %v3241, %v3290
    %v3307 = vmul.f32 %v3291, 1.442695
    %v3308 = vpow.pop %v3307
    %v3309 = vmul.f32 %v3292, 1.442695
    %v3310 = vpow.pop %v3309
    %v3311 = vmul.f32 %v3293, 1.442695
    %v3312 = vpow.pop %v3311
    %v3313 = vmul.f32 %v3294, 1.442695
    %v3314 = vpow.pop %v3313
    %v3315 = vmul.f32 %v3295, 1.442695
    %v3316 = vpow.pop %v3315
    %v3317 = vmul.f32 %v3296, 1.442695
    %v3318 = vpow.pop %v3317
    %v3319 = vmul.f32 %v3297, 1.442695
    %v3320 = vpow.pop %v3319
    %v3321 = vmul.f32 %v3298, 1.442695
    %v3322 = vpow.pop %v3321
    %v3323 = vmul.f32 %v3299, 1.442695
    %v3324 = vpow.pop %v3323
    %v3325 = vmul.f32 %v3300, 1.442695
    %v3326 = vpow.pop %v3325
    %v3327 = vmul.f32 %v3301, 1.442695
    %v3328 = vpow.pop %v3327
    %v3329 = vmul.f32 %v3302, 1.442695
    %v3330 = vpow.pop %v3329
    %v3331 = vmul.f32 %v3303, 1.442695
    %v3332 = vpow.pop %v3331
    %v3333 = vmul.f32 %v3304, 1.442695
    %v3334 = vpow.pop %v3333
    %v3335 = vmul.f32 %v3305, 1.442695
    %v3336 = vpow.pop %v3335
    %v3337 = vmul.f32 %v3306, 1.442695
    %v3338 = vpow.pop %v3337
    %v3339 = vsel %vm1208, %v3308, 0.0
    %3340 = vadd.xlane.f32.xlu0 %v3339
    %v3341 = vpop.xlane.xlu0 %3340
    %v3342 = vsel %vm1208, %v3310, 0.0
    %3343 = vadd.xlane.f32.xlu0 %v3342
    %v3344 = vpop.xlane.xlu0 %3343
    %v3345 = vsel %vm1208, %v3312, 0.0
    %3346 = vadd.xlane.f32.xlu0 %v3345
    %v3347 = vpop.xlane.xlu0 %3346
    %v3348 = vsel %vm1208, %v3314, 0.0
    %3349 = vadd.xlane.f32.xlu0 %v3348
    %v3350 = vpop.xlane.xlu0 %3349
    %v3351 = vsel %vm1208, %v3316, 0.0
    %3352 = vadd.xlane.f32.xlu0 %v3351
    %v3353 = vpop.xlane.xlu0 %3352
    %v3354 = vsel %vm1208, %v3318, 0.0
    %3355 = vadd.xlane.f32.xlu0 %v3354
    %v3356 = vpop.xlane.xlu0 %3355
    %v3357 = vsel %vm1208, %v3320, 0.0
    %3358 = vadd.xlane.f32.xlu0 %v3357
    %v3359 = vpop.xlane.xlu0 %3358
    %v3360 = vsel %vm1208, %v3322, 0.0
    %3361 = vadd.xlane.f32.xlu0 %v3360
    %v3362 = vpop.xlane.xlu0 %3361
    %v3363 = vsel %vm1208, %v3324, 0.0
    %3364 = vadd.xlane.f32.xlu0 %v3363
    %v3365 = vpop.xlane.xlu0 %3364
    %v3366 = vsel %vm1208, %v3326, 0.0
    %3367 = vadd.xlane.f32.xlu0 %v3366
    %v3368 = vpop.xlane.xlu0 %3367
    %v3369 = vsel %vm1208, %v3328, 0.0
    %3370 = vadd.xlane.f32.xlu0 %v3369
    %v3371 = vpop.xlane.xlu0 %3370
    %v3372 = vsel %vm1208, %v3330, 0.0
    %3373 = vadd.xlane.f32.xlu0 %v3372
    %v3374 = vpop.xlane.xlu0 %3373
    %v3375 = vsel %vm1208, %v3332, 0.0
    %3376 = vadd.xlane.f32.xlu0 %v3375
    %v3377 = vpop.xlane.xlu0 %3376
    %v3378 = vsel %vm1208, %v3334, 0.0
    %3379 = vadd.xlane.f32.xlu0 %v3378
    %v3380 = vpop.xlane.xlu0 %3379
    %v3381 = vsel %vm1208, %v3336, 0.0
    %3382 = vadd.xlane.f32.xlu0 %v3381
    %v3383 = vpop.xlane.xlu0 %3382
    %v3384 = vsel %vm1208, %v3338, 0.0
    %3385 = vadd.xlane.f32.xlu0 %v3384
    %v3386 = vpop.xlane.xlu0 %3385
    %v3387 = vrcp.pop %v3341
    %v3388 = vrcp.pop %v3344
    %v3389 = vrcp.pop %v3347
    %v3390 = vrcp.pop %v3350
    %v3391 = vrcp.pop %v3353
    %v3392 = vrcp.pop %v3356
    %v3393 = vrcp.pop %v3359
    %v3394 = vrcp.pop %v3362
    %v3395 = vrcp.pop %v3365
    %v3396 = vrcp.pop %v3368
    %v3397 = vrcp.pop %v3371
    %v3398 = vrcp.pop %v3374
    %v3399 = vrcp.pop %v3377
    %v3400 = vrcp.pop %v3380
    %v3401 = vrcp.pop %v3383
    %v3402 = vrcp.pop %v3386
    %v3403 = vmul.f32 %v3308, %v3387
    %v3404 = vmul.f32 %v3310, %v3388
    %v3405 = vmul.f32 %v3312, %v3389
    %v3406 = vmul.f32 %v3314, %v3390
    %v3407 = vmul.f32 %v3316, %v3391
    %v3408 = vmul.f32 %v3318, %v3392
    %v3409 = vmul.f32 %v3320, %v3393
    %v3410 = vmul.f32 %v3322, %v3394
    %v3411 = vmul.f32 %v3324, %v3395
    %v3412 = vmul.f32 %v3326, %v3396
    %v3413 = vmul.f32 %v3328, %v3397
    %v3414 = vmul.f32 %v3330, %v3398
    %v3415 = vmul.f32 %v3332, %v3399
    %v3416 = vmul.f32 %v3334, %v3400
    %v3417 = vmul.f32 %v3336, %v3401
    %v3418 = vmul.f32 %v3338, %v3402
    %v3419 = vpack.c.bf16 %v3403, %v3403
    %v3420 = vpack.c.bf16 %v3404, %v3404
    %v3421 = vpack.c.bf16 %v3405, %v3405
    %v3422 = vpack.c.bf16 %v3406, %v3406
    %v3423 = vpack.c.bf16 %v3407, %v3407
    %v3424 = vpack.c.bf16 %v3408, %v3408
    %v3425 = vpack.c.bf16 %v3409, %v3409
    %v3426 = vpack.c.bf16 %v3410, %v3410
    %v3427 = vpack.c.bf16 %v3411, %v3411
    %v3428 = vpack.c.bf16 %v3412, %v3412
    %v3429 = vpack.c.bf16 %v3413, %v3413
    %v3430 = vpack.c.bf16 %v3414, %v3414
    %v3431 = vpack.c.bf16 %v3415, %v3415
    %v3432 = vpack.c.bf16 %v3416, %v3416
    %v3433 = vpack.c.bf16 %v3417, %v3417
    %v3434 = vpack.c.bf16 %v3418, %v3418
    %v3437 = vunpack.c.l.b16 %v3419
    %v3438 = vunpack.c.l.b16 %v3420
    %v3439 = vpack.c.b16 %v3438, %v3437
    %v3442 = vunpack.c.l.b16 %v2987
    %v3443 = vunpack.c.l.b16 %v2988
    %v3444 = vpack.c.b16 %v3443, %v3442
    %v3447 = vsel %vm1208, %v3439, 0
    %3449 = vmatpush.bf16.msra.mxu0 0
    %3450 = vmatpush.bf16.msra.mxu0 0
    %3451 = vmatpush.bf16.msra.mxu0 0
    %3452 = vmatpush.bf16.msra.mxu0 0
    %3453 = vmatpush.bf16.msra.mxu0 0
    %3454 = vmatpush.bf16.msra.mxu0 0
    %3455 = vmatpush.bf16.msra.mxu0 0
    %3456 = vmatpush.bf16.msra.mxu0 %v3444
    %3457 = vmatmul.bf16.gmra.mxu0 %v3447
    %v3458 = vpop.f32.mrf.mxu0
    %v3459 = vadd.f32 0.0, %v3458
    %v3460 = vpop.f32.mrf.mxu0
    %v3461 = vadd.f32 0.0, %v3460
    %3462 = vdwg.mxu0
    %v3465 = vunpack.c.l.b16 %v3421
    %v3466 = vunpack.c.l.b16 %v3422
    %v3467 = vpack.c.b16 %v3466, %v3465
    %v3470 = vunpack.c.l.b16 %v2989
    %v3471 = vunpack.c.l.b16 %v2990
    %v3472 = vpack.c.b16 %v3471, %v3470
    %v3475 = vsel %vm1208, %v3467, 0
    %3477 = vmatpush.bf16.msra.mxu0 0
    %3478 = vmatpush.bf16.msra.mxu0 0
    %3479 = vmatpush.bf16.msra.mxu0 0
    %3480 = vmatpush.bf16.msra.mxu0 0
    %3481 = vmatpush.bf16.msra.mxu0 0
    %3482 = vmatpush.bf16.msra.mxu0 0
    %3483 = vmatpush.bf16.msra.mxu0 0
    %3484 = vmatpush.bf16.msra.mxu0 %v3472
    %3485 = vmatmul.bf16.gmra.mxu0 %v3475
    %v3486 = vpop.f32.mrf.mxu0
    %v3487 = vadd.f32 0.0, %v3486
    %v3488 = vpop.f32.mrf.mxu0
    %v3489 = vadd.f32 0.0, %v3488
    %3490 = vdwg.mxu0
    %v3493 = vunpack.c.l.b16 %v3423
    %v3494 = vunpack.c.l.b16 %v3424
    %v3495 = vpack.c.b16 %v3494, %v3493
    %v3498 = vunpack.c.l.b16 %v2991
    %v3499 = vunpack.c.l.b16 %v2992
    %v3500 = vpack.c.b16 %v3499, %v3498
    %v3503 = vsel %vm1208, %v3495, 0
    %3505 = vmatpush.bf16.msra.mxu0 0
    %3506 = vmatpush.bf16.msra.mxu0 0
    %3507 = vmatpush.bf16.msra.mxu0 0
    %3508 = vmatpush.bf16.msra.mxu0 0
    %3509 = vmatpush.bf16.msra.mxu0 0
    %3510 = vmatpush.bf16.msra.mxu0 0
    %3511 = vmatpush.bf16.msra.mxu0 0
    %3512 = vmatpush.bf16.msra.mxu0 %v3500
    %3513 = vmatmul.bf16.gmra.mxu0 %v3503
    %v3514 = vpop.f32.mrf.mxu0
    %v3515 = vadd.f32 0.0, %v3514
    %v3516 = vpop.f32.mrf.mxu0
    %v3517 = vadd.f32 0.0, %v3516
    %3518 = vdwg.mxu0
    %v3521 = vunpack.c.l.b16 %v3425
    %v3522 = vunpack.c.l.b16 %v3426
    %v3523 = vpack.c.b16 %v3522, %v3521
    %v3526 = vunpack.c.l.b16 %v2993
    %v3527 = vunpack.c.l.b16 %v2994
    %v3528 = vpack.c.b16 %v3527, %v3526
    %v3531 = vsel %vm1208, %v3523, 0
    %3533 = vmatpush.bf16.msra.mxu0 0
    %3534 = vmatpush.bf16.msra.mxu0 0
    %3535 = vmatpush.bf16.msra.mxu0 0
    %3536 = vmatpush.bf16.msra.mxu0 0
    %3537 = vmatpush.bf16.msra.mxu0 0
    %3538 = vmatpush.bf16.msra.mxu0 0
    %3539 = vmatpush.bf16.msra.mxu0 0
    %3540 = vmatpush.bf16.msra.mxu0 %v3528
    %3541 = vmatmul.bf16.gmra.mxu0 %v3531
    %v3542 = vpop.f32.mrf.mxu0
    %v3543 = vadd.f32 0.0, %v3542
    %v3544 = vpop.f32.mrf.mxu0
    %v3545 = vadd.f32 0.0, %v3544
    %3546 = vdwg.mxu0
    %v3549 = vunpack.c.l.b16 %v3427
    %v3550 = vunpack.c.l.b16 %v3428
    %v3551 = vpack.c.b16 %v3550, %v3549
    %v3554 = vunpack.c.l.b16 %v2995
    %v3555 = vunpack.c.l.b16 %v2996
    %v3556 = vpack.c.b16 %v3555, %v3554
    %v3559 = vsel %vm1208, %v3551, 0
    %3561 = vmatpush.bf16.msra.mxu0 0
    %3562 = vmatpush.bf16.msra.mxu0 0
    %3563 = vmatpush.bf16.msra.mxu0 0
    %3564 = vmatpush.bf16.msra.mxu0 0
    %3565 = vmatpush.bf16.msra.mxu0 0
    %3566 = vmatpush.bf16.msra.mxu0 0
    %3567 = vmatpush.bf16.msra.mxu0 0
    %3568 = vmatpush.bf16.msra.mxu0 %v3556
    %3569 = vmatmul.bf16.gmra.mxu0 %v3559
    %v3570 = vpop.f32.mrf.mxu0
    %v3571 = vadd.f32 0.0, %v3570
    %v3572 = vpop.f32.mrf.mxu0
    %v3573 = vadd.f32 0.0, %v3572
    %3574 = vdwg.mxu0
    %v3577 = vunpack.c.l.b16 %v3429
    %v3578 = vunpack.c.l.b16 %v3430
    %v3579 = vpack.c.b16 %v3578, %v3577
    %v3582 = vunpack.c.l.b16 %v2997
    %v3583 = vunpack.c.l.b16 %v2998
    %v3584 = vpack.c.b16 %v3583, %v3582
    %v3587 = vsel %vm1208, %v3579, 0
    %3589 = vmatpush.bf16.msra.mxu0 0
    %3590 = vmatpush.bf16.msra.mxu0 0
    %3591 = vmatpush.bf16.msra.mxu0 0
    %3592 = vmatpush.bf16.msra.mxu0 0
    %3593 = vmatpush.bf16.msra.mxu0 0
    %3594 = vmatpush.bf16.msra.mxu0 0
    %3595 = vmatpush.bf16.msra.mxu0 0
    %3596 = vmatpush.bf16.msra.mxu0 %v3584
    %3597 = vmatmul.bf16.gmra.mxu0 %v3587
    %v3598 = vpop.f32.mrf.mxu0
    %v3599 = vadd.f32 0.0, %v3598
    %v3600 = vpop.f32.mrf.mxu0
    %v3601 = vadd.f32 0.0, %v3600
    %3602 = vdwg.mxu0
    %v3605 = vunpack.c.l.b16 %v3431
    %v3606 = vunpack.c.l.b16 %v3432
    %v3607 = vpack.c.b16 %v3606, %v3605
    %v3610 = vunpack.c.l.b16 %v2999
    %v3611 = vunpack.c.l.b16 %v3000
    %v3612 = vpack.c.b16 %v3611, %v3610
    %v3615 = vsel %vm1208, %v3607, 0
    %3617 = vmatpush.bf16.msra.mxu0 0
    %3618 = vmatpush.bf16.msra.mxu0 0
    %3619 = vmatpush.bf16.msra.mxu0 0
    %3620 = vmatpush.bf16.msra.mxu0 0
    %3621 = vmatpush.bf16.msra.mxu0 0
    %3622 = vmatpush.bf16.msra.mxu0 0
    %3623 = vmatpush.bf16.msra.mxu0 0
    %3624 = vmatpush.bf16.msra.mxu0 %v3612
    %3625 = vmatmul.bf16.gmra.mxu0 %v3615
    %v3626 = vpop.f32.mrf.mxu0
    %v3627 = vadd.f32 0.0, %v3626
    %v3628 = vpop.f32.mrf.mxu0
    %v3629 = vadd.f32 0.0, %v3628
    %3630 = vdwg.mxu0
    %v3633 = vunpack.c.l.b16 %v3433
    %v3634 = vunpack.c.l.b16 %v3434
    %v3635 = vpack.c.b16 %v3634, %v3633
    %v3638 = vunpack.c.l.b16 %v3001
    %v3639 = vunpack.c.l.b16 %v3002
    %v3640 = vpack.c.b16 %v3639, %v3638
    %v3643 = vsel %vm1208, %v3635, 0
    %3645 = vmatpush.bf16.msra.mxu0 0
    %3646 = vmatpush.bf16.msra.mxu0 0
    %3647 = vmatpush.bf16.msra.mxu0 0
    %3648 = vmatpush.bf16.msra.mxu0 0
    %3649 = vmatpush.bf16.msra.mxu0 0
    %3650 = vmatpush.bf16.msra.mxu0 0
    %3651 = vmatpush.bf16.msra.mxu0 0
    %3652 = vmatpush.bf16.msra.mxu0 %v3640
    %3653 = vmatmul.bf16.gmra.mxu0 %v3643
    %v3654 = vpop.f32.mrf.mxu0
    %v3655 = vadd.f32 0.0, %v3654
    %v3656 = vpop.f32.mrf.mxu0
    %v3657 = vadd.f32 0.0, %v3656
    %3658 = vdwg.mxu0
    %v3659 = vpack.c.bf16 %v3461, %v3459
    %v3660 = vpack.c.bf16 %v3489, %v3487
    %v3661 = vpack.c.bf16 %v3517, %v3515
    %v3662 = vpack.c.bf16 %v3545, %v3543
    %v3663 = vpack.c.bf16 %v3573, %v3571
    %v3664 = vpack.c.bf16 %v3601, %v3599
    %v3665 = vpack.c.bf16 %v3629, %v3627
    %v3666 = vpack.c.bf16 %v3657, %v3655
    %s3667 = scalar_lea.vmem [#allocation8], 32
    %v3668 = vld [vmem:[%s3667] sm:$0xf]
    %v3669 = vld [vmem:[%s3667 + $0x4] sm:$0xf]
    %v3670 = vld [vmem:[%s3667 + $0x8] sm:$0xf]
    %v3671 = vld [vmem:[%s3667 + $0xc] sm:$0xf]
    %v3676 = vunpack.c.l.b16 %v3668
    %v3677 = vunpack.c.l.b16 %v3669
    %v3678 = vunpack.c.l.b16 %v3670
    %v3679 = vunpack.c.l.b16 %v3671
    %v3680 = vpack.c.b16 %v3677, %v3676
    %v3681 = vpack.c.b16 %v3679, %v3678
    %v3685 = vsel %vm213, %v3659, 0
    %v3688 = vsel %vm213, %v3660, 0
    %v3691 = vsel %vm213, %v3661, 0
    %v3694 = vsel %vm213, %v3662, 0
    %v3697 = vsel %vm213, %v3663, 0
    %v3700 = vsel %vm213, %v3664, 0
    %v3703 = vsel %vm213, %v3665, 0
    %v3706 = vsel %vm213, %v3666, 0
    %3708 = vmatpush.bf16.msra.mxu0 0
    %3709 = vmatpush.bf16.msra.mxu0 0
    %3710 = vmatpush.bf16.msra.mxu0 0
    %3711 = vmatpush.bf16.msra.mxu0 0
    %3712 = vmatpush.bf16.msra.mxu0 0
    %3713 = vmatpush.bf16.msra.mxu0 0
    %3714 = vmatpush.bf16.msra.mxu0 %v3681
    %3715 = vmatpush.bf16.msra.mxu0 %v3680
    %3716 = vmatmul.bf16.gmra.mxu0 %v3685
    %v3717 = vpop.f32.mrf.mxu0
    %v3718 = vadd.f32 0.0, %v3717
    %v3719 = vpop.f32.mrf.mxu0
    %v3720 = vadd.f32 0.0, %v3719
    %3721 = vmatmul.bf16.gmra.mxu0 %v3688
    %v3722 = vpop.f32.mrf.mxu0
    %v3723 = vadd.f32 0.0, %v3722
    %v3724 = vpop.f32.mrf.mxu0
    %v3725 = vadd.f32 0.0, %v3724
    %3726 = vmatmul.bf16.gmra.mxu0 %v3691
    %v3727 = vpop.f32.mrf.mxu0
    %v3728 = vadd.f32 0.0, %v3727
    %v3729 = vpop.f32.mrf.mxu0
    %v3730 = vadd.f32 0.0, %v3729
    %3731 = vmatmul.bf16.gmra.mxu0 %v3694
    %v3732 = vpop.f32.mrf.mxu0
    %v3733 = vadd.f32 0.0, %v3732
    %v3734 = vpop.f32.mrf.mxu0
    %v3735 = vadd.f32 0.0, %v3734
    %3736 = vmatmul.bf16.gmra.mxu0 %v3697
    %v3737 = vpop.f32.mrf.mxu0
    %v3738 = vadd.f32 0.0, %v3737
    %v3739 = vpop.f32.mrf.mxu0
    %v3740 = vadd.f32 0.0, %v3739
    %3741 = vmatmul.bf16.gmra.mxu0 %v3700
    %v3742 = vpop.f32.mrf.mxu0
    %v3743 = vadd.f32 0.0, %v3742
    %v3744 = vpop.f32.mrf.mxu0
    %v3745 = vadd.f32 0.0, %v3744
    %3746 = vmatmul.bf16.gmra.mxu0 %v3703
    %v3747 = vpop.f32.mrf.mxu0
    %v3748 = vadd.f32 0.0, %v3747
    %v3749 = vpop.f32.mrf.mxu0
    %v3750 = vadd.f32 0.0, %v3749
    %3751 = vmatmul.bf16.gmra.mxu0 %v3706
    %v3752 = vpop.f32.mrf.mxu0
    %v3753 = vadd.f32 0.0, %v3752
    %v3754 = vpop.f32.mrf.mxu0
    %v3755 = vadd.f32 0.0, %v3754
    %3756 = vdwg.mxu0
    %v3757 = vadd.f32 %v2741, %v3718
    %v3758 = vadd.f32 %v2742, %v3720
    %v3759 = vadd.f32 %v2743, %v3723
    %v3760 = vadd.f32 %v2744, %v3725
    %v3761 = vadd.f32 %v2745, %v3728
    %v3762 = vadd.f32 %v2746, %v3730
    %v3763 = vadd.f32 %v2747, %v3733
    %v3764 = vadd.f32 %v2748, %v3735
    %v3765 = vadd.f32 %v2749, %v3738
    %v3766 = vadd.f32 %v2750, %v3740
    %v3767 = vadd.f32 %v2751, %v3743
    %v3768 = vadd.f32 %v2752, %v3745
    %v3769 = vadd.f32 %v2753, %v3748
    %v3770 = vadd.f32 %v2754, %v3750
    %v3771 = vadd.f32 %v2755, %v3753
    %v3772 = vadd.f32 %v2756, %v3755
    %s3773 = scalar_lea.vmem %s5, 48
    %v3774 = vld [vmem:[%s3773] sm:$0xf]
    %v3775 = vld [vmem:[%s3773 + $0x4] sm:$0xf]
    %v3776 = vld [vmem:[%s3773 + $0x8] sm:$0xf]
    %v3777 = vld [vmem:[%s3773 + $0xc] sm:$0xf]
    %v3782 = vunpack.c.l.b16 %v3774
    %v3783 = vunpack.c.l.b16 %v3775
    %v3784 = vunpack.c.l.b16 %v3776
    %v3785 = vunpack.c.l.b16 %v3777
    %v3786 = vpack.c.b16 %v3783, %v3782
    %v3787 = vpack.c.b16 %v3785, %v3784
    %3790 = vmatpush.bf16.msra.mxu0 0
    %3791 = vmatpush.bf16.msra.mxu0 0
    %3792 = vmatpush.bf16.msra.mxu0 0
    %3793 = vmatpush.bf16.msra.mxu0 0
    %3794 = vmatpush.bf16.msra.mxu0 0
    %3795 = vmatpush.bf16.msra.mxu0 0
    %3796 = vmatpush.bf16.msra.mxu0 %v3787
    %3797 = vmatpush.bf16.msra.mxu0 %v3786
    %3798 = vmatmul.bf16.gmra.mxu0 %v718
    %v3799 = vpop.f32.mrf.mxu0
    %v3800 = vadd.f32 0.0, %v3799
    %v3801 = vpop.f32.mrf.mxu0
    %v3802 = vadd.f32 0.0, %v3801
    %3803 = vmatmul.bf16.gmra.mxu0 %v721
    %v3804 = vpop.f32.mrf.mxu0
    %v3805 = vadd.f32 0.0, %v3804
    %v3806 = vpop.f32.mrf.mxu0
    %v3807 = vadd.f32 0.0, %v3806
    %3808 = vmatmul.bf16.gmra.mxu0 %v724
    %v3809 = vpop.f32.mrf.mxu0
    %v3810 = vadd.f32 0.0, %v3809
    %v3811 = vpop.f32.mrf.mxu0
    %v3812 = vadd.f32 0.0, %v3811
    %3813 = vmatmul.bf16.gmra.mxu0 %v727
    %v3814 = vpop.f32.mrf.mxu0
    %v3815 = vadd.f32 0.0, %v3814
    %v3816 = vpop.f32.mrf.mxu0
    %v3817 = vadd.f32 0.0, %v3816
    %3818 = vmatmul.bf16.gmra.mxu0 %v730
    %v3819 = vpop.f32.mrf.mxu0
    %v3820 = vadd.f32 0.0, %v3819
    %v3821 = vpop.f32.mrf.mxu0
    %v3822 = vadd.f32 0.0, %v3821
    %3823 = vmatmul.bf16.gmra.mxu0 %v733
    %v3824 = vpop.f32.mrf.mxu0
    %v3825 = vadd.f32 0.0, %v3824
    %v3826 = vpop.f32.mrf.mxu0
    %v3827 = vadd.f32 0.0, %v3826
    %3828 = vmatmul.bf16.gmra.mxu0 %v736
    %v3829 = vpop.f32.mrf.mxu0
    %v3830 = vadd.f32 0.0, %v3829
    %v3831 = vpop.f32.mrf.mxu0
    %v3832 = vadd.f32 0.0, %v3831
    %3833 = vmatmul.bf16.gmra.mxu0 %v739
    %v3834 = vpop.f32.mrf.mxu0
    %v3835 = vadd.f32 0.0, %v3834
    %v3836 = vpop.f32.mrf.mxu0
    %v3837 = vadd.f32 0.0, %v3836
    %3838 = vdwg.mxu0
    %v3839 = vpack.c.bf16 %v3800, %v3800
    %v3840 = vpack.c.bf16 %v3802, %v3802
    %v3841 = vpack.c.bf16 %v3805, %v3805
    %v3842 = vpack.c.bf16 %v3807, %v3807
    %v3843 = vpack.c.bf16 %v3810, %v3810
    %v3844 = vpack.c.bf16 %v3812, %v3812
    %v3845 = vpack.c.bf16 %v3815, %v3815
    %v3846 = vpack.c.bf16 %v3817, %v3817
    %v3847 = vpack.c.bf16 %v3820, %v3820
    %v3848 = vpack.c.bf16 %v3822, %v3822
    %v3849 = vpack.c.bf16 %v3825, %v3825
    %v3850 = vpack.c.bf16 %v3827, %v3827
    %v3851 = vpack.c.bf16 %v3830, %v3830
    %v3852 = vpack.c.bf16 %v3832, %v3832
    %v3853 = vpack.c.bf16 %v3835, %v3835
    %v3854 = vpack.c.bf16 %v3837, %v3837
    %s3855 = scalar_lea.vmem [#allocation5], 48
    %v3856 = vld [vmem:[%s3855] sm:$0xf]
    %v3857 = vld [vmem:[%s3855 + $0x4] sm:$0xf]
    %v3858 = vld [vmem:[%s3855 + $0x8] sm:$0xf]
    %v3859 = vld [vmem:[%s3855 + $0xc] sm:$0xf]
    %v3864 = vunpack.c.l.b16 %v3856
    %v3865 = vunpack.c.l.b16 %v3857
    %v3866 = vunpack.c.l.b16 %v3858
    %v3867 = vunpack.c.l.b16 %v3859
    %v3868 = vpack.c.b16 %v3865, %v3864
    %v3869 = vpack.c.b16 %v3867, %v3866
    %3872 = vmatpush.bf16.msra.mxu0 0
    %3873 = vmatpush.bf16.msra.mxu0 0
    %3874 = vmatpush.bf16.msra.mxu0 0
    %3875 = vmatpush.bf16.msra.mxu0 0
    %3876 = vmatpush.bf16.msra.mxu0 0
    %3877 = vmatpush.bf16.msra.mxu0 0
    %3878 = vmatpush.bf16.msra.mxu0 %v3869
    %3879 = vmatpush.bf16.msra.mxu0 %v3868
    %3880 = vmatmul.bf16.gmra.mxu0 %v718
    %v3881 = vpop.f32.mrf.mxu0
    %v3882 = vadd.f32 0.0, %v3881
    %v3883 = vpop.f32.mrf.mxu0
    %v3884 = vadd.f32 0.0, %v3883
    %3885 = vmatmul.bf16.gmra.mxu0 %v721
    %v3886 = vpop.f32.mrf.mxu0
    %v3887 = vadd.f32 0.0, %v3886
    %v3888 = vpop.f32.mrf.mxu0
    %v3889 = vadd.f32 0.0, %v3888
    %3890 = vmatmul.bf16.gmra.mxu0 %v724
    %v3891 = vpop.f32.mrf.mxu0
    %v3892 = vadd.f32 0.0, %v3891
    %v3893 = vpop.f32.mrf.mxu0
    %v3894 = vadd.f32 0.0, %v3893
    %3895 = vmatmul.bf16.gmra.mxu0 %v727
    %v3896 = vpop.f32.mrf.mxu0
    %v3897 = vadd.f32 0.0, %v3896
    %v3898 = vpop.f32.mrf.mxu0
    %v3899 = vadd.f32 0.0, %v3898
    %3900 = vmatmul.bf16.gmra.mxu0 %v730
    %v3901 = vpop.f32.mrf.mxu0
    %v3902 = vadd.f32 0.0, %v3901
    %v3903 = vpop.f32.mrf.mxu0
    %v3904 = vadd.f32 0.0, %v3903
    %3905 = vmatmul.bf16.gmra.mxu0 %v733
    %v3906 = vpop.f32.mrf.mxu0
    %v3907 = vadd.f32 0.0, %v3906
    %v3908 = vpop.f32.mrf.mxu0
    %v3909 = vadd.f32 0.0, %v3908
    %3910 = vmatmul.bf16.gmra.mxu0 %v736
    %v3911 = vpop.f32.mrf.mxu0
    %v3912 = vadd.f32 0.0, %v3911
    %v3913 = vpop.f32.mrf.mxu0
    %v3914 = vadd.f32 0.0, %v3913
    %3915 = vmatmul.bf16.gmra.mxu0 %v739
    %v3916 = vpop.f32.mrf.mxu0
    %v3917 = vadd.f32 0.0, %v3916
    %v3918 = vpop.f32.mrf.mxu0
    %v3919 = vadd.f32 0.0, %v3918
    %3920 = vdwg.mxu0
    %v3921 = vpack.c.bf16 %v3882, %v3882
    %v3922 = vpack.c.bf16 %v3884, %v3884
    %v3923 = vpack.c.bf16 %v3887, %v3887
    %v3924 = vpack.c.bf16 %v3889, %v3889
    %v3925 = vpack.c.bf16 %v3892, %v3892
    %v3926 = vpack.c.bf16 %v3894, %v3894
    %v3927 = vpack.c.bf16 %v3897, %v3897
    %v3928 = vpack.c.bf16 %v3899, %v3899
    %v3929 = vpack.c.bf16 %v3902, %v3902
    %v3930 = vpack.c.bf16 %v3904, %v3904
    %v3931 = vpack.c.bf16 %v3907, %v3907
    %v3932 = vpack.c.bf16 %v3909, %v3909
    %v3933 = vpack.c.bf16 %v3912, %v3912
    %v3934 = vpack.c.bf16 %v3914, %v3914
    %v3935 = vpack.c.bf16 %v3917, %v3917
    %v3936 = vpack.c.bf16 %v3919, %v3919
    %s3937 = scalar_lea.vmem [#allocation7], 48
    %v3938 = vld [vmem:[%s3937] sm:$0xf]
    %v3939 = vld [vmem:[%s3937 + $0x4] sm:$0xf]
    %v3940 = vld [vmem:[%s3937 + $0x8] sm:$0xf]
    %v3941 = vld [vmem:[%s3937 + $0xc] sm:$0xf]
    %v3946 = vunpack.c.l.b16 %v3938
    %v3947 = vunpack.c.l.b16 %v3939
    %v3948 = vunpack.c.l.b16 %v3940
    %v3949 = vunpack.c.l.b16 %v3941
    %v3950 = vpack.c.b16 %v3947, %v3946
    %v3951 = vpack.c.b16 %v3949, %v3948
    %3954 = vmatpush.bf16.msra.mxu0 0
    %3955 = vmatpush.bf16.msra.mxu0 0
    %3956 = vmatpush.bf16.msra.mxu0 0
    %3957 = vmatpush.bf16.msra.mxu0 0
    %3958 = vmatpush.bf16.msra.mxu0 0
    %3959 = vmatpush.bf16.msra.mxu0 0
    %3960 = vmatpush.bf16.msra.mxu0 %v3951
    %3961 = vmatpush.bf16.msra.mxu0 %v3950
    %3962 = vmatmul.bf16.gmra.mxu0 %v718
    %v3963 = vpop.f32.mrf.mxu0
    %v3964 = vadd.f32 0.0, %v3963
    %v3965 = vpop.f32.mrf.mxu0
    %v3966 = vadd.f32 0.0, %v3965
    %3967 = vmatmul.bf16.gmra.mxu0 %v721
    %v3968 = vpop.f32.mrf.mxu0
    %v3969 = vadd.f32 0.0, %v3968
    %v3970 = vpop.f32.mrf.mxu0
    %v3971 = vadd.f32 0.0, %v3970
    %3972 = vmatmul.bf16.gmra.mxu0 %v724
    %v3973 = vpop.f32.mrf.mxu0
    %v3974 = vadd.f32 0.0, %v3973
    %v3975 = vpop.f32.mrf.mxu0
    %v3976 = vadd.f32 0.0, %v3975
    %3977 = vmatmul.bf16.gmra.mxu0 %v727
    %v3978 = vpop.f32.mrf.mxu0
    %v3979 = vadd.f32 0.0, %v3978
    %v3980 = vpop.f32.mrf.mxu0
    %v3981 = vadd.f32 0.0, %v3980
    %3982 = vmatmul.bf16.gmra.mxu0 %v730
    %v3983 = vpop.f32.mrf.mxu0
    %v3984 = vadd.f32 0.0, %v3983
    %v3985 = vpop.f32.mrf.mxu0
    %v3986 = vadd.f32 0.0, %v3985
    %3987 = vmatmul.bf16.gmra.mxu0 %v733
    %v3988 = vpop.f32.mrf.mxu0
    %v3989 = vadd.f32 0.0, %v3988
    %v3990 = vpop.f32.mrf.mxu0
    %v3991 = vadd.f32 0.0, %v3990
    %3992 = vmatmul.bf16.gmra.mxu0 %v736
    %v3993 = vpop.f32.mrf.mxu0
    %v3994 = vadd.f32 0.0, %v3993
    %v3995 = vpop.f32.mrf.mxu0
    %v3996 = vadd.f32 0.0, %v3995
    %3997 = vmatmul.bf16.gmra.mxu0 %v739
    %v3998 = vpop.f32.mrf.mxu0
    %v3999 = vadd.f32 0.0, %v3998
    %v4000 = vpop.f32.mrf.mxu0
    %v4001 = vadd.f32 0.0, %v4000
    %4002 = vdwg.mxu0
    %v4003 = vpack.c.bf16 %v3964, %v3964
    %v4004 = vpack.c.bf16 %v3966, %v3966
    %v4005 = vpack.c.bf16 %v3969, %v3969
    %v4006 = vpack.c.bf16 %v3971, %v3971
    %v4007 = vpack.c.bf16 %v3974, %v3974
    %v4008 = vpack.c.bf16 %v3976, %v3976
    %v4009 = vpack.c.bf16 %v3979, %v3979
    %v4010 = vpack.c.bf16 %v3981, %v3981
    %v4011 = vpack.c.bf16 %v3984, %v3984
    %v4012 = vpack.c.bf16 %v3986, %v3986
    %v4013 = vpack.c.bf16 %v3989, %v3989
    %v4014 = vpack.c.bf16 %v3991, %v3991
    %v4015 = vpack.c.bf16 %v3994, %v3994
    %v4016 = vpack.c.bf16 %v3996, %v3996
    %v4017 = vpack.c.bf16 %v3999, %v3999
    %v4018 = vpack.c.bf16 %v4001, %v4001
    %v4021 = vunpack.c.l.b16 %v3839
    %v4022 = vunpack.c.l.b16 %v3840
    %v4023 = vpack.c.b16 %v4022, %v4021
    %v4026 = vunpack.c.l.b16 %v3921
    %v4027 = vunpack.c.l.b16 %v3922
    %v4028 = vpack.c.b16 %v4027, %v4026
    %v4030 = vsel %vm213, %v4023, 0
    %v4033 = vsel %vm213, %v4028, 0
    %4035 = vmatpush.bf16.xpose.msra.mxu0 0
    %4036 = vmatpush.bf16.xpose.msra.mxu0 0
    %4037 = vmatpush.bf16.xpose.msra.mxu0 0
    %4038 = vmatpush.bf16.xpose.msra.mxu0 0
    %4039 = vmatpush.bf16.xpose.msra.mxu0 0
    %4040 = vmatpush.bf16.xpose.msra.mxu0 0
    %4041 = vmatpush.bf16.xpose.msra.mxu0 0
    %4042 = vmatpush.bf16.xpose.msra.mxu0 %v4033
    %4043 = vmatmul.bf16.gmra.mxu0 %v4030
    %v4044 = vpop.f32.mrf.mxu0
    %v4045 = vadd.f32 0.0, %v4044
    %v4046 = vpop.f32.mrf.mxu0
    %v4047 = vadd.f32 0.0, %v4046
    %4048 = vdwg.mxu0
    %v4051 = vunpack.c.l.b16 %v3841
    %v4052 = vunpack.c.l.b16 %v3842
    %v4053 = vpack.c.b16 %v4052, %v4051
    %v4056 = vunpack.c.l.b16 %v3923
    %v4057 = vunpack.c.l.b16 %v3924
    %v4058 = vpack.c.b16 %v4057, %v4056
    %v4060 = vsel %vm213, %v4053, 0
    %v4063 = vsel %vm213, %v4058, 0
    %4065 = vmatpush.bf16.xpose.msra.mxu0 0
    %4066 = vmatpush.bf16.xpose.msra.mxu0 0
    %4067 = vmatpush.bf16.xpose.msra.mxu0 0
    %4068 = vmatpush.bf16.xpose.msra.mxu0 0
    %4069 = vmatpush.bf16.xpose.msra.mxu0 0
    %4070 = vmatpush.bf16.xpose.msra.mxu0 0
    %4071 = vmatpush.bf16.xpose.msra.mxu0 0
    %4072 = vmatpush.bf16.xpose.msra.mxu0 %v4063
    %4073 = vmatmul.bf16.gmra.mxu0 %v4060
    %v4074 = vpop.f32.mrf.mxu0
    %v4075 = vadd.f32 0.0, %v4074
    %v4076 = vpop.f32.mrf.mxu0
    %v4077 = vadd.f32 0.0, %v4076
    %4078 = vdwg.mxu0
    %v4081 = vunpack.c.l.b16 %v3843
    %v4082 = vunpack.c.l.b16 %v3844
    %v4083 = vpack.c.b16 %v4082, %v4081
    %v4086 = vunpack.c.l.b16 %v3925
    %v4087 = vunpack.c.l.b16 %v3926
    %v4088 = vpack.c.b16 %v4087, %v4086
    %v4090 = vsel %vm213, %v4083, 0
    %v4093 = vsel %vm213, %v4088, 0
    %4095 = vmatpush.bf16.xpose.msra.mxu0 0
    %4096 = vmatpush.bf16.xpose.msra.mxu0 0
    %4097 = vmatpush.bf16.xpose.msra.mxu0 0
    %4098 = vmatpush.bf16.xpose.msra.mxu0 0
    %4099 = vmatpush.bf16.xpose.msra.mxu0 0
    %4100 = vmatpush.bf16.xpose.msra.mxu0 0
    %4101 = vmatpush.bf16.xpose.msra.mxu0 0
    %4102 = vmatpush.bf16.xpose.msra.mxu0 %v4093
    %4103 = vmatmul.bf16.gmra.mxu0 %v4090
    %v4104 = vpop.f32.mrf.mxu0
    %v4105 = vadd.f32 0.0, %v4104
    %v4106 = vpop.f32.mrf.mxu0
    %v4107 = vadd.f32 0.0, %v4106
    %4108 = vdwg.mxu0
    %v4111 = vunpack.c.l.b16 %v3845
    %v4112 = vunpack.c.l.b16 %v3846
    %v4113 = vpack.c.b16 %v4112, %v4111
    %v4116 = vunpack.c.l.b16 %v3927
    %v4117 = vunpack.c.l.b16 %v3928
    %v4118 = vpack.c.b16 %v4117, %v4116
    %v4120 = vsel %vm213, %v4113, 0
    %v4123 = vsel %vm213, %v4118, 0
    %4125 = vmatpush.bf16.xpose.msra.mxu0 0
    %4126 = vmatpush.bf16.xpose.msra.mxu0 0
    %4127 = vmatpush.bf16.xpose.msra.mxu0 0
    %4128 = vmatpush.bf16.xpose.msra.mxu0 0
    %4129 = vmatpush.bf16.xpose.msra.mxu0 0
    %4130 = vmatpush.bf16.xpose.msra.mxu0 0
    %4131 = vmatpush.bf16.xpose.msra.mxu0 0
    %4132 = vmatpush.bf16.xpose.msra.mxu0 %v4123
    %4133 = vmatmul.bf16.gmra.mxu0 %v4120
    %v4134 = vpop.f32.mrf.mxu0
    %v4135 = vadd.f32 0.0, %v4134
    %v4136 = vpop.f32.mrf.mxu0
    %v4137 = vadd.f32 0.0, %v4136
    %4138 = vdwg.mxu0
    %v4141 = vunpack.c.l.b16 %v3847
    %v4142 = vunpack.c.l.b16 %v3848
    %v4143 = vpack.c.b16 %v4142, %v4141
    %v4146 = vunpack.c.l.b16 %v3929
    %v4147 = vunpack.c.l.b16 %v3930
    %v4148 = vpack.c.b16 %v4147, %v4146
    %v4150 = vsel %vm213, %v4143, 0
    %v4153 = vsel %vm213, %v4148, 0
    %4155 = vmatpush.bf16.xpose.msra.mxu0 0
    %4156 = vmatpush.bf16.xpose.msra.mxu0 0
    %4157 = vmatpush.bf16.xpose.msra.mxu0 0
    %4158 = vmatpush.bf16.xpose.msra.mxu0 0
    %4159 = vmatpush.bf16.xpose.msra.mxu0 0
    %4160 = vmatpush.bf16.xpose.msra.mxu0 0
    %4161 = vmatpush.bf16.xpose.msra.mxu0 0
    %4162 = vmatpush.bf16.xpose.msra.mxu0 %v4153
    %4163 = vmatmul.bf16.gmra.mxu0 %v4150
    %v4164 = vpop.f32.mrf.mxu0
    %v4165 = vadd.f32 0.0, %v4164
    %v4166 = vpop.f32.mrf.mxu0
    %v4167 = vadd.f32 0.0, %v4166
    %4168 = vdwg.mxu0
    %v4171 = vunpack.c.l.b16 %v3849
    %v4172 = vunpack.c.l.b16 %v3850
    %v4173 = vpack.c.b16 %v4172, %v4171
    %v4176 = vunpack.c.l.b16 %v3931
    %v4177 = vunpack.c.l.b16 %v3932
    %v4178 = vpack.c.b16 %v4177, %v4176
    %v4180 = vsel %vm213, %v4173, 0
    %v4183 = vsel %vm213, %v4178, 0
    %4185 = vmatpush.bf16.xpose.msra.mxu0 0
    %4186 = vmatpush.bf16.xpose.msra.mxu0 0
    %4187 = vmatpush.bf16.xpose.msra.mxu0 0
    %4188 = vmatpush.bf16.xpose.msra.mxu0 0
    %4189 = vmatpush.bf16.xpose.msra.mxu0 0
    %4190 = vmatpush.bf16.xpose.msra.mxu0 0
    %4191 = vmatpush.bf16.xpose.msra.mxu0 0
    %4192 = vmatpush.bf16.xpose.msra.mxu0 %v4183
    %4193 = vmatmul.bf16.gmra.mxu0 %v4180
    %v4194 = vpop.f32.mrf.mxu0
    %v4195 = vadd.f32 0.0, %v4194
    %v4196 = vpop.f32.mrf.mxu0
    %v4197 = vadd.f32 0.0, %v4196
    %4198 = vdwg.mxu0
    %v4201 = vunpack.c.l.b16 %v3851
    %v4202 = vunpack.c.l.b16 %v3852
    %v4203 = vpack.c.b16 %v4202, %v4201
    %v4206 = vunpack.c.l.b16 %v3933
    %v4207 = vunpack.c.l.b16 %v3934
    %v4208 = vpack.c.b16 %v4207, %v4206
    %v4210 = vsel %vm213, %v4203, 0
    %v4213 = vsel %vm213, %v4208, 0
    %4215 = vmatpush.bf16.xpose.msra.mxu0 0
    %4216 = vmatpush.bf16.xpose.msra.mxu0 0
    %4217 = vmatpush.bf16.xpose.msra.mxu0 0
    %4218 = vmatpush.bf16.xpose.msra.mxu0 0
    %4219 = vmatpush.bf16.xpose.msra.mxu0 0
    %4220 = vmatpush.bf16.xpose.msra.mxu0 0
    %4221 = vmatpush.bf16.xpose.msra.mxu0 0
    %4222 = vmatpush.bf16.xpose.msra.mxu0 %v4213
    %4223 = vmatmul.bf16.gmra.mxu0 %v4210
    %v4224 = vpop.f32.mrf.mxu0
    %v4225 = vadd.f32 0.0, %v4224
    %v4226 = vpop.f32.mrf.mxu0
    %v4227 = vadd.f32 0.0, %v4226
    %4228 = vdwg.mxu0
    %v4231 = vunpack.c.l.b16 %v3853
    %v4232 = vunpack.c.l.b16 %v3854
    %v4233 = vpack.c.b16 %v4232, %v4231
    %v4236 = vunpack.c.l.b16 %v3935
    %v4237 = vunpack.c.l.b16 %v3936
    %v4238 = vpack.c.b16 %v4237, %v4236
    %v4240 = vsel %vm213, %v4233, 0
    %v4243 = vsel %vm213, %v4238, 0
    %4245 = vmatpush.bf16.xpose.msra.mxu0 0
    %4246 = vmatpush.bf16.xpose.msra.mxu0 0
    %4247 = vmatpush.bf16.xpose.msra.mxu0 0
    %4248 = vmatpush.bf16.xpose.msra.mxu0 0
    %4249 = vmatpush.bf16.xpose.msra.mxu0 0
    %4250 = vmatpush.bf16.xpose.msra.mxu0 0
    %4251 = vmatpush.bf16.xpose.msra.mxu0 0
    %4252 = vmatpush.bf16.xpose.msra.mxu0 %v4243
    %4253 = vmatmul.bf16.gmra.mxu0 %v4240
    %v4254 = vpop.f32.mrf.mxu0
    %v4255 = vadd.f32 0.0, %v4254
    %v4256 = vpop.f32.mrf.mxu0
    %v4257 = vadd.f32 0.0, %v4256
    %4258 = vdwg.mxu0
    %v4259 = vsel %vm1208, %v4045, -inf
    %4260 = vmax.xlane.f32.xlu0 %v4259
    %v4261 = vpop.xlane.xlu0 %4260
    %v4262 = vsel %vm1208, %v4047, -inf
    %4263 = vmax.xlane.f32.xlu0 %v4262
    %v4264 = vpop.xlane.xlu0 %4263
    %v4265 = vsel %vm1208, %v4075, -inf
    %4266 = vmax.xlane.f32.xlu0 %v4265
    %v4267 = vpop.xlane.xlu0 %4266
    %v4268 = vsel %vm1208, %v4077, -inf
    %4269 = vmax.xlane.f32.xlu0 %v4268
    %v4270 = vpop.xlane.xlu0 %4269
    %v4271 = vsel %vm1208, %v4105, -inf
    %4272 = vmax.xlane.f32.xlu0 %v4271
    %v4273 = vpop.xlane.xlu0 %4272
    %v4274 = vsel %vm1208, %v4107, -inf
    %4275 = vmax.xlane.f32.xlu0 %v4274
    %v4276 = vpop.xlane.xlu0 %4275
    %v4277 = vsel %vm1208, %v4135, -inf
    %4278 = vmax.xlane.f32.xlu0 %v4277
    %v4279 = vpop.xlane.xlu0 %4278
    %v4280 = vsel %vm1208, %v4137, -inf
    %4281 = vmax.xlane.f32.xlu0 %v4280
    %v4282 = vpop.xlane.xlu0 %4281
    %v4283 = vsel %vm1208, %v4165, -inf
    %4284 = vmax.xlane.f32.xlu0 %v4283
    %v4285 = vpop.xlane.xlu0 %4284
    %v4286 = vsel %vm1208, %v4167, -inf
    %4287 = vmax.xlane.f32.xlu0 %v4286
    %v4288 = vpop.xlane.xlu0 %4287
    %v4289 = vsel %vm1208, %v4195, -inf
    %4290 = vmax.xlane.f32.xlu0 %v4289
    %v4291 = vpop.xlane.xlu0 %4290
    %v4292 = vsel %vm1208, %v4197, -inf
    %4293 = vmax.xlane.f32.xlu0 %v4292
    %v4294 = vpop.xlane.xlu0 %4293
    %v4295 = vsel %vm1208, %v4225, -inf
    %4296 = vmax.xlane.f32.xlu0 %v4295
    %v4297 = vpop.xlane.xlu0 %4296
    %v4298 = vsel %vm1208, %v4227, -inf
    %4299 = vmax.xlane.f32.xlu0 %v4298
    %v4300 = vpop.xlane.xlu0 %4299
    %v4301 = vsel %vm1208, %v4255, -inf
    %4302 = vmax.xlane.f32.xlu0 %v4301
    %v4303 = vpop.xlane.xlu0 %4302
    %v4304 = vsel %vm1208, %v4257, -inf
    %4305 = vmax.xlane.f32.xlu0 %v4304
    %v4306 = vpop.xlane.xlu0 %4305
    %v4307 = vsub.f32 %v4045, %v4261
    %v4308 = vsub.f32 %v4047, %v4264
    %v4309 = vsub.f32 %v4075, %v4267
    %v4310 = vsub.f32 %v4077, %v4270
    %v4311 = vsub.f32 %v4105, %v4273
    %v4312 = vsub.f32 %v4107, %v4276
    %v4313 = vsub.f32 %v4135, %v4279
    %v4314 = vsub.f32 %v4137, %v4282
    %v4315 = vsub.f32 %v4165, %v4285
    %v4316 = vsub.f32 %v4167, %v4288
    %v4317 = vsub.f32 %v4195, %v4291
    %v4318 = vsub.f32 %v4197, %v4294
    %v4319 = vsub.f32 %v4225, %v4297
    %v4320 = vsub.f32 %v4227, %v4300
    %v4321 = vsub.f32 %v4255, %v4303
    %v4322 = vsub.f32 %v4257, %v4306
    %v4323 = vmul.f32 %v4307, 1.442695
    %v4324 = vpow.pop %v4323
    %v4325 = vmul.f32 %v4308, 1.442695
    %v4326 = vpow.pop %v4325
    %v4327 = vmul.f32 %v4309, 1.442695
    %v4328 = vpow.pop %v4327
    %v4329 = vmul.f32 %v4310, 1.442695
    %v4330 = vpow.pop %v4329
    %v4331 = vmul.f32 %v4311, 1.442695
    %v4332 = vpow.pop %v4331
    %v4333 = vmul.f32 %v4312, 1.442695
    %v4334 = vpow.pop %v4333
    %v4335 = vmul.f32 %v4313, 1.442695
    %v4336 = vpow.pop %v4335
    %v4337 = vmul.f32 %v4314, 1.442695
    %v4338 = vpow.pop %v4337
    %v4339 = vmul.f32 %v4315, 1.442695
    %v4340 = vpow.pop %v4339
    %v4341 = vmul.f32 %v4316, 1.442695
    %v4342 = vpow.pop %v4341
    %v4343 = vmul.f32 %v4317, 1.442695
    %v4344 = vpow.pop %v4343
    %v4345 = vmul.f32 %v4318, 1.442695
    %v4346 = vpow.pop %v4345
    %v4347 = vmul.f32 %v4319, 1.442695
    %v4348 = vpow.pop %v4347
    %v4349 = vmul.f32 %v4320, 1.442695
    %v4350 = vpow.pop %v4349
    %v4351 = vmul.f32 %v4321, 1.442695
    %v4352 = vpow.pop %v4351
    %v4353 = vmul.f32 %v4322, 1.442695
    %v4354 = vpow.pop %v4353
    %v4355 = vsel %vm1208, %v4324, 0.0
    %4356 = vadd.xlane.f32.xlu0 %v4355
    %v4357 = vpop.xlane.xlu0 %4356
    %v4358 = vsel %vm1208, %v4326, 0.0
    %4359 = vadd.xlane.f32.xlu0 %v4358
    %v4360 = vpop.xlane.xlu0 %4359
    %v4361 = vsel %vm1208, %v4328, 0.0
    %4362 = vadd.xlane.f32.xlu0 %v4361
    %v4363 = vpop.xlane.xlu0 %4362
    %v4364 = vsel %vm1208, %v4330, 0.0
    %4365 = vadd.xlane.f32.xlu0 %v4364
    %v4366 = vpop.xlane.xlu0 %4365
    %v4367 = vsel %vm1208, %v4332, 0.0
    %4368 = vadd.xlane.f32.xlu0 %v4367
    %v4369 = vpop.xlane.xlu0 %4368
    %v4370 = vsel %vm1208, %v4334, 0.0
    %4371 = vadd.xlane.f32.xlu0 %v4370
    %v4372 = vpop.xlane.xlu0 %4371
    %v4373 = vsel %vm1208, %v4336, 0.0
    %4374 = vadd.xlane.f32.xlu0 %v4373
    %v4375 = vpop.xlane.xlu0 %4374
    %v4376 = vsel %vm1208, %v4338, 0.0
    %4377 = vadd.xlane.f32.xlu0 %v4376
    %v4378 = vpop.xlane.xlu0 %4377
    %v4379 = vsel %vm1208, %v4340, 0.0
    %4380 = vadd.xlane.f32.xlu0 %v4379
    %v4381 = vpop.xlane.xlu0 %4380
    %v4382 = vsel %vm1208, %v4342, 0.0
    %4383 = vadd.xlane.f32.xlu0 %v4382
    %v4384 = vpop.xlane.xlu0 %4383
    %v4385 = vsel %vm1208, %v4344, 0.0
    %4386 = vadd.xlane.f32.xlu0 %v4385
    %v4387 = vpop.xlane.xlu0 %4386
    %v4388 = vsel %vm1208, %v4346, 0.0
    %4389 = vadd.xlane.f32.xlu0 %v4388
    %v4390 = vpop.xlane.xlu0 %4389
    %v4391 = vsel %vm1208, %v4348, 0.0
    %4392 = vadd.xlane.f32.xlu0 %v4391
    %v4393 = vpop.xlane.xlu0 %4392
    %v4394 = vsel %vm1208, %v4350, 0.0
    %4395 = vadd.xlane.f32.xlu0 %v4394
    %v4396 = vpop.xlane.xlu0 %4395
    %v4397 = vsel %vm1208, %v4352, 0.0
    %4398 = vadd.xlane.f32.xlu0 %v4397
    %v4399 = vpop.xlane.xlu0 %4398
    %v4400 = vsel %vm1208, %v4354, 0.0
    %4401 = vadd.xlane.f32.xlu0 %v4400
    %v4402 = vpop.xlane.xlu0 %4401
    %v4403 = vrcp.pop %v4357
    %v4404 = vrcp.pop %v4360
    %v4405 = vrcp.pop %v4363
    %v4406 = vrcp.pop %v4366
    %v4407 = vrcp.pop %v4369
    %v4408 = vrcp.pop %v4372
    %v4409 = vrcp.pop %v4375
    %v4410 = vrcp.pop %v4378
    %v4411 = vrcp.pop %v4381
    %v4412 = vrcp.pop %v4384
    %v4413 = vrcp.pop %v4387
    %v4414 = vrcp.pop %v4390
    %v4415 = vrcp.pop %v4393
    %v4416 = vrcp.pop %v4396
    %v4417 = vrcp.pop %v4399
    %v4418 = vrcp.pop %v4402
    %v4419 = vmul.f32 %v4324, %v4403
    %v4420 = vmul.f32 %v4326, %v4404
    %v4421 = vmul.f32 %v4328, %v4405
    %v4422 = vmul.f32 %v4330, %v4406
    %v4423 = vmul.f32 %v4332, %v4407
    %v4424 = vmul.f32 %v4334, %v4408
    %v4425 = vmul.f32 %v4336, %v4409
    %v4426 = vmul.f32 %v4338, %v4410
    %v4427 = vmul.f32 %v4340, %v4411
    %v4428 = vmul.f32 %v4342, %v4412
    %v4429 = vmul.f32 %v4344, %v4413
    %v4430 = vmul.f32 %v4346, %v4414
    %v4431 = vmul.f32 %v4348, %v4415
    %v4432 = vmul.f32 %v4350, %v4416
    %v4433 = vmul.f32 %v4352, %v4417
    %v4434 = vmul.f32 %v4354, %v4418
    %v4435 = vpack.c.bf16 %v4419, %v4419
    %v4436 = vpack.c.bf16 %v4420, %v4420
    %v4437 = vpack.c.bf16 %v4421, %v4421
    %v4438 = vpack.c.bf16 %v4422, %v4422
    %v4439 = vpack.c.bf16 %v4423, %v4423
    %v4440 = vpack.c.bf16 %v4424, %v4424
    %v4441 = vpack.c.bf16 %v4425, %v4425
    %v4442 = vpack.c.bf16 %v4426, %v4426
    %v4443 = vpack.c.bf16 %v4427, %v4427
    %v4444 = vpack.c.bf16 %v4428, %v4428
    %v4445 = vpack.c.bf16 %v4429, %v4429
    %v4446 = vpack.c.bf16 %v4430, %v4430
    %v4447 = vpack.c.bf16 %v4431, %v4431
    %v4448 = vpack.c.bf16 %v4432, %v4432
    %v4449 = vpack.c.bf16 %v4433, %v4433
    %v4450 = vpack.c.bf16 %v4434, %v4434
    %v4453 = vunpack.c.l.b16 %v4435
    %v4454 = vunpack.c.l.b16 %v4436
    %v4455 = vpack.c.b16 %v4454, %v4453
    %v4458 = vunpack.c.l.b16 %v4003
    %v4459 = vunpack.c.l.b16 %v4004
    %v4460 = vpack.c.b16 %v4459, %v4458
    %v4463 = vsel %vm1208, %v4455, 0
    %4465 = vmatpush.bf16.msra.mxu0 0
    %4466 = vmatpush.bf16.msra.mxu0 0
    %4467 = vmatpush.bf16.msra.mxu0 0
    %4468 = vmatpush.bf16.msra.mxu0 0
    %4469 = vmatpush.bf16.msra.mxu0 0
    %4470 = vmatpush.bf16.msra.mxu0 0
    %4471 = vmatpush.bf16.msra.mxu0 0
    %4472 = vmatpush.bf16.msra.mxu0 %v4460
    %4473 = vmatmul.bf16.gmra.mxu0 %v4463
    %v4474 = vpop.f32.mrf.mxu0
    %v4475 = vadd.f32 0.0, %v4474
    %v4476 = vpop.f32.mrf.mxu0
    %v4477 = vadd.f32 0.0, %v4476
    %4478 = vdwg.mxu0
    %v4481 = vunpack.c.l.b16 %v4437
    %v4482 = vunpack.c.l.b16 %v4438
    %v4483 = vpack.c.b16 %v4482, %v4481
    %v4486 = vunpack.c.l.b16 %v4005
    %v4487 = vunpack.c.l.b16 %v4006
    %v4488 = vpack.c.b16 %v4487, %v4486
    %v4491 = vsel %vm1208, %v4483, 0
    %4493 = vmatpush.bf16.msra.mxu0 0
    %4494 = vmatpush.bf16.msra.mxu0 0
    %4495 = vmatpush.bf16.msra.mxu0 0
    %4496 = vmatpush.bf16.msra.mxu0 0
    %4497 = vmatpush.bf16.msra.mxu0 0
    %4498 = vmatpush.bf16.msra.mxu0 0
    %4499 = vmatpush.bf16.msra.mxu0 0
    %4500 = vmatpush.bf16.msra.mxu0 %v4488
    %4501 = vmatmul.bf16.gmra.mxu0 %v4491
    %v4502 = vpop.f32.mrf.mxu0
    %v4503 = vadd.f32 0.0, %v4502
    %v4504 = vpop.f32.mrf.mxu0
    %v4505 = vadd.f32 0.0, %v4504
    %4506 = vdwg.mxu0
    %v4509 = vunpack.c.l.b16 %v4439
    %v4510 = vunpack.c.l.b16 %v4440
    %v4511 = vpack.c.b16 %v4510, %v4509
    %v4514 = vunpack.c.l.b16 %v4007
    %v4515 = vunpack.c.l.b16 %v4008
    %v4516 = vpack.c.b16 %v4515, %v4514
    %v4519 = vsel %vm1208, %v4511, 0
    %4521 = vmatpush.bf16.msra.mxu0 0
    %4522 = vmatpush.bf16.msra.mxu0 0
    %4523 = vmatpush.bf16.msra.mxu0 0
    %4524 = vmatpush.bf16.msra.mxu0 0
    %4525 = vmatpush.bf16.msra.mxu0 0
    %4526 = vmatpush.bf16.msra.mxu0 0
    %4527 = vmatpush.bf16.msra.mxu0 0
    %4528 = vmatpush.bf16.msra.mxu0 %v4516
    %4529 = vmatmul.bf16.gmra.mxu0 %v4519
    %v4530 = vpop.f32.mrf.mxu0
    %v4531 = vadd.f32 0.0, %v4530
    %v4532 = vpop.f32.mrf.mxu0
    %v4533 = vadd.f32 0.0, %v4532
    %4534 = vdwg.mxu0
    %v4537 = vunpack.c.l.b16 %v4441
    %v4538 = vunpack.c.l.b16 %v4442
    %v4539 = vpack.c.b16 %v4538, %v4537
    %v4542 = vunpack.c.l.b16 %v4009
    %v4543 = vunpack.c.l.b16 %v4010
    %v4544 = vpack.c.b16 %v4543, %v4542
    %v4547 = vsel %vm1208, %v4539, 0
    %4549 = vmatpush.bf16.msra.mxu0 0
    %4550 = vmatpush.bf16.msra.mxu0 0
    %4551 = vmatpush.bf16.msra.mxu0 0
    %4552 = vmatpush.bf16.msra.mxu0 0
    %4553 = vmatpush.bf16.msra.mxu0 0
    %4554 = vmatpush.bf16.msra.mxu0 0
    %4555 = vmatpush.bf16.msra.mxu0 0
    %4556 = vmatpush.bf16.msra.mxu0 %v4544
    %4557 = vmatmul.bf16.gmra.mxu0 %v4547
    %v4558 = vpop.f32.mrf.mxu0
    %v4559 = vadd.f32 0.0, %v4558
    %v4560 = vpop.f32.mrf.mxu0
    %v4561 = vadd.f32 0.0, %v4560
    %4562 = vdwg.mxu0
    %v4565 = vunpack.c.l.b16 %v4443
    %v4566 = vunpack.c.l.b16 %v4444
    %v4567 = vpack.c.b16 %v4566, %v4565
    %v4570 = vunpack.c.l.b16 %v4011
    %v4571 = vunpack.c.l.b16 %v4012
    %v4572 = vpack.c.b16 %v4571, %v4570
    %v4575 = vsel %vm1208, %v4567, 0
    %4577 = vmatpush.bf16.msra.mxu0 0
    %4578 = vmatpush.bf16.msra.mxu0 0
    %4579 = vmatpush.bf16.msra.mxu0 0
    %4580 = vmatpush.bf16.msra.mxu0 0
    %4581 = vmatpush.bf16.msra.mxu0 0
    %4582 = vmatpush.bf16.msra.mxu0 0
    %4583 = vmatpush.bf16.msra.mxu0 0
    %4584 = vmatpush.bf16.msra.mxu0 %v4572
    %4585 = vmatmul.bf16.gmra.mxu0 %v4575
    %v4586 = vpop.f32.mrf.mxu0
    %v4587 = vadd.f32 0.0, %v4586
    %v4588 = vpop.f32.mrf.mxu0
    %v4589 = vadd.f32 0.0, %v4588
    %4590 = vdwg.mxu0
    %v4593 = vunpack.c.l.b16 %v4445
    %v4594 = vunpack.c.l.b16 %v4446
    %v4595 = vpack.c.b16 %v4594, %v4593
    %v4598 = vunpack.c.l.b16 %v4013
    %v4599 = vunpack.c.l.b16 %v4014
    %v4600 = vpack.c.b16 %v4599, %v4598
    %v4603 = vsel %vm1208, %v4595, 0
    %4605 = vmatpush.bf16.msra.mxu0 0
    %4606 = vmatpush.bf16.msra.mxu0 0
    %4607 = vmatpush.bf16.msra.mxu0 0
    %4608 = vmatpush.bf16.msra.mxu0 0
    %4609 = vmatpush.bf16.msra.mxu0 0
    %4610 = vmatpush.bf16.msra.mxu0 0
    %4611 = vmatpush.bf16.msra.mxu0 0
    %4612 = vmatpush.bf16.msra.mxu0 %v4600
    %4613 = vmatmul.bf16.gmra.mxu0 %v4603
    %v4614 = vpop.f32.mrf.mxu0
    %v4615 = vadd.f32 0.0, %v4614
    %v4616 = vpop.f32.mrf.mxu0
    %v4617 = vadd.f32 0.0, %v4616
    %4618 = vdwg.mxu0
    %v4621 = vunpack.c.l.b16 %v4447
    %v4622 = vunpack.c.l.b16 %v4448
    %v4623 = vpack.c.b16 %v4622, %v4621
    %v4626 = vunpack.c.l.b16 %v4015
    %v4627 = vunpack.c.l.b16 %v4016
    %v4628 = vpack.c.b16 %v4627, %v4626
    %v4631 = vsel %vm1208, %v4623, 0
    %4633 = vmatpush.bf16.msra.mxu0 0
    %4634 = vmatpush.bf16.msra.mxu0 0
    %4635 = vmatpush.bf16.msra.mxu0 0
    %4636 = vmatpush.bf16.msra.mxu0 0
    %4637 = vmatpush.bf16.msra.mxu0 0
    %4638 = vmatpush.bf16.msra.mxu0 0
    %4639 = vmatpush.bf16.msra.mxu0 0
    %4640 = vmatpush.bf16.msra.mxu0 %v4628
    %4641 = vmatmul.bf16.gmra.mxu0 %v4631
    %v4642 = vpop.f32.mrf.mxu0
    %v4643 = vadd.f32 0.0, %v4642
    %v4644 = vpop.f32.mrf.mxu0
    %v4645 = vadd.f32 0.0, %v4644
    %4646 = vdwg.mxu0
    %v4649 = vunpack.c.l.b16 %v4449
    %v4650 = vunpack.c.l.b16 %v4450
    %v4651 = vpack.c.b16 %v4650, %v4649
    %v4654 = vunpack.c.l.b16 %v4017
    %v4655 = vunpack.c.l.b16 %v4018
    %v4656 = vpack.c.b16 %v4655, %v4654
    %v4659 = vsel %vm1208, %v4651, 0
    %4661 = vmatpush.bf16.msra.mxu0 0
    %4662 = vmatpush.bf16.msra.mxu0 0
    %4663 = vmatpush.bf16.msra.mxu0 0
    %4664 = vmatpush.bf16.msra.mxu0 0
    %4665 = vmatpush.bf16.msra.mxu0 0
    %4666 = vmatpush.bf16.msra.mxu0 0
    %4667 = vmatpush.bf16.msra.mxu0 0
    %4668 = vmatpush.bf16.msra.mxu0 %v4656
    %4669 = vmatmul.bf16.gmra.mxu0 %v4659
    %v4670 = vpop.f32.mrf.mxu0
    %v4671 = vadd.f32 0.0, %v4670
    %v4672 = vpop.f32.mrf.mxu0
    %v4673 = vadd.f32 0.0, %v4672
    %4674 = vdwg.mxu0
    %v4675 = vpack.c.bf16 %v4477, %v4475
    %v4676 = vpack.c.bf16 %v4505, %v4503
    %v4677 = vpack.c.bf16 %v4533, %v4531
    %v4678 = vpack.c.bf16 %v4561, %v4559
    %v4679 = vpack.c.bf16 %v4589, %v4587
    %v4680 = vpack.c.bf16 %v4617, %v4615
    %v4681 = vpack.c.bf16 %v4645, %v4643
    %v4682 = vpack.c.bf16 %v4673, %v4671
    %s4683 = scalar_lea.vmem [#allocation8], 48
    %v4684 = vld [vmem:[%s4683] sm:$0xf]
    %v4685 = vld [vmem:[%s4683 + $0x4] sm:$0xf]
    %v4686 = vld [vmem:[%s4683 + $0x8] sm:$0xf]
    %v4687 = vld [vmem:[%s4683 + $0xc] sm:$0xf]
    %v4692 = vunpack.c.l.b16 %v4684
    %v4693 = vunpack.c.l.b16 %v4685
    %v4694 = vunpack.c.l.b16 %v4686
    %v4695 = vunpack.c.l.b16 %v4687
    %v4696 = vpack.c.b16 %v4693, %v4692
    %v4697 = vpack.c.b16 %v4695, %v4694
    %v4701 = vsel %vm213, %v4675, 0
    %v4704 = vsel %vm213, %v4676, 0
    %v4707 = vsel %vm213, %v4677, 0
    %v4710 = vsel %vm213, %v4678, 0
    %v4713 = vsel %vm213, %v4679, 0
    %v4716 = vsel %vm213, %v4680, 0
    %v4719 = vsel %vm213, %v4681, 0
    %v4722 = vsel %vm213, %v4682, 0
    %4724 = vmatpush.bf16.msra.mxu0 0
    %4725 = vmatpush.bf16.msra.mxu0 0
    %4726 = vmatpush.bf16.msra.mxu0 0
    %4727 = vmatpush.bf16.msra.mxu0 0
    %4728 = vmatpush.bf16.msra.mxu0 0
    %4729 = vmatpush.bf16.msra.mxu0 0
    %4730 = vmatpush.bf16.msra.mxu0 %v4697
    %4731 = vmatpush.bf16.msra.mxu0 %v4696
    %4732 = vmatmul.bf16.gmra.mxu0 %v4701
    %v4733 = vpop.f32.mrf.mxu0
    %v4734 = vadd.f32 0.0, %v4733
    %v4735 = vpop.f32.mrf.mxu0
    %v4736 = vadd.f32 0.0, %v4735
    %4737 = vmatmul.bf16.gmra.mxu0 %v4704
    %v4738 = vpop.f32.mrf.mxu0
    %v4739 = vadd.f32 0.0, %v4738
    %v4740 = vpop.f32.mrf.mxu0
    %v4741 = vadd.f32 0.0, %v4740
    %4742 = vmatmul.bf16.gmra.mxu0 %v4707
    %v4743 = vpop.f32.mrf.mxu0
    %v4744 = vadd.f32 0.0, %v4743
    %v4745 = vpop.f32.mrf.mxu0
    %v4746 = vadd.f32 0.0, %v4745
    %4747 = vmatmul.bf16.gmra.mxu0 %v4710
    %v4748 = vpop.f32.mrf.mxu0
    %v4749 = vadd.f32 0.0, %v4748
    %v4750 = vpop.f32.mrf.mxu0
    %v4751 = vadd.f32 0.0, %v4750
    %4752 = vmatmul.bf16.gmra.mxu0 %v4713
    %v4753 = vpop.f32.mrf.mxu0
    %v4754 = vadd.f32 0.0, %v4753
    %v4755 = vpop.f32.mrf.mxu0
    %v4756 = vadd.f32 0.0, %v4755
    %4757 = vmatmul.bf16.gmra.mxu0 %v4716
    %v4758 = vpop.f32.mrf.mxu0
    %v4759 = vadd.f32 0.0, %v4758
    %v4760 = vpop.f32.mrf.mxu0
    %v4761 = vadd.f32 0.0, %v4760
    %4762 = vmatmul.bf16.gmra.mxu0 %v4719
    %v4763 = vpop.f32.mrf.mxu0
    %v4764 = vadd.f32 0.0, %v4763
    %v4765 = vpop.f32.mrf.mxu0
    %v4766 = vadd.f32 0.0, %v4765
    %4767 = vmatmul.bf16.gmra.mxu0 %v4722
    %v4768 = vpop.f32.mrf.mxu0
    %v4769 = vadd.f32 0.0, %v4768
    %v4770 = vpop.f32.mrf.mxu0
    %v4771 = vadd.f32 0.0, %v4770
    %4772 = vdwg.mxu0
    %v4773 = vadd.f32 %v3757, %v4734
    %v4774 = vadd.f32 %v3758, %v4736
    %v4775 = vadd.f32 %v3759, %v4739
    %v4776 = vadd.f32 %v3760, %v4741
    %v4777 = vadd.f32 %v3761, %v4744
    %v4778 = vadd.f32 %v3762, %v4746
    %v4779 = vadd.f32 %v3763, %v4749
    %v4780 = vadd.f32 %v3764, %v4751
    %v4781 = vadd.f32 %v3765, %v4754
    %v4782 = vadd.f32 %v3766, %v4756
    %v4783 = vadd.f32 %v3767, %v4759
    %v4784 = vadd.f32 %v3768, %v4761
    %v4785 = vadd.f32 %v3769, %v4764
    %v4786 = vadd.f32 %v3770, %v4766
    %v4787 = vadd.f32 %v3771, %v4769
    %v4788 = vadd.f32 %v3772, %v4771
    %v4789 = vadd.f32 %v4773, %v676
    %v4790 = vadd.f32 %v4774, %v677
    %v4791 = vadd.f32 %v4775, %v678
    %v4792 = vadd.f32 %v4776, %v679
    %v4793 = vadd.f32 %v4777, %v680
    %v4794 = vadd.f32 %v4778, %v681
    %v4795 = vadd.f32 %v4779, %v682
    %v4796 = vadd.f32 %v4780, %v683
    %v4797 = vadd.f32 %v4781, %v684
    %v4798 = vadd.f32 %v4782, %v685
    %v4799 = vadd.f32 %v4783, %v686
    %v4800 = vadd.f32 %v4784, %v687
    %v4801 = vadd.f32 %v4785, %v688
    %v4802 = vadd.f32 %v4786, %v689
    %v4803 = vadd.f32 %v4787, %v690
    %v4804 = vadd.f32 %v4788, %v691
    %v4805 = vmul.f32 %v4789, 0.5
    %v4806 = vmul.f32 %v4790, 0.5
    %v4807 = vmul.f32 %v4791, 0.5
    %v4808 = vmul.f32 %v4792, 0.5
    %v4809 = vmul.f32 %v4793, 0.5
    %v4810 = vmul.f32 %v4794, 0.5
    %v4811 = vmul.f32 %v4795, 0.5
    %v4812 = vmul.f32 %v4796, 0.5
    %v4813 = vmul.f32 %v4797, 0.5
    %v4814 = vmul.f32 %v4798, 0.5
    %v4815 = vmul.f32 %v4799, 0.5
    %v4816 = vmul.f32 %v4800, 0.5
    %v4817 = vmul.f32 %v4801, 0.5
    %v4818 = vmul.f32 %v4802, 0.5
    %v4819 = vmul.f32 %v4803, 0.5
    %v4820 = vmul.f32 %v4804, 0.5
    %v4821 = vmul.f32 %v4789, %v4789
    %v4822 = vmul.f32 %v4790, %v4790
    %v4823 = vmul.f32 %v4791, %v4791
    %v4824 = vmul.f32 %v4792, %v4792
    %v4825 = vmul.f32 %v4793, %v4793
    %v4826 = vmul.f32 %v4794, %v4794
    %v4827 = vmul.f32 %v4795, %v4795
    %v4828 = vmul.f32 %v4796, %v4796
    %v4829 = vmul.f32 %v4797, %v4797
    %v4830 = vmul.f32 %v4798, %v4798
    %v4831 = vmul.f32 %v4799, %v4799
    %v4832 = vmul.f32 %v4800, %v4800
    %v4833 = vmul.f32 %v4801, %v4801
    %v4834 = vmul.f32 %v4802, %v4802
    %v4835 = vmul.f32 %v4803, %v4803
    %v4836 = vmul.f32 %v4804, %v4804
    %v4837 = vmul.f32 %v4821, %v4789
    %v4838 = vmul.f32 %v4822, %v4790
    %v4839 = vmul.f32 %v4823, %v4791
    %v4840 = vmul.f32 %v4824, %v4792
    %v4841 = vmul.f32 %v4825, %v4793
    %v4842 = vmul.f32 %v4826, %v4794
    %v4843 = vmul.f32 %v4827, %v4795
    %v4844 = vmul.f32 %v4828, %v4796
    %v4845 = vmul.f32 %v4829, %v4797
    %v4846 = vmul.f32 %v4830, %v4798
    %v4847 = vmul.f32 %v4831, %v4799
    %v4848 = vmul.f32 %v4832, %v4800
    %v4849 = vmul.f32 %v4833, %v4801
    %v4850 = vmul.f32 %v4834, %v4802
    %v4851 = vmul.f32 %v4835, %v4803
    %v4852 = vmul.f32 %v4836, %v4804
    %v4853 = vmul.f32 %v4837, 0.044715
    %v4854 = vmul.f32 %v4838, 0.044715
    %v4855 = vmul.f32 %v4839, 0.044715
    %v4856 = vmul.f32 %v4840, 0.044715
    %v4857 = vmul.f32 %v4841, 0.044715
    %v4858 = vmul.f32 %v4842, 0.044715
    %v4859 = vmul.f32 %v4843, 0.044715
    %v4860 = vmul.f32 %v4844, 0.044715
    %v4861 = vmul.f32 %v4845, 0.044715
    %v4862 = vmul.f32 %v4846, 0.044715
    %v4863 = vmul.f32 %v4847, 0.044715
    %v4864 = vmul.f32 %v4848, 0.044715
    %v4865 = vmul.f32 %v4849, 0.044715
    %v4866 = vmul.f32 %v4850, 0.044715
    %v4867 = vmul.f32 %v4851, 0.044715
    %v4868 = vmul.f32 %v4852, 0.044715
    %v4869 = vadd.f32 %v4789, %v4853
    %v4870 = vadd.f32 %v4790, %v4854
    %v4871 = vadd.f32 %v4791, %v4855
    %v4872 = vadd.f32 %v4792, %v4856
    %v4873 = vadd.f32 %v4793, %v4857
    %v4874 = vadd.f32 %v4794, %v4858
    %v4875 = vadd.f32 %v4795, %v4859
    %v4876 = vadd.f32 %v4796, %v4860
    %v4877 = vadd.f32 %v4797, %v4861
    %v4878 = vadd.f32 %v4798, %v4862
    %v4879 = vadd.f32 %v4799, %v4863
    %v4880 = vadd.f32 %v4800, %v4864
    %v4881 = vadd.f32 %v4801, %v4865
    %v4882 = vadd.f32 %v4802, %v4866
    %v4883 = vadd.f32 %v4803, %v4867
    %v4884 = vadd.f32 %v4804, %v4868
    %v4885 = vmul.f32 %v4869, 0.7978846
    %v4886 = vmul.f32 %v4870, 0.7978846
    %v4887 = vmul.f32 %v4871, 0.7978846
    %v4888 = vmul.f32 %v4872, 0.7978846
    %v4889 = vmul.f32 %v4873, 0.7978846
    %v4890 = vmul.f32 %v4874, 0.7978846
    %v4891 = vmul.f32 %v4875, 0.7978846
    %v4892 = vmul.f32 %v4876, 0.7978846
    %v4893 = vmul.f32 %v4877, 0.7978846
    %v4894 = vmul.f32 %v4878, 0.7978846
    %v4895 = vmul.f32 %v4879, 0.7978846
    %v4896 = vmul.f32 %v4880, 0.7978846
    %v4897 = vmul.f32 %v4881, 0.7978846
    %v4898 = vmul.f32 %v4882, 0.7978846
    %v4899 = vmul.f32 %v4883, 0.7978846
    %v4900 = vmul.f32 %v4884, 0.7978846
    %v4901 = vtanh.pop %v4885
    %v4902 = vtanh.pop %v4886
    %v4903 = vtanh.pop %v4887
    %v4904 = vtanh.pop %v4888
    %v4905 = vtanh.pop %v4889
    %v4906 = vtanh.pop %v4890
    %v4907 = vtanh.pop %v4891
    %v4908 = vtanh.pop %v4892
    %v4909 = vtanh.pop %v4893
    %v4910 = vtanh.pop %v4894
    %v4911 = vtanh.pop %v4895
    %v4912 = vtanh.pop %v4896
    %v4913 = vtanh.pop %v4897
    %v4914 = vtanh.pop %v4898
    %v4915 = vtanh.pop %v4899
    %v4916 = vtanh.pop %v4900
    %v4917 = vadd.f32 %v4901, 1.0
    %v4918 = vadd.f32 %v4902, 1.0
    %v4919 = vadd.f32 %v4903, 1.0
    %v4920 = vadd.f32 %v4904, 1.0
    %v4921 = vadd.f32 %v4905, 1.0
    %v4922 = vadd.f32 %v4906, 1.0
    %v4923 = vadd.f32 %v4907, 1.0
    %v4924 = vadd.f32 %v4908, 1.0
    %v4925 = vadd.f32 %v4909, 1.0
    %v4926 = vadd.f32 %v4910, 1.0
    %v4927 = vadd.f32 %v4911, 1.0
    %v4928 = vadd.f32 %v4912, 1.0
    %v4929 = vadd.f32 %v4913, 1.0
    %v4930 = vadd.f32 %v4914, 1.0
    %v4931 = vadd.f32 %v4915, 1.0
    %v4932 = vadd.f32 %v4916, 1.0
    %v4933 = vmul.f32 %v4805, %v4917
    %v4934 = vmul.f32 %v4806, %v4918
    %v4935 = vmul.f32 %v4807, %v4919
    %v4936 = vmul.f32 %v4808, %v4920
    %v4937 = vmul.f32 %v4809, %v4921
    %v4938 = vmul.f32 %v4810, %v4922
    %v4939 = vmul.f32 %v4811, %v4923
    %v4940 = vmul.f32 %v4812, %v4924
    %v4941 = vmul.f32 %v4813, %v4925
    %v4942 = vmul.f32 %v4814, %v4926
    %v4943 = vmul.f32 %v4815, %v4927
    %v4944 = vmul.f32 %v4816, %v4928
    %v4945 = vmul.f32 %v4817, %v4929
    %v4946 = vmul.f32 %v4818, %v4930
    %v4947 = vmul.f32 %v4819, %v4931
    %v4948 = vmul.f32 %v4820, %v4932
    %v4949 = vpack.c.bf16 %v4934, %v4933
    %v4950 = vpack.c.bf16 %v4936, %v4935
    %v4951 = vpack.c.bf16 %v4938, %v4937
    %v4952 = vpack.c.bf16 %v4940, %v4939
    %v4953 = vpack.c.bf16 %v4942, %v4941
    %v4954 = vpack.c.bf16 %v4944, %v4943
    %v4955 = vpack.c.bf16 %v4946, %v4945
    %v4956 = vpack.c.bf16 %v4948, %v4947
    %v4957 = vld [vmem:[#allocation10] sm:$0xf]
    %v4958 = vld [vmem:[#allocation10 + $0x4] sm:$0xf]
    %v4959 = vld [vmem:[#allocation10 + $0x8] sm:$0xf]
    %v4960 = vld [vmem:[#allocation10 + $0xc] sm:$0xf]
    %v4961 = vld [vmem:[%s11] sm:$0x1]
    %v4963 = vperm.slane %v4961, 0
    %v4969 = vunpack.c.l.b16 %v4957
    %v4970 = vunpack.c.l.b16 %v4958
    %v4971 = vunpack.c.l.b16 %v4959
    %v4972 = vunpack.c.l.b16 %v4960
    %v4973 = vpack.c.b16 %v4970, %v4969
    %v4974 = vpack.c.b16 %v4972, %v4971
    %v4978 = vsel %vm213, %v4949, 0
    %v4981 = vsel %vm213, %v4950, 0
    %v4984 = vsel %vm213, %v4951, 0
    %v4987 = vsel %vm213, %v4952, 0
    %v4990 = vsel %vm213, %v4953, 0
    %v4993 = vsel %vm213, %v4954, 0
    %v4996 = vsel %vm213, %v4955, 0
    %v4999 = vsel %vm213, %v4956, 0
    %5001 = vmatpush.bf16.msra.mxu0 0
    %5002 = vmatpush.bf16.msra.mxu0 0
    %5003 = vmatpush.bf16.msra.mxu0 0
    %5004 = vmatpush.bf16.msra.mxu0 0
    %5005 = vmatpush.bf16.msra.mxu0 0
    %5006 = vmatpush.bf16.msra.mxu0 0
    %5007 = vmatpush.bf16.msra.mxu0 %v4974
    %5008 = vmatpush.bf16.msra.mxu0 %v4973
    %5009 = vmatmul.bf16.gmra.mxu0 %v4978
    %v5010 = vpop.f32.mrf.mxu0
    %v5011 = vadd.f32 %v4963, %v5010
    %v5012 = vpop.f32.mrf.mxu0
    %v5013 = vadd.f32 %v4963, %v5012
    %5014 = vmatmul.bf16.gmra.mxu0 %v4981
    %v5015 = vpop.f32.mrf.mxu0
    %v5016 = vadd.f32 %v4963, %v5015
    %v5017 = vpop.f32.mrf.mxu0
    %v5018 = vadd.f32 %v4963, %v5017
    %5019 = vmatmul.bf16.gmra.mxu0 %v4984
    %v5020 = vpop.f32.mrf.mxu0
    %v5021 = vadd.f32 %v4963, %v5020
    %v5022 = vpop.f32.mrf.mxu0
    %v5023 = vadd.f32 %v4963, %v5022
    %5024 = vmatmul.bf16.gmra.mxu0 %v4987
    %v5025 = vpop.f32.mrf.mxu0
    %v5026 = vadd.f32 %v4963, %v5025
    %v5027 = vpop.f32.mrf.mxu0
    %v5028 = vadd.f32 %v4963, %v5027
    %5029 = vmatmul.bf16.gmra.mxu0 %v4990
    %v5030 = vpop.f32.mrf.mxu0
    %v5031 = vadd.f32 %v4963, %v5030
    %v5032 = vpop.f32.mrf.mxu0
    %v5033 = vadd.f32 %v4963, %v5032
    %5034 = vmatmul.bf16.gmra.mxu0 %v4993
    %v5035 = vpop.f32.mrf.mxu0
    %v5036 = vadd.f32 %v4963, %v5035
    %v5037 = vpop.f32.mrf.mxu0
    %v5038 = vadd.f32 %v4963, %v5037
    %5039 = vmatmul.bf16.gmra.mxu0 %v4996
    %v5040 = vpop.f32.mrf.mxu0
    %v5041 = vadd.f32 %v4963, %v5040
    %v5042 = vpop.f32.mrf.mxu0
    %v5043 = vadd.f32 %v4963, %v5042
    %5044 = vmatmul.bf16.gmra.mxu0 %v4999
    %v5045 = vpop.f32.mrf.mxu0
    %v5046 = vadd.f32 %v4963, %v5045
    %v5047 = vpop.f32.mrf.mxu0
    %v5048 = vadd.f32 %v4963, %v5047
    %5049 = vdwg.mxu0
    %v5050 = vadd.f32 %v4933, %v5011
    %v5051 = vadd.f32 %v4934, %v5013
    %v5052 = vadd.f32 %v4935, %v5016
    %v5053 = vadd.f32 %v4936, %v5018
    %v5054 = vadd.f32 %v4937, %v5021
    %v5055 = vadd.f32 %v4938, %v5023
    %v5056 = vadd.f32 %v4939, %v5026
    %v5057 = vadd.f32 %v4940, %v5028
    %v5058 = vadd.f32 %v4941, %v5031
    %v5059 = vadd.f32 %v4942, %v5033
    %v5060 = vadd.f32 %v4943, %v5036
    %v5061 = vadd.f32 %v4944, %v5038
    %v5062 = vadd.f32 %v4945, %v5041
    %v5063 = vadd.f32 %v4946, %v5043
    %v5064 = vadd.f32 %v4947, %v5046
    %v5065 = vadd.f32 %v4948, %v5048
    %v5066 = vmul.f32 %v5050, 0.5
    %v5067 = vmul.f32 %v5051, 0.5
    %v5068 = vmul.f32 %v5052, 0.5
    %v5069 = vmul.f32 %v5053, 0.5
    %v5070 = vmul.f32 %v5054, 0.5
    %v5071 = vmul.f32 %v5055, 0.5
    %v5072 = vmul.f32 %v5056, 0.5
    %v5073 = vmul.f32 %v5057, 0.5
    %v5074 = vmul.f32 %v5058, 0.5
    %v5075 = vmul.f32 %v5059, 0.5
    %v5076 = vmul.f32 %v5060, 0.5
    %v5077 = vmul.f32 %v5061, 0.5
    %v5078 = vmul.f32 %v5062, 0.5
    %v5079 = vmul.f32 %v5063, 0.5
    %v5080 = vmul.f32 %v5064, 0.5
    %v5081 = vmul.f32 %v5065, 0.5
    %v5082 = vmul.f32 %v5050, %v5050
    %v5083 = vmul.f32 %v5051, %v5051
    %v5084 = vmul.f32 %v5052, %v5052
    %v5085 = vmul.f32 %v5053, %v5053
    %v5086 = vmul.f32 %v5054, %v5054
    %v5087 = vmul.f32 %v5055, %v5055
    %v5088 = vmul.f32 %v5056, %v5056
    %v5089 = vmul.f32 %v5057, %v5057
    %v5090 = vmul.f32 %v5058, %v5058
    %v5091 = vmul.f32 %v5059, %v5059
    %v5092 = vmul.f32 %v5060, %v5060
    %v5093 = vmul.f32 %v5061, %v5061
    %v5094 = vmul.f32 %v5062, %v5062
    %v5095 = vmul.f32 %v5063, %v5063
    %v5096 = vmul.f32 %v5064, %v5064
    %v5097 = vmul.f32 %v5065, %v5065
    %v5098 = vmul.f32 %v5082, %v5050
    %v5099 = vmul.f32 %v5083, %v5051
    %v5100 = vmul.f32 %v5084, %v5052
    %v5101 = vmul.f32 %v5085, %v5053
    %v5102 = vmul.f32 %v5086, %v5054
    %v5103 = vmul.f32 %v5087, %v5055
    %v5104 = vmul.f32 %v5088, %v5056
    %v5105 = vmul.f32 %v5089, %v5057
    %v5106 = vmul.f32 %v5090, %v5058
    %v5107 = vmul.f32 %v5091, %v5059
    %v5108 = vmul.f32 %v5092, %v5060
    %v5109 = vmul.f32 %v5093, %v5061
    %v5110 = vmul.f32 %v5094, %v5062
    %v5111 = vmul.f32 %v5095, %v5063
    %v5112 = vmul.f32 %v5096, %v5064
    %v5113 = vmul.f32 %v5097, %v5065
    %v5114 = vmul.f32 %v5098, 0.044715
    %v5115 = vmul.f32 %v5099, 0.044715
    %v5116 = vmul.f32 %v5100, 0.044715
    %v5117 = vmul.f32 %v5101, 0.044715
    %v5118 = vmul.f32 %v5102, 0.044715
    %v5119 = vmul.f32 %v5103, 0.044715
    %v5120 = vmul.f32 %v5104, 0.044715
    %v5121 = vmul.f32 %v5105, 0.044715
    %v5122 = vmul.f32 %v5106, 0.044715
    %v5123 = vmul.f32 %v5107, 0.044715
    %v5124 = vmul.f32 %v5108, 0.044715
    %v5125 = vmul.f32 %v5109, 0.044715
    %v5126 = vmul.f32 %v5110, 0.044715
    %v5127 = vmul.f32 %v5111, 0.044715
    %v5128 = vmul.f32 %v5112, 0.044715
    %v5129 = vmul.f32 %v5113, 0.044715
    %v5130 = vadd.f32 %v5050, %v5114
    %v5131 = vadd.f32 %v5051, %v5115
    %v5132 = vadd.f32 %v5052, %v5116
    %v5133 = vadd.f32 %v5053, %v5117
    %v5134 = vadd.f32 %v5054, %v5118
    %v5135 = vadd.f32 %v5055, %v5119
    %v5136 = vadd.f32 %v5056, %v5120
    %v5137 = vadd.f32 %v5057, %v5121
    %v5138 = vadd.f32 %v5058, %v5122
    %v5139 = vadd.f32 %v5059, %v5123
    %v5140 = vadd.f32 %v5060, %v5124
    %v5141 = vadd.f32 %v5061, %v5125
    %v5142 = vadd.f32 %v5062, %v5126
    %v5143 = vadd.f32 %v5063, %v5127
    %v5144 = vadd.f32 %v5064, %v5128
    %v5145 = vadd.f32 %v5065, %v5129
    %v5146 = vmul.f32 %v5130, 0.7978846
    %v5147 = vmul.f32 %v5131, 0.7978846
    %v5148 = vmul.f32 %v5132, 0.7978846
    %v5149 = vmul.f32 %v5133, 0.7978846
    %v5150 = vmul.f32 %v5134, 0.7978846
    %v5151 = vmul.f32 %v5135, 0.7978846
    %v5152 = vmul.f32 %v5136, 0.7978846
    %v5153 = vmul.f32 %v5137, 0.7978846
    %v5154 = vmul.f32 %v5138, 0.7978846
    %v5155 = vmul.f32 %v5139, 0.7978846
    %v5156 = vmul.f32 %v5140, 0.7978846
    %v5157 = vmul.f32 %v5141, 0.7978846
    %v5158 = vmul.f32 %v5142, 0.7978846
    %v5159 = vmul.f32 %v5143, 0.7978846
    %v5160 = vmul.f32 %v5144, 0.7978846
    %v5161 = vmul.f32 %v5145, 0.7978846
    %v5162 = vtanh.pop %v5146
    %v5163 = vtanh.pop %v5147
    %v5164 = vtanh.pop %v5148
    %v5165 = vtanh.pop %v5149
    %v5166 = vtanh.pop %v5150
    %v5167 = vtanh.pop %v5151
    %v5168 = vtanh.pop %v5152
    %v5169 = vtanh.pop %v5153
    %v5170 = vtanh.pop %v5154
    %v5171 = vtanh.pop %v5155
    %v5172 = vtanh.pop %v5156
    %v5173 = vtanh.pop %v5157
    %v5174 = vtanh.pop %v5158
    %v5175 = vtanh.pop %v5159
    %v5176 = vtanh.pop %v5160
    %v5177 = vtanh.pop %v5161
    %v5178 = vadd.f32 %v5162, 1.0
    %v5179 = vadd.f32 %v5163, 1.0
    %v5180 = vadd.f32 %v5164, 1.0
    %v5181 = vadd.f32 %v5165, 1.0
    %v5182 = vadd.f32 %v5166, 1.0
    %v5183 = vadd.f32 %v5167, 1.0
    %v5184 = vadd.f32 %v5168, 1.0
    %v5185 = vadd.f32 %v5169, 1.0
    %v5186 = vadd.f32 %v5170, 1.0
    %v5187 = vadd.f32 %v5171, 1.0
    %v5188 = vadd.f32 %v5172, 1.0
    %v5189 = vadd.f32 %v5173, 1.0
    %v5190 = vadd.f32 %v5174, 1.0
    %v5191 = vadd.f32 %v5175, 1.0
    %v5192 = vadd.f32 %v5176, 1.0
    %v5193 = vadd.f32 %v5177, 1.0
    %v5194 = vmul.f32 %v5066, %v5178
    %v5195 = vmul.f32 %v5067, %v5179
    %v5196 = vmul.f32 %v5068, %v5180
    %v5197 = vmul.f32 %v5069, %v5181
    %v5198 = vmul.f32 %v5070, %v5182
    %v5199 = vmul.f32 %v5071, %v5183
    %v5200 = vmul.f32 %v5072, %v5184
    %v5201 = vmul.f32 %v5073, %v5185
    %v5202 = vmul.f32 %v5074, %v5186
    %v5203 = vmul.f32 %v5075, %v5187
    %v5204 = vmul.f32 %v5076, %v5188
    %v5205 = vmul.f32 %v5077, %v5189
    %v5206 = vmul.f32 %v5078, %v5190
    %v5207 = vmul.f32 %v5079, %v5191
    %v5208 = vmul.f32 %v5080, %v5192
    %v5209 = vmul.f32 %v5081, %v5193
    %v5210 = vsel %vm213, %v5194, -inf
    %v5211 = vsel %vm213, %v5195, -inf
    %v5212 = vmax.f32 %v5210, %v5211
    %v5213 = vrot.slane %v5212, 4
    %v5214 = vmax.f32 %v5212, %v5213
    %v5215 = vrot.slane %v5214, 2
    %v5216 = vmax.f32 %v5214, %v5215
    %v5217 = vrot.slane %v5216, 1
    %v5218 = vmax.f32 %v5216, %v5217
    %v5219 = vsel %vm213, %v5196, -inf
    %v5220 = vsel %vm213, %v5197, -inf
    %v5221 = vmax.f32 %v5219, %v5220
    %v5222 = vrot.slane %v5221, 4
    %v5223 = vmax.f32 %v5221, %v5222
    %v5224 = vrot.slane %v5223, 2
    %v5225 = vmax.f32 %v5223, %v5224
    %v5226 = vrot.slane %v5225, 1
    %v5227 = vmax.f32 %v5225, %v5226
    %v5228 = vsel %vm213, %v5198, -inf
    %v5229 = vsel %vm213, %v5199, -inf
    %v5230 = vmax.f32 %v5228, %v5229
    %v5231 = vrot.slane %v5230, 4
    %v5232 = vmax.f32 %v5230, %v5231
    %v5233 = vrot.slane %v5232, 2
    %v5234 = vmax.f32 %v5232, %v5233
    %v5235 = vrot.slane %v5234, 1
    %v5236 = vmax.f32 %v5234, %v5235
    %v5237 = vsel %vm213, %v5200, -inf
    %v5238 = vsel %vm213, %v5201, -inf
    %v5239 = vmax.f32 %v5237, %v5238
    %v5240 = vrot.slane %v5239, 4
    %v5241 = vmax.f32 %v5239, %v5240
    %v5242 = vrot.slane %v5241, 2
    %v5243 = vmax.f32 %v5241, %v5242
    %v5244 = vrot.slane %v5243, 1
    %v5245 = vmax.f32 %v5243, %v5244
    %v5246 = vsel %vm213, %v5202, -inf
    %v5247 = vsel %vm213, %v5203, -inf
    %v5248 = vmax.f32 %v5246, %v5247
    %v5249 = vrot.slane %v5248, 4
    %v5250 = vmax.f32 %v5248, %v5249
    %v5251 = vrot.slane %v5250, 2
    %v5252 = vmax.f32 %v5250, %v5251
    %v5253 = vrot.slane %v5252, 1
    %v5254 = vmax.f32 %v5252, %v5253
    %v5255 = vsel %vm213, %v5204, -inf
    %v5256 = vsel %vm213, %v5205, -inf
    %v5257 = vmax.f32 %v5255, %v5256
    %v5258 = vrot.slane %v5257, 4
    %v5259 = vmax.f32 %v5257, %v5258
    %v5260 = vrot.slane %v5259, 2
    %v5261 = vmax.f32 %v5259, %v5260
    %v5262 = vrot.slane %v5261, 1
    %v5263 = vmax.f32 %v5261, %v5262
    %v5264 = vsel %vm213, %v5206, -inf
    %v5265 = vsel %vm213, %v5207, -inf
    %v5266 = vmax.f32 %v5264, %v5265
    %v5267 = vrot.slane %v5266, 4
    %v5268 = vmax.f32 %v5266, %v5267
    %v5269 = vrot.slane %v5268, 2
    %v5270 = vmax.f32 %v5268, %v5269
    %v5271 = vrot.slane %v5270, 1
    %v5272 = vmax.f32 %v5270, %v5271
    %v5273 = vsel %vm213, %v5208, -inf
    %v5274 = vsel %vm213, %v5209, -inf
    %v5275 = vmax.f32 %v5273, %v5274
    %v5276 = vrot.slane %v5275, 4
    %v5277 = vmax.f32 %v5275, %v5276
    %v5278 = vrot.slane %v5277, 2
    %v5279 = vmax.f32 %v5277, %v5278
    %v5280 = vrot.slane %v5279, 1
    %v5281 = vmax.f32 %v5279, %v5280
    %vm5290 = vcmask 1041409
    %v5291 = vsel %vm5290, %v5227, %v5218
    %vm5292 = vcmask 1042434
    %v5293 = vsel %vm5292, %v5236, %v5291
    %vm5294 = vcmask 1043459
    %v5295 = vsel %vm5294, %v5245, %v5293
    %vm5296 = vcmask 1044484
    %v5297 = vsel %vm5296, %v5254, %v5295
    %vm5298 = vcmask 1045509
    %v5299 = vsel %vm5298, %v5263, %v5297
    %vm5300 = vcmask 1046534
    %v5301 = vsel %vm5300, %v5272, %v5299
    %vm5302 = vcmask 1047559
    %v5303 = vsel %vm5302, %v5281, %v5301
    %5305 = vst.msk [vmem:[#allocation11] sm:$0xff] %vm213, %v5303
    // Predicated region
    $region70: #{tpu_custom_call.1} parent=1 // pred_check
      _
    $region71: #{tpu_custom_call.1} parent=1 // pred_check_branch
      %5307 = sbr.rel (0) target = $region73
    $region72: #{tpu_custom_call.1} parent=1 // pred_region
      %5309 = vsyncadd [#allocation4], 0
      %s5311 = sshll.u32 [#allocation11], 4
      %s5312 = int_to_ptr.vmem [resolvable:$true] %s5311
      %s5313 = sshll.u32 %s12, 4
      %s5314 = int_to_ptr.hbm [resolvable:$true] %s5313
      %5316 = dma.vmem_to_hbm [thread:$0]  %s5312, 128, %s5314, [#allocation4]
    $region73: #{tpu_custom_call.1} parent=1 // pred_fallthru
      _
    // Predicated region
    $region74: #{tpu_custom_call.1} parent=1 // pred_check
      _
    $region75: #{tpu_custom_call.1} parent=1 // pred_check_branch
      %5318 = sbr.rel (0) target = $region77
    $region76: #{tpu_custom_call.1} parent=1 // pred_region
      %5320 = dma.done [#allocation4], 128
    $region77: #{tpu_custom_call.1} parent=1 // pred_fallthru
      _
    %5321 = vsyncpa [#allocation3], 1
    %5322 = vsyncpa [#allocation6], 1
    %5323 = vsyncpa [#allocation9], 1
    %5324 = vsyncpa [#allocation4], 1

</llo_original>
